<compile_context>
chip_gen: v7x
topology: tpu7x:2x2x1
jax: 0.10.0
libtpu: 0.0.40
codegen_flags: <defaults>
</compile_context>

<pallas_src>
import jax
import jax.numpy as jnp
from jax.experimental import pallas as pl
from jax.experimental.pallas import tpu as pltpu

EPS = 1e-5
LANE = 128
PADL = 8   # left pad (sublane axis) of the conv2 scratch -> interior store stays aligned


def _round_up(v, m):
    return (v + m - 1) // m * m


def _pad2(a, rows, cols):
    return jnp.zeros((rows, cols), a.dtype).at[:a.shape[0], :a.shape[1]].set(a)


# ----------------------------------------------------------------------------
# Fused kernel: one image per grid step.
# ----------------------------------------------------------------------------
def _af_bottleneck_kernel(x_ref, w1_ref, b1_ref, w2_ref, b2_ref,
                          w3_ref, wd_ref, b3_ref, o_ref, y1p_ref):
    # x_ref  : (1, H, W, Cin_p)      bf16  one image, channels on the 128-lane axis
    # w1_ref : (Cin_p, Wd_p)         bf16  conv1 weight, BN1*att1 folded in
    # b1_ref : (1, Wd_p)             f32
    # w2_ref : (9, Wd_p, Wd_p)       bf16  3x3 taps (dy*3+dx), BN2*att2 folded in
    # b2_ref : (1, Wd_p)             f32
    # w3_ref : (Wd_p, Out_p)         bf16  conv3 weight, BN3*att3 folded in
    # wd_ref : (Cin_p, Out_p)        bf16  downsample weight, BNd*att3 folded in
    # b3_ref : (1, Out_p)            f32   (b3 + bd) * att3
    # o_ref  : (1, H, W, Out_p)      f32
    # y1p_ref: (H+2, W+2*PADL, Wd_p) f32   scratch, zero border = conv2 padding
    _, h, w, _ = o_ref.shape
    width_p = y1p_ref.shape[2]

    x = x_ref[0]                                               # (H, W, Cin_p) bf16

    # ---- conv1 (1x1) + BN1*att1 + ReLU ----------------------------------
    y1 = jax.lax.dot_general(
        x, w1_ref[...], dimension_numbers=(((2,), (0,)), ((), ())),
        preferred_element_type=jnp.float32)                    # (H, W, Wd_p) f32
    y1 = jnp.maximum(y1 + b1_ref[...], 0.0)

    # Zero only the read border of the padded scratch (rows 0 / H+1 fully,
    # plus the two aligned 8-wide column strips); the interior is fully
    # rewritten below, so this is correct on every grid step / every core.
    zrow = jnp.zeros((w + 2 * PADL, width_p), jnp.float32)
    y1p_ref[0] = zrow
    y1p_ref[h + 1] = zrow
    zcol = jnp.zeros((h + 2, PADL, width_p), jnp.float32)
    y1p_ref[:, 0:PADL, :] = zcol
    y1p_ref[:, PADL + w:2 * PADL + w, :] = zcol

    # stage y1 in the scratch interior (row offset on the free axis, column
    # offset PADL=8 is sublane-aligned -> unmasked stores).
    y1p_ref[1:h + 1, PADL:PADL + w, :] = y1

    # ---- conv2 (3x3, pad=1, stride=1) + BN2*att2 + ReLU ------------------
    acc = None
    for dy in range(3):
        for dx in range(3):
            c0 = PADL - 1 + dx
            patch = y1p_ref[dy:dy + h, c0:c0 + w, :].astype(jnp.bfloat16)
            part = jax.lax.dot_general(
                patch, w2_ref[dy * 3 + dx],
                dimension_numbers=(((2,), (0,)), ((), ())),
                preferred_element_type=jnp.float32)
            acc = part if acc is None else acc + part
    y2 = jnp.maximum(acc + b2_ref[...], 0.0)                   # (H, W, Wd_p) f32
    y2 = y2.astype(jnp.bfloat16)

    # ---- conv3·bn3 + downsample(identity)·bnd + residual + af + ReLU -----
    out = jax.lax.dot_general(
        y2, w3_ref[...], dimension_numbers=(((2,), (0,)), ((), ())),
        preferred_element_type=jnp.float32)
    out += jax.lax.dot_general(
        x, wd_ref[...], dimension_numbers=(((2,), (0,)), ((), ())),
        preferred_element_type=jnp.float32)
    o_ref[0, :, :, :] = jnp.maximum(out + b3_ref[...], 0.0)


# ----------------------------------------------------------------------------
# Parameter folding + wrapper (glue, plain JAX)
# ----------------------------------------------------------------------------
def bn_fold(gamma, beta, mean, var, eps=EPS):
    scale = gamma / jnp.sqrt(var + eps)
    return scale, beta - mean * scale


def af_bottleneck_forward(params, x_nchw):
    """Fused Pallas forward.  Returns (out_nchw, [att1, att2, att3])."""
    n, cin, h, w = x_nchw.shape
    width = params['w1'].shape[0]
    outc = params['w3'].shape[0]
    cin_p = _round_up(cin, LANE)
    width_p = _round_up(width, LANE)
    outc_p = _round_up(outc, LANE)

    att1 = jax.nn.sigmoid(params['af1'][:, 0, 0])
    att2 = jax.nn.sigmoid(params['af2'][:, 0, 0])
    att3 = jax.nn.sigmoid(params['af3'][:, 0, 0])

    s1, b1 = bn_fold(**params['bn1'])
    s2, b2 = bn_fold(**params['bn2'])
    s3, b3 = bn_fold(**params['bn3'])
    sd, bd = bn_fold(**params['bnd'])

    # Fold BN scale * attention into the (lane-padded, bf16) matmul weights.
    w1m = params['w1'][:, :, 0, 0].T * (s1 * att1)[None, :]               # (Cin, Wd)
    w2m = jnp.transpose(params['w2'], (2, 3, 1, 0)) * (s2 * att2)         # (3,3,Wd,Wd)
    w3m = params['w3'][:, :, 0, 0].T * (s3 * att3)[None, :]               # (Wd, Out)
    wdm = params['wd'][:, :, 0, 0].T * (sd * att3)[None, :]               # (Cin, Out)

    w1p = _pad2(w1m, cin_p, width_p).astype(jnp.bfloat16)
    w2p = jnp.zeros((9, width_p, width_p)).at[:, :width, :width].set(
        w2m.reshape(9, width, width)).astype(jnp.bfloat16)
    w3p = _pad2(w3m, width_p, outc_p).astype(jnp.bfloat16)
    wdp = _pad2(wdm, cin_p, outc_p).astype(jnp.bfloat16)
    b1p = _pad2((b1 * att1)[None, :], 1, width_p)
    b2p = _pad2((b2 * att2)[None, :], 1, width_p)
    b3p = _pad2(((b3 + bd) * att3)[None, :], 1, outc_p)

    # NHWC, channels zero-padded to a lane multiple, bf16 matmul operand.
    # TODO(synk): in a full network keep activations NHWC / lane-padded end-to-end
    # so these layout transposes (separate HBM passes) disappear.
    x_nhwc = jnp.transpose(x_nchw, (0, 2, 3, 1))
    x_p = jnp.pad(x_nhwc, ((0, 0), (0, 0), (0, 0), (0, cin_p - cin))
                  ).astype(jnp.bfloat16)

    hw = h * w
    flops = 2 * n * hw * (cin_p * width_p + 9 * width_p * width_p
                          + width_p * outc_p + cin_p * outc_p)
    bytes_accessed = (x_p.size * 2 + n * hw * outc_p * 4
                      + (w1p.size + w2p.size + w3p.size + wdp.size) * 2
                      + (b1p.size + b2p.size + b3p.size) * 4)

    out_p = pl.pallas_call(
        _af_bottleneck_kernel,
        out_shape=jax.ShapeDtypeStruct((n, h, w, outc_p), jnp.float32),
        grid=(n,),
        in_specs=[
            pl.BlockSpec((1, h, w, cin_p), lambda i: (i, 0, 0, 0)),
            pl.BlockSpec((cin_p, width_p), lambda i: (0, 0)),
            pl.BlockSpec((1, width_p), lambda i: (0, 0)),
            pl.BlockSpec((9, width_p, width_p), lambda i: (0, 0, 0)),
            pl.BlockSpec((1, width_p), lambda i: (0, 0)),
            pl.BlockSpec((width_p, outc_p), lambda i: (0, 0)),
            pl.BlockSpec((cin_p, outc_p), lambda i: (0, 0)),
            pl.BlockSpec((1, outc_p), lambda i: (0, 0)),
        ],
        out_specs=pl.BlockSpec((1, h, w, outc_p), lambda i: (i, 0, 0, 0)),
        scratch_shapes=[
            pltpu.VMEM((h + 2, w + 2 * PADL, width_p), jnp.float32),
        ],
        compiler_params=pltpu.CompilerParams(
            dimension_semantics=("parallel",)),
        cost_estimate=pl.CostEstimate(
            flops=flops, transcendentals=0, bytes_accessed=int(bytes_accessed)),
    )(x_p, w1p, b1p, w2p, b2p, w3p, wdp, b3p)

    out = jnp.transpose(out_p[..., :outc], (0, 3, 1, 2))       # back to NCHW
    atts = [att1.reshape(1, -1, 1, 1), att2.reshape(1, -1, 1, 1),
            att3.reshape(1, -1, 1, 1)]
    return out, atts


# ----------------------------------------------------------------------------
# Parameter init + pure-JAX reference (NCHW, lax convolutions) for validation
# ----------------------------------------------------------------------------
def init_params(key, inplanes, planes, base_width=64, groups=1):
    width = int(planes * (base_width / 64.0)) * groups
    outc = planes * 4  # expansion = 4
    ks = jax.random.split(key, 16)

    def bn_params(k, c):
        k1, k2, k3, k4 = jax.random.split(k, 4)
        return dict(gamma=jax.random.uniform(k1, (c,), minval=0.5, maxval=1.5),
                    beta=0.1 * jax.random.normal(k2, (c,)),
                    mean=0.1 * jax.random.normal(k3, (c,)),
                    var=jax.random.uniform(k4, (c,), minval=0.5, maxval=1.5))

    p = dict(
        w1=0.1 * jax.random.normal(ks[0], (width, inplanes, 1, 1)),     # OIHW
        bn1=bn_params(ks[1], width),
        af1=jax.random.normal(ks[2], (width, 1, 1)),
        w2=0.1 * jax.random.normal(ks[3], (width, width, 3, 3)),        # OIHW
        bn2=bn_params(ks[4], width),
        af2=jax.random.normal(ks[5], (width, 1, 1)),
        w3=0.1 * jax.random.normal(ks[6], (outc, width, 1, 1)),         # OIHW
        bn3=bn_params(ks[7], outc),
        af3=jax.random.normal(ks[8], (outc, 1, 1)),                     # ForgettingLayer
        wd=0.1 * jax.random.normal(ks[9], (outc, inplanes, 1, 1)),      # downsample conv
        bnd=bn_params(ks[10], outc),
    )
    return p, width, outc


def ref_forward(params, x):
    def conv(x, w, padding=0):
        return jax.lax.conv_general_dilated(
            x, w, window_strides=(1, 1),
            padding=[(padding, padding), (padding, padding)],
            dimension_numbers=('NCHW', 'OIHW', 'NCHW'))

    def bn(x, p):
        g, b, m, v = p['gamma'], p['beta'], p['mean'], p['var']
        return ((x - m[None, :, None, None]) / jnp.sqrt(v[None, :, None, None] + EPS)
                * g[None, :, None, None] + b[None, :, None, None])

    def chan(v):
        return v[None, :, None, None]

    att1 = jax.nn.sigmoid(params['af1'][:, 0, 0])
    att2 = jax.nn.sigmoid(params['af2'][:, 0, 0])
    att3 = jax.nn.sigmoid(params['af3'][:, 0, 0])

    identity = x
    y = bn(conv(x, params['w1']), params['bn1']) * chan(att1)
    y = jax.nn.relu(y)
    y = bn(conv(y, params['w2'], padding=1), params['bn2']) * chan(att2)
    y = jax.nn.relu(y)
    y = bn(conv(y, params['w3']), params['bn3'])
    identity = bn(conv(identity, params['wd']), params['bnd'])
    y = (y + identity) * chan(att3)
    return jax.nn.relu(y)


if __name__ == "__main__":
    key = jax.random.PRNGKey(0)
    kp, kx = jax.random.split(key)

    inplanes, planes = 8, 4            # width = 4, out channels = planes*4 = 16
    N, H, W = 2, 16, 16
    params, width, outc = init_params(kp, inplanes, planes)
    x = jax.random.normal(kx, (N, inplanes, H, W), dtype=jnp.float32)

    fwd = jax.jit(af_bottleneck_forward)
    out, atts = fwd(params, x)
    out = jax.block_until_ready(out)
    atts = [jax.block_until_ready(a) for a in atts]

    ref = jax.block_until_ready(ref_forward(params, x))
    assert out.shape == (N, outc, H, W)
    assert all(a.shape == s for a, s in zip(
        atts, [(1, width, 1, 1), (1, width, 1, 1), (1, outc, 1, 1)]))
    max_err = float(jnp.max(jnp.abs(out - ref)))
    # bf16 matmul operands (f32 accumulation) -> loosened tolerance vs f32 reference
    assert jnp.allclose(out, ref, rtol=5e-2, atol=5e-2), \
        f"mismatch vs JAX reference, max|diff|={max_err}"

    print("KERNEL_OK")
</pallas_src>

<mosaic_0001>
module attributes {stable_mosaic.version = 11 : i64} {
  func.func @_af_bottleneck_kernel(%arg0: i32, %arg1: memref<1x16x16x128xbf16, #tpu.memory_space<vmem>>, %arg2: memref<128x128xbf16, #tpu.memory_space<vmem>>, %arg3: memref<1x128xf32, #tpu.memory_space<vmem>>, %arg4: memref<9x128x128xbf16, #tpu.memory_space<vmem>>, %arg5: memref<1x128xf32, #tpu.memory_space<vmem>>, %arg6: memref<128x128xbf16, #tpu.memory_space<vmem>>, %arg7: memref<128x128xbf16, #tpu.memory_space<vmem>>, %arg8: memref<1x128xf32, #tpu.memory_space<vmem>>, %arg9: memref<1x16x16x128xf32, #tpu.memory_space<vmem>>, %arg10: memref<18x32x128xf32, #tpu.memory_space<vmem>>) attributes {dimension_semantics = [#tpu.dimension_semantics<parallel>], iteration_bounds = array<i64: 2>, scalar_prefetch = 0 : i64, scratch_operands = 1 : i64, tpu.core_type = #tpu.core_type<tc>, window_params = [{transform_indices = @transform_0, window_bounds = array<i64: 1, 16, 16, 128>}, {pipeline_mode = #tpu.pipeline_mode<synchronous>, transform_indices = @transform_1, window_bounds = array<i64: 128, 128>}, {pipeline_mode = #tpu.pipeline_mode<synchronous>, transform_indices = @transform_2, window_bounds = array<i64: 1, 128>}, {pipeline_mode = #tpu.pipeline_mode<synchronous>, transform_indices = @transform_3, window_bounds = array<i64: 9, 128, 128>}, {pipeline_mode = #tpu.pipeline_mode<synchronous>, transform_indices = @transform_4, window_bounds = array<i64: 1, 128>}, {pipeline_mode = #tpu.pipeline_mode<synchronous>, transform_indices = @transform_5, window_bounds = array<i64: 128, 128>}, {pipeline_mode = #tpu.pipeline_mode<synchronous>, transform_indices = @transform_6, window_bounds = array<i64: 128, 128>}, {pipeline_mode = #tpu.pipeline_mode<synchronous>, transform_indices = @transform_7, window_bounds = array<i64: 1, 128>}, {transform_indices = @transform_8, window_bounds = array<i64: 1, 16, 16, 128>}]} {
    %c0 = arith.constant 0 : index
    %c0_0 = arith.constant 0 : index
    %c0_1 = arith.constant 0 : index
    %c0_2 = arith.constant 0 : index
    %0 = vector.load %arg1[%c0, %c0_0, %c0_1, %c0_2] : memref<1x16x16x128xbf16, #tpu.memory_space<vmem>>, vector<1x16x16x128xbf16>
    %1 = vector.shape_cast %0 : vector<1x16x16x128xbf16> to vector<16x16x128xbf16>
    %c0_3 = arith.constant 0 : index
    %c0_4 = arith.constant 0 : index
    %2 = vector.load %arg2[%c0_3, %c0_4] : memref<128x128xbf16, #tpu.memory_space<vmem>>, vector<128x128xbf16>
    %cst = arith.constant dense<0.000000e+00> : vector<16x16x128xf32>
    %3 = tpu.matmul %1, %2, %cst {dimension_numbers = #tpu.dot_dimension_numbers<[2], [0], [0, 1], [1], [0, 0, 0, 1, 1, 1], [], []>} : vector<16x16x128xbf16>, vector<128x128xbf16>, vector<16x16x128xf32> -> vector<16x16x128xf32>
    %c0_5 = arith.constant 0 : index
    %c0_6 = arith.constant 0 : index
    %4 = vector.load %arg3[%c0_5, %c0_6] : memref<1x128xf32, #tpu.memory_space<vmem>>, vector<1x128xf32>
    %5 = vector.shape_cast %4 : vector<1x128xf32> to vector<1x1x128xf32>
    %6 = vector.broadcast %5 : vector<1x1x128xf32> to vector<16x16x128xf32>
    %7 = arith.addf %3, %6 : vector<16x16x128xf32>
    %cst_7 = arith.constant 0.000000e+00 : f32
    %8 = vector.broadcast %cst_7 : f32 to vector<16x16x128xf32>
    %9 = arith.maximumf %7, %8 : vector<16x16x128xf32>
    %cst_8 = arith.constant 0.000000e+00 : f32
    %10 = vector.broadcast %cst_8 : f32 to vector<32x128xf32>
    %c0_9 = arith.constant 0 : index
    %c0_10 = arith.constant 0 : index
    %c0_11 = arith.constant 0 : index
    %11 = vector.load %arg10[%c0_9, %c0_10, %c0_11] : memref<18x32x128xf32, #tpu.memory_space<vmem>>, vector<1x32x128xf32>
    %12 = vector.shape_cast %11 : vector<1x32x128xf32> to vector<32x128xf32>
    %13 = vector.shape_cast %10 : vector<32x128xf32> to vector<1x32x128xf32>
    tpu.vector_store %arg10[%c0_9, %c0_10, %c0_11], %13 {strides = array<i32>} : memref<18x32x128xf32, #tpu.memory_space<vmem>>, vector<1x32x128xf32>,
    %c17 = arith.constant 17 : index
    %c0_12 = arith.constant 0 : index
    %c0_13 = arith.constant 0 : index
    %14 = vector.load %arg10[%c17, %c0_12, %c0_13] : memref<18x32x128xf32, #tpu.memory_space<vmem>>, vector<1x32x128xf32>
    %15 = vector.shape_cast %14 : vector<1x32x128xf32> to vector<32x128xf32>
    %16 = vector.shape_cast %10 : vector<32x128xf32> to vector<1x32x128xf32>
    tpu.vector_store %arg10[%c17, %c0_12, %c0_13], %16 {strides = array<i32>} : memref<18x32x128xf32, #tpu.memory_space<vmem>>, vector<1x32x128xf32>,
    %cst_14 = arith.constant 0.000000e+00 : f32
    %17 = vector.broadcast %cst_14 : f32 to vector<18x8x128xf32>
    %c0_15 = arith.constant 0 : index
    %c0_16 = arith.constant 0 : index
    %c0_17 = arith.constant 0 : index
    %18 = vector.load %arg10[%c0_15, %c0_16, %c0_17] : memref<18x32x128xf32, #tpu.memory_space<vmem>>, vector<18x8x128xf32>
    tpu.vector_store %arg10[%c0_15, %c0_16, %c0_17], %17 {strides = array<i32>} : memref<18x32x128xf32, #tpu.memory_space<vmem>>, vector<18x8x128xf32>,
    %c0_18 = arith.constant 0 : index
    %c24 = arith.constant 24 : index
    %c0_19 = arith.constant 0 : index
    %19 = vector.load %arg10[%c0_18, %c24, %c0_19] : memref<18x32x128xf32, #tpu.memory_space<vmem>>, vector<18x8x128xf32>
    tpu.vector_store %arg10[%c0_18, %c24, %c0_19], %17 {strides = array<i32>} : memref<18x32x128xf32, #tpu.memory_space<vmem>>, vector<18x8x128xf32>,
    %c1 = arith.constant 1 : index
    %c8 = arith.constant 8 : index
    %c0_20 = arith.constant 0 : index
    %20 = vector.load %arg10[%c1, %c8, %c0_20] : memref<18x32x128xf32, #tpu.memory_space<vmem>>, vector<16x16x128xf32>
    tpu.vector_store %arg10[%c1, %c8, %c0_20], %9 {strides = array<i32>} : memref<18x32x128xf32, #tpu.memory_space<vmem>>, vector<16x16x128xf32>,
    %c0_21 = arith.constant 0 : index
    %c7 = arith.constant 7 : index
    %c0_22 = arith.constant 0 : index
    %21 = vector.load %arg10[%c0_21, %c7, %c0_22] : memref<18x32x128xf32, #tpu.memory_space<vmem>>, vector<16x16x128xf32>
    %22 = arith.truncf %21 : vector<16x16x128xf32> to vector<16x16x128xbf16>
    %c0_23 = arith.constant 0 : index
    %c0_24 = arith.constant 0 : index
    %c0_25 = arith.constant 0 : index
    %23 = vector.load %arg4[%c0_23, %c0_24, %c0_25] : memref<9x128x128xbf16, #tpu.memory_space<vmem>>, vector<1x128x128xbf16>
    %24 = vector.shape_cast %23 : vector<1x128x128xbf16> to vector<128x128xbf16>
    %cst_26 = arith.constant dense<0.000000e+00> : vector<16x16x128xf32>
    %25 = tpu.matmul %22, %24, %cst_26 {dimension_numbers = #tpu.dot_dimension_numbers<[2], [0], [0, 1], [1], [0, 0, 0, 1, 1, 1], [], []>} : vector<16x16x128xbf16>, vector<128x128xbf16>, vector<16x16x128xf32> -> vector<16x16x128xf32>
    %c0_27 = arith.constant 0 : index
    %c8_28 = arith.constant 8 : index
    %c0_29 = arith.constant 0 : index
    %26 = vector.load %arg10[%c0_27, %c8_28, %c0_29] : memref<18x32x128xf32, #tpu.memory_space<vmem>>, vector<16x16x128xf32>
    %27 = arith.truncf %26 : vector<16x16x128xf32> to vector<16x16x128xbf16>
    %c1_30 = arith.constant 1 : index
    %c0_31 = arith.constant 0 : index
    %c0_32 = arith.constant 0 : index
    %28 = vector.load %arg4[%c1_30, %c0_31, %c0_32] : memref<9x128x128xbf16, #tpu.memory_space<vmem>>, vector<1x128x128xbf16>
    %29 = vector.shape_cast %28 : vector<1x128x128xbf16> to vector<128x128xbf16>
    %cst_33 = arith.constant dense<0.000000e+00> : vector<16x16x128xf32>
    %30 = tpu.matmul %27, %29, %cst_33 {dimension_numbers = #tpu.dot_dimension_numbers<[2], [0], [0, 1], [1], [0, 0, 0, 1, 1, 1], [], []>} : vector<16x16x128xbf16>, vector<128x128xbf16>, vector<16x16x128xf32> -> vector<16x16x128xf32>
    %31 = arith.addf %25, %30 : vector<16x16x128xf32>
    %c0_34 = arith.constant 0 : index
    %c9 = arith.constant 9 : index
    %c0_35 = arith.constant 0 : index
    %32 = vector.load %arg10[%c0_34, %c9, %c0_35] : memref<18x32x128xf32, #tpu.memory_space<vmem>>, vector<16x16x128xf32>
    %33 = arith.truncf %32 : vector<16x16x128xf32> to vector<16x16x128xbf16>
    %c2 = arith.constant 2 : index
    %c0_36 = arith.constant 0 : index
    %c0_37 = arith.constant 0 : index
    %34 = vector.load %arg4[%c2, %c0_36, %c0_37] : memref<9x128x128xbf16, #tpu.memory_space<vmem>>, vector<1x128x128xbf16>
    %35 = vector.shape_cast %34 : vector<1x128x128xbf16> to vector<128x128xbf16>
    %cst_38 = arith.constant dense<0.000000e+00> : vector<16x16x128xf32>
    %36 = tpu.matmul %33, %35, %cst_38 {dimension_numbers = #tpu.dot_dimension_numbers<[2], [0], [0, 1], [1], [0, 0, 0, 1, 1, 1], [], []>} : vector<16x16x128xbf16>, vector<128x128xbf16>, vector<16x16x128xf32> -> vector<16x16x128xf32>
    %37 = arith.addf %31, %36 : vector<16x16x128xf32>
    %c1_39 = arith.constant 1 : index
    %c7_40 = arith.constant 7 : index
    %c0_41 = arith.constant 0 : index
    %38 = vector.load %arg10[%c1_39, %c7_40, %c0_41] : memref<18x32x128xf32, #tpu.memory_space<vmem>>, vector<16x16x128xf32>
    %39 = arith.truncf %38 : vector<16x16x128xf32> to vector<16x16x128xbf16>
    %c3 = arith.constant 3 : index
    %c0_42 = arith.constant 0 : index
    %c0_43 = arith.constant 0 : index
    %40 = vector.load %arg4[%c3, %c0_42, %c0_43] : memref<9x128x128xbf16, #tpu.memory_space<vmem>>, vector<1x128x128xbf16>
    %41 = vector.shape_cast %40 : vector<1x128x128xbf16> to vector<128x128xbf16>
    %cst_44 = arith.constant dense<0.000000e+00> : vector<16x16x128xf32>
    %42 = tpu.matmul %39, %41, %cst_44 {dimension_numbers = #tpu.dot_dimension_numbers<[2], [0], [0, 1], [1], [0, 0, 0, 1, 1, 1], [], []>} : vector<16x16x128xbf16>, vector<128x128xbf16>, vector<16x16x128xf32> -> vector<16x16x128xf32>
    %43 = arith.addf %37, %42 : vector<16x16x128xf32>
    %c1_45 = arith.constant 1 : index
    %c8_46 = arith.constant 8 : index
    %c0_47 = arith.constant 0 : index
    %44 = vector.load %arg10[%c1_45, %c8_46, %c0_47] : memref<18x32x128xf32, #tpu.memory_space<vmem>>, vector<16x16x128xf32>
    %45 = arith.truncf %44 : vector<16x16x128xf32> to vector<16x16x128xbf16>
    %c4 = arith.constant 4 : index
    %c0_48 = arith.constant 0 : index
    %c0_49 = arith.constant 0 : index
    %46 = vector.load %arg4[%c4, %c0_48, %c0_49] : memref<9x128x128xbf16, #tpu.memory_space<vmem>>, vector<1x128x128xbf16>
    %47 = vector.shape_cast %46 : vector<1x128x128xbf16> to vector<128x128xbf16>
    %cst_50 = arith.constant dense<0.000000e+00> : vector<16x16x128xf32>
    %48 = tpu.matmul %45, %47, %cst_50 {dimension_numbers = #tpu.dot_dimension_numbers<[2], [0], [0, 1], [1], [0, 0, 0, 1, 1, 1], [], []>} : vector<16x16x128xbf16>, vector<128x128xbf16>, vector<16x16x128xf32> -> vector<16x16x128xf32>
    %49 = arith.addf %43, %48 : vector<16x16x128xf32>
    %c1_51 = arith.constant 1 : index
    %c9_52 = arith.constant 9 : index
    %c0_53 = arith.constant 0 : index
    %50 = vector.load %arg10[%c1_51, %c9_52, %c0_53] : memref<18x32x128xf32, #tpu.memory_space<vmem>>, vector<16x16x128xf32>
    %51 = arith.truncf %50 : vector<16x16x128xf32> to vector<16x16x128xbf16>
    %c5 = arith.constant 5 : index
    %c0_54 = arith.constant 0 : index
    %c0_55 = arith.constant 0 : index
    %52 = vector.load %arg4[%c5, %c0_54, %c0_55] : memref<9x128x128xbf16, #tpu.memory_space<vmem>>, vector<1x128x128xbf16>
    %53 = vector.shape_cast %52 : vector<1x128x128xbf16> to vector<128x128xbf16>
    %cst_56 = arith.constant dense<0.000000e+00> : vector<16x16x128xf32>
    %54 = tpu.matmul %51, %53, %cst_56 {dimension_numbers = #tpu.dot_dimension_numbers<[2], [0], [0, 1], [1], [0, 0, 0, 1, 1, 1], [], []>} : vector<16x16x128xbf16>, vector<128x128xbf16>, vector<16x16x128xf32> -> vector<16x16x128xf32>
    %55 = arith.addf %49, %54 : vector<16x16x128xf32>
    %c2_57 = arith.constant 2 : index
    %c7_58 = arith.constant 7 : index
    %c0_59 = arith.constant 0 : index
    %56 = vector.load %arg10[%c2_57, %c7_58, %c0_59] : memref<18x32x128xf32, #tpu.memory_space<vmem>>, vector<16x16x128xf32>
    %57 = arith.truncf %56 : vector<16x16x128xf32> to vector<16x16x128xbf16>
    %c6 = arith.constant 6 : index
    %c0_60 = arith.constant 0 : index
    %c0_61 = arith.constant 0 : index
    %58 = vector.load %arg4[%c6, %c0_60, %c0_61] : memref<9x128x128xbf16, #tpu.memory_space<vmem>>, vector<1x128x128xbf16>
    %59 = vector.shape_cast %58 : vector<1x128x128xbf16> to vector<128x128xbf16>
    %cst_62 = arith.constant dense<0.000000e+00> : vector<16x16x128xf32>
    %60 = tpu.matmul %57, %59, %cst_62 {dimension_numbers = #tpu.dot_dimension_numbers<[2], [0], [0, 1], [1], [0, 0, 0, 1, 1, 1], [], []>} : vector<16x16x128xbf16>, vector<128x128xbf16>, vector<16x16x128xf32> -> vector<16x16x128xf32>
    %61 = arith.addf %55, %60 : vector<16x16x128xf32>
    %c2_63 = arith.constant 2 : index
    %c8_64 = arith.constant 8 : index
    %c0_65 = arith.constant 0 : index
    %62 = vector.load %arg10[%c2_63, %c8_64, %c0_65] : memref<18x32x128xf32, #tpu.memory_space<vmem>>, vector<16x16x128xf32>
    %63 = arith.truncf %62 : vector<16x16x128xf32> to vector<16x16x128xbf16>
    %c7_66 = arith.constant 7 : index
    %c0_67 = arith.constant 0 : index
    %c0_68 = arith.constant 0 : index
    %64 = vector.load %arg4[%c7_66, %c0_67, %c0_68] : memref<9x128x128xbf16, #tpu.memory_space<vmem>>, vector<1x128x128xbf16>
    %65 = vector.shape_cast %64 : vector<1x128x128xbf16> to vector<128x128xbf16>
    %cst_69 = arith.constant dense<0.000000e+00> : vector<16x16x128xf32>
    %66 = tpu.matmul %63, %65, %cst_69 {dimension_numbers = #tpu.dot_dimension_numbers<[2], [0], [0, 1], [1], [0, 0, 0, 1, 1, 1], [], []>} : vector<16x16x128xbf16>, vector<128x128xbf16>, vector<16x16x128xf32> -> vector<16x16x128xf32>
    %67 = arith.addf %61, %66 : vector<16x16x128xf32>
    %c2_70 = arith.constant 2 : index
    %c9_71 = arith.constant 9 : index
    %c0_72 = arith.constant 0 : index
    %68 = vector.load %arg10[%c2_70, %c9_71, %c0_72] : memref<18x32x128xf32, #tpu.memory_space<vmem>>, vector<16x16x128xf32>
    %69 = arith.truncf %68 : vector<16x16x128xf32> to vector<16x16x128xbf16>
    %c8_73 = arith.constant 8 : index
    %c0_74 = arith.constant 0 : index
    %c0_75 = arith.constant 0 : index
    %70 = vector.load %arg4[%c8_73, %c0_74, %c0_75] : memref<9x128x128xbf16, #tpu.memory_space<vmem>>, vector<1x128x128xbf16>
    %71 = vector.shape_cast %70 : vector<1x128x128xbf16> to vector<128x128xbf16>
    %cst_76 = arith.constant dense<0.000000e+00> : vector<16x16x128xf32>
    %72 = tpu.matmul %69, %71, %cst_76 {dimension_numbers = #tpu.dot_dimension_numbers<[2], [0], [0, 1], [1], [0, 0, 0, 1, 1, 1], [], []>} : vector<16x16x128xbf16>, vector<128x128xbf16>, vector<16x16x128xf32> -> vector<16x16x128xf32>
    %73 = arith.addf %67, %72 : vector<16x16x128xf32>
    %c0_77 = arith.constant 0 : index
    %c0_78 = arith.constant 0 : index
    %74 = vector.load %arg5[%c0_77, %c0_78] : memref<1x128xf32, #tpu.memory_space<vmem>>, vector<1x128xf32>
    %75 = vector.shape_cast %74 : vector<1x128xf32> to vector<1x1x128xf32>
    %76 = vector.broadcast %75 : vector<1x1x128xf32> to vector<16x16x128xf32>
    %77 = arith.addf %73, %76 : vector<16x16x128xf32>
    %cst_79 = arith.constant 0.000000e+00 : f32
    %78 = vector.broadcast %cst_79 : f32 to vector<16x16x128xf32>
    %79 = arith.maximumf %77, %78 : vector<16x16x128xf32>
    %80 = arith.truncf %79 : vector<16x16x128xf32> to vector<16x16x128xbf16>
    %c0_80 = arith.constant 0 : index
    %c0_81 = arith.constant 0 : index
    %81 = vector.load %arg6[%c0_80, %c0_81] : memref<128x128xbf16, #tpu.memory_space<vmem>>, vector<128x128xbf16>
    %cst_82 = arith.constant dense<0.000000e+00> : vector<16x16x128xf32>
    %82 = tpu.matmul %80, %81, %cst_82 {dimension_numbers = #tpu.dot_dimension_numbers<[2], [0], [0, 1], [1], [0, 0, 0, 1, 1, 1], [], []>} : vector<16x16x128xbf16>, vector<128x128xbf16>, vector<16x16x128xf32> -> vector<16x16x128xf32>
    %c0_83 = arith.constant 0 : index
    %c0_84 = arith.constant 0 : index
    %83 = vector.load %arg7[%c0_83, %c0_84] : memref<128x128xbf16, #tpu.memory_space<vmem>>, vector<128x128xbf16>
    %cst_85 = arith.constant dense<0.000000e+00> : vector<16x16x128xf32>
    %84 = tpu.matmul %1, %83, %cst_85 {dimension_numbers = #tpu.dot_dimension_numbers<[2], [0], [0, 1], [1], [0, 0, 0, 1, 1, 1], [], []>} : vector<16x16x128xbf16>, vector<128x128xbf16>, vector<16x16x128xf32> -> vector<16x16x128xf32>
    %85 = arith.addf %82, %84 : vector<16x16x128xf32>
    %c0_86 = arith.constant 0 : index
    %c0_87 = arith.constant 0 : index
    %86 = vector.load %arg8[%c0_86, %c0_87] : memref<1x128xf32, #tpu.memory_space<vmem>>, vector<1x128xf32>
    %87 = vector.shape_cast %86 : vector<1x128xf32> to vector<1x1x128xf32>
    %88 = vector.broadcast %87 : vector<1x1x128xf32> to vector<16x16x128xf32>
    %89 = arith.addf %85, %88 : vector<16x16x128xf32>
    %cst_88 = arith.constant 0.000000e+00 : f32
    %90 = vector.broadcast %cst_88 : f32 to vector<16x16x128xf32>
    %91 = arith.maximumf %89, %90 : vector<16x16x128xf32>
    %c0_89 = arith.constant 0 : index
    %c0_90 = arith.constant 0 : index
    %c0_91 = arith.constant 0 : index
    %c0_92 = arith.constant 0 : index
    %92 = vector.load %arg9[%c0_89, %c0_90, %c0_91, %c0_92] : memref<1x16x16x128xf32, #tpu.memory_space<vmem>>, vector<1x16x16x128xf32>
    %93 = vector.shape_cast %92 : vector<1x16x16x128xf32> to vector<16x16x128xf32>
    %94 = vector.shape_cast %91 : vector<16x16x128xf32> to vector<1x16x16x128xf32>
    tpu.vector_store %arg9[%c0_89, %c0_90, %c0_91, %c0_92], %94 {strides = array<i32>} : memref<1x16x16x128xf32, #tpu.memory_space<vmem>>, vector<1x16x16x128xf32>,
    return
  }
  func.func @transform_0(%arg0: i32) -> (i32, i32, i32, i32) {
    %c0_i32 = arith.constant 0 : i32
    %c0_i32_0 = arith.constant 0 : i32
    %c0_i32_1 = arith.constant 0 : i32
    %c0_i32_2 = arith.constant 0 : i32
    return %arg0, %c0_i32, %c0_i32_0, %c0_i32_1 : i32, i32, i32, i32
  }
  func.func @transform_1(%arg0: i32) -> (i32, i32) {
    %c0_i32 = arith.constant 0 : i32
    %c0_i32_0 = arith.constant 0 : i32
    %c0_i32_1 = arith.constant 0 : i32
    return %c0_i32, %c0_i32_0 : i32, i32
  }
  func.func @transform_2(%arg0: i32) -> (i32, i32) {
    %c0_i32 = arith.constant 0 : i32
    %c0_i32_0 = arith.constant 0 : i32
    %c0_i32_1 = arith.constant 0 : i32
    return %c0_i32, %c0_i32_0 : i32, i32
  }
  func.func @transform_3(%arg0: i32) -> (i32, i32, i32) {
    %c0_i32 = arith.constant 0 : i32
    %c0_i32_0 = arith.constant 0 : i32
    %c0_i32_1 = arith.constant 0 : i32
    %c0_i32_2 = arith.constant 0 : i32
    return %c0_i32, %c0_i32_0, %c0_i32_1 : i32, i32, i32
  }
  func.func @transform_4(%arg0: i32) -> (i32, i32) {
    %c0_i32 = arith.constant 0 : i32
    %c0_i32_0 = arith.constant 0 : i32
    %c0_i32_1 = arith.constant 0 : i32
    return %c0_i32, %c0_i32_0 : i32, i32
  }
  func.func @transform_5(%arg0: i32) -> (i32, i32) {
    %c0_i32 = arith.constant 0 : i32
    %c0_i32_0 = arith.constant 0 : i32
    %c0_i32_1 = arith.constant 0 : i32
    return %c0_i32, %c0_i32_0 : i32, i32
  }
  func.func @transform_6(%arg0: i32) -> (i32, i32) {
    %c0_i32 = arith.constant 0 : i32
    %c0_i32_0 = arith.constant 0 : i32
    %c0_i32_1 = arith.constant 0 : i32
    return %c0_i32, %c0_i32_0 : i32, i32
  }
  func.func @transform_7(%arg0: i32) -> (i32, i32) {
    %c0_i32 = arith.constant 0 : i32
    %c0_i32_0 = arith.constant 0 : i32
    %c0_i32_1 = arith.constant 0 : i32
    return %c0_i32, %c0_i32_0 : i32, i32
  }
  func.func @transform_8(%arg0: i32) -> (i32, i32, i32, i32) {
    %c0_i32 = arith.constant 0 : i32
    %c0_i32_0 = arith.constant 0 : i32
    %c0_i32_1 = arith.constant 0 : i32
    %c0_i32_2 = arith.constant 0 : i32
    return %arg0, %c0_i32, %c0_i32_0, %c0_i32_1 : i32, i32, i32, i32
  }
}

</mosaic_0001>

<llo_original>
// kernel: af_bottleneck_forward.1
$region0: #{af_bottleneck_forward.1}
  #allocation0 [shape = 'u32[]', space=smem, size = 0x4, offset = 0x4, fixed_abs, tag = 'smem constant byte address 0x4 - core index']
  #allocation1 [shape = 'u32[144,128]{1,0:T(1,128)}', space=vmem, size = 0x12000, scoped, tag = 'internal scratch']
  #allocation2 [shape = 'f32[18,32,128]{2,1,0:T(8,128)}', space=vmem, size = 0x48000, scoped, tag = 'scratch operand']
  %s0 = inlined_call_operand.vmem [shape: bf16[2,16,16,128], index: 0, kind: input, shape index: {}]
  %s1 = inlined_call_operand.vmem [shape: bf16[128,128], index: 1, kind: input, shape index: {}]
  %s2 = inlined_call_operand.vmem [shape: f32[1,128], index: 2, kind: input, shape index: {}]
  %s3 = inlined_call_operand.vmem [shape: bf16[9,128,128], index: 3, kind: input, shape index: {}]
  %s4 = inlined_call_operand.vmem [shape: f32[1,128], index: 4, kind: input, shape index: {}]
  %s5 = inlined_call_operand.vmem [shape: bf16[128,128], index: 5, kind: input, shape index: {}]
  %s6 = inlined_call_operand.vmem [shape: bf16[128,128], index: 6, kind: input, shape index: {}]
  %s7 = inlined_call_operand.vmem [shape: f32[1,128], index: 7, kind: input, shape index: {}]
  %s8 = inlined_call_operand.vmem [shape: f32[2,16,16,128], index: 8, kind: output, shape index: {}]
  %s9 = sld [smem:[#allocation0]]
  $region65: #{af_bottleneck_forward.1} parent=0
    _
  %s11 = ssub.s32 1, %s9
  %s12 = scalar_select 0, %s11, %s9
  loop: start=0, step=1, limit=4
  $region2: #{af_bottleneck_forward.1} parent=0 // loop_pre_header
    _
  $region3: #{af_bottleneck_forward.1} parent=0 // loop_header
    %s14 = sphi 0, %s18
    %p15 = scmp.ge.s32.totalorder %s14, 4
    %s24 = sphi 0, %s26
    %s27 = sphi 0, %s24
    %s28 = sphi 0, %s27
    %s44 = sphi 0, %s28
    %s48 = sphi 0, %s48
    %s50 = sphi 0, %s48
    %s51 = sphi 0, %s50
    %s65 = sphi 0, %s51
    %s69 = sphi 0, %s69
    %s71 = sphi 0, %s69
    %s72 = sphi 0, %s71
    %s86 = sphi 0, %s72
    %s90 = sphi 0, %s90
    %s92 = sphi 0, %s90
    %s93 = sphi 0, %s92
    %s107 = sphi 0, %s93
    %s111 = sphi 0, %s111
    %s113 = sphi 0, %s111
    %s114 = sphi 0, %s113
    %s128 = sphi 0, %s114
    %s132 = sphi 0, %s132
    %s134 = sphi 0, %s132
    %s135 = sphi 0, %s134
    %s149 = sphi 0, %s135
    %s153 = sphi 0, %s153
    %s155 = sphi 0, %s153
    %s156 = sphi 0, %s155
    %s170 = sphi 0, %s156
    %s174 = sphi 0, %s174
    %s176 = sphi 0, %s174
    %s177 = sphi 0, %s176
    %s191 = sphi 0, %s177
    %s197 = sphi 0, %s199
    %s200 = sphi 0, %s197
    %s201 = sphi 0, %s200
    %s217 = sphi 0, %s201
  $region4: #{af_bottleneck_forward.1} parent=0 // loop_header_branch
    %17 = sbr.rel (%p15) target = $region8
  $region5: #{af_bottleneck_forward.1} parent=0 // loop_body
    %s19 = ssub.s32 %s14, 1
    %s20 = ssub.s32 %s14, 2
    %s21 = sadd.s32 %s14, 1
    %s22 = ssub.s32 %s14, %s21
    %p23 = scmp.eq.s32.totalorder %s22, 0
    %s25 = sadd.s32 %s24, 1
    %s26 = scalar_select %p23, %s24, %s25
    %p29 = pneg %p23
    %p30 = scmp.eq.s32.totalorder %s14, 1
    %p31 = por %p29, %p30
    %p32 = scmp.ne.s32.totalorder %s24, %s27
    %p33 = scmp.eq.s32.totalorder %s14, 0
    %p34 = por %p32, %p33
    %p35 = scmp.ne.s32.totalorder %s24, %s27
    %p36 = scmp.eq.s32.totalorder %s19, 1
    %p37 = por %p35, %p36
    %p38 = scmp.ne.s32.totalorder %s27, %s28
    %p39 = scmp.eq.s32.totalorder %s19, 0
    %p40 = por %p38, %p39
    %p41 = scmp.ne.s32.totalorder %s27, %s28
    %p42 = scmp.eq.s32.totalorder %s20, 1
    %p43 = por %p41, %p42
    %p45 = scmp.ne.s32.totalorder %s28, %s44
    %p46 = scmp.eq.s32.totalorder %s20, 0
    %p47 = por %p45, %p46
    %s49 = sadd.s32 %s48, 1
    %p52 = scmp.eq.s32.totalorder %s14, 1
    %p53 = scmp.ne.s32.totalorder %s48, %s50
    %p54 = scmp.eq.s32.totalorder %s14, 0
    %p55 = por %p53, %p54
    %p56 = scmp.ne.s32.totalorder %s48, %s50
    %p57 = scmp.eq.s32.totalorder %s19, 1
    %p58 = por %p56, %p57
    %p59 = scmp.ne.s32.totalorder %s50, %s51
    %p60 = scmp.eq.s32.totalorder %s19, 0
    %p61 = por %p59, %p60
    %p62 = scmp.ne.s32.totalorder %s50, %s51
    %p63 = scmp.eq.s32.totalorder %s20, 1
    %p64 = por %p62, %p63
    %p66 = scmp.ne.s32.totalorder %s51, %s65
    %p67 = scmp.eq.s32.totalorder %s20, 0
    %p68 = por %p66, %p67
    %s70 = sadd.s32 %s69, 1
    %p73 = scmp.eq.s32.totalorder %s14, 1
    %p74 = scmp.ne.s32.totalorder %s69, %s71
    %p75 = scmp.eq.s32.totalorder %s14, 0
    %p76 = por %p74, %p75
    %p77 = scmp.ne.s32.totalorder %s69, %s71
    %p78 = scmp.eq.s32.totalorder %s19, 1
    %p79 = por %p77, %p78
    %p80 = scmp.ne.s32.totalorder %s71, %s72
    %p81 = scmp.eq.s32.totalorder %s19, 0
    %p82 = por %p80, %p81
    %p83 = scmp.ne.s32.totalorder %s71, %s72
    %p84 = scmp.eq.s32.totalorder %s20, 1
    %p85 = por %p83, %p84
    %p87 = scmp.ne.s32.totalorder %s72, %s86
    %p88 = scmp.eq.s32.totalorder %s20, 0
    %p89 = por %p87, %p88
    %s91 = sadd.s32 %s90, 1
    %p94 = scmp.eq.s32.totalorder %s14, 1
    %p95 = scmp.ne.s32.totalorder %s90, %s92
    %p96 = scmp.eq.s32.totalorder %s14, 0
    %p97 = por %p95, %p96
    %p98 = scmp.ne.s32.totalorder %s90, %s92
    %p99 = scmp.eq.s32.totalorder %s19, 1
    %p100 = por %p98, %p99
    %p101 = scmp.ne.s32.totalorder %s92, %s93
    %p102 = scmp.eq.s32.totalorder %s19, 0
    %p103 = por %p101, %p102
    %p104 = scmp.ne.s32.totalorder %s92, %s93
    %p105 = scmp.eq.s32.totalorder %s20, 1
    %p106 = por %p104, %p105
    %p108 = scmp.ne.s32.totalorder %s93, %s107
    %p109 = scmp.eq.s32.totalorder %s20, 0
    %p110 = por %p108, %p109
    %s112 = sadd.s32 %s111, 1
    %p115 = scmp.eq.s32.totalorder %s14, 1
    %p116 = scmp.ne.s32.totalorder %s111, %s113
    %p117 = scmp.eq.s32.totalorder %s14, 0
    %p118 = por %p116, %p117
    %p119 = scmp.ne.s32.totalorder %s111, %s113
    %p120 = scmp.eq.s32.totalorder %s19, 1
    %p121 = por %p119, %p120
    %p122 = scmp.ne.s32.totalorder %s113, %s114
    %p123 = scmp.eq.s32.totalorder %s19, 0
    %p124 = por %p122, %p123
    %p125 = scmp.ne.s32.totalorder %s113, %s114
    %p126 = scmp.eq.s32.totalorder %s20, 1
    %p127 = por %p125, %p126
    %p129 = scmp.ne.s32.totalorder %s114, %s128
    %p130 = scmp.eq.s32.totalorder %s20, 0
    %p131 = por %p129, %p130
    %s133 = sadd.s32 %s132, 1
    %p136 = scmp.eq.s32.totalorder %s14, 1
    %p137 = scmp.ne.s32.totalorder %s132, %s134
    %p138 = scmp.eq.s32.totalorder %s14, 0
    %p139 = por %p137, %p138
    %p140 = scmp.ne.s32.totalorder %s132, %s134
    %p141 = scmp.eq.s32.totalorder %s19, 1
    %p142 = por %p140, %p141
    %p143 = scmp.ne.s32.totalorder %s134, %s135
    %p144 = scmp.eq.s32.totalorder %s19, 0
    %p145 = por %p143, %p144
    %p146 = scmp.ne.s32.totalorder %s134, %s135
    %p147 = scmp.eq.s32.totalorder %s20, 1
    %p148 = por %p146, %p147
    %p150 = scmp.ne.s32.totalorder %s135, %s149
    %p151 = scmp.eq.s32.totalorder %s20, 0
    %p152 = por %p150, %p151
    %s154 = sadd.s32 %s153, 1
    %p157 = scmp.eq.s32.totalorder %s14, 1
    %p158 = scmp.ne.s32.totalorder %s153, %s155
    %p159 = scmp.eq.s32.totalorder %s14, 0
    %p160 = por %p158, %p159
    %p161 = scmp.ne.s32.totalorder %s153, %s155
    %p162 = scmp.eq.s32.totalorder %s19, 1
    %p163 = por %p161, %p162
    %p164 = scmp.ne.s32.totalorder %s155, %s156
    %p165 = scmp.eq.s32.totalorder %s19, 0
    %p166 = por %p164, %p165
    %p167 = scmp.ne.s32.totalorder %s155, %s156
    %p168 = scmp.eq.s32.totalorder %s20, 1
    %p169 = por %p167, %p168
    %p171 = scmp.ne.s32.totalorder %s156, %s170
    %p172 = scmp.eq.s32.totalorder %s20, 0
    %p173 = por %p171, %p172
    %s175 = sadd.s32 %s174, 1
    %p178 = scmp.eq.s32.totalorder %s14, 1
    %p179 = scmp.ne.s32.totalorder %s174, %s176
    %p180 = scmp.eq.s32.totalorder %s14, 0
    %p181 = por %p179, %p180
    %p182 = scmp.ne.s32.totalorder %s174, %s176
    %p183 = scmp.eq.s32.totalorder %s19, 1
    %p184 = por %p182, %p183
    %p185 = scmp.ne.s32.totalorder %s176, %s177
    %p186 = scmp.eq.s32.totalorder %s19, 0
    %p187 = por %p185, %p186
    %p188 = scmp.ne.s32.totalorder %s176, %s177
    %p189 = scmp.eq.s32.totalorder %s20, 1
    %p190 = por %p188, %p189
    %p192 = scmp.ne.s32.totalorder %s177, %s191
    %p193 = scmp.eq.s32.totalorder %s20, 0
    %p194 = por %p192, %p193
    %s195 = ssub.s32 %s14, %s21
    %p196 = scmp.eq.s32.totalorder %s195, 0
    %s198 = sadd.s32 %s197, 1
    %s199 = scalar_select %p196, %s197, %s198
    %p202 = pneg %p196
    %p203 = scmp.eq.s32.totalorder %s14, 1
    %p204 = por %p202, %p203
    %p205 = scmp.ne.s32.totalorder %s197, %s200
    %p206 = scmp.eq.s32.totalorder %s14, 0
    %p207 = por %p205, %p206
    %p208 = scmp.ne.s32.totalorder %s197, %s200
    %p209 = scmp.eq.s32.totalorder %s19, 1
    %p210 = por %p208, %p209
    %p211 = scmp.ne.s32.totalorder %s200, %s201
    %p212 = scmp.eq.s32.totalorder %s19, 0
    %p213 = por %p211, %p212
    %p214 = scmp.ne.s32.totalorder %s200, %s201
    %p215 = scmp.eq.s32.totalorder %s20, 1
    %p216 = por %p214, %p215
    %p218 = scmp.ne.s32.totalorder %s201, %s217
    %p219 = scmp.eq.s32.totalorder %s20, 0
    %p220 = por %p218, %p219
    %p221 = scmp.le.s32.totalorder 1, %s14
    %p222 = scmp.lt.s32.totalorder %s14, 3
    %p223 = pnand %p221, %p222
    %p224 = pneg %p223
    // Predicated region
    $region9: #{af_bottleneck_forward.1} parent=5 // pred_check
      _
    $region10: #{af_bottleneck_forward.1} parent=5 // pred_check_branch
      %226 = sbr.rel (%p223) target = $region12
    $region11: #{af_bottleneck_forward.1} parent=5 // pred_region
      %s227 = ssub.s32 %s14, 1
      // Predicated region
      $region13: #{af_bottleneck_forward.1} parent=11 // pred_check
        %p228 = pneg %p61
      $region14: #{af_bottleneck_forward.1} parent=11 // pred_check_branch
        %230 = sbr.rel (%p228) target = $region16
      $region15: #{af_bottleneck_forward.1} parent=11 // pred_region
        _
      $region16: #{af_bottleneck_forward.1} parent=11 // pred_fallthru
        _
      // Predicated region
      $region17: #{af_bottleneck_forward.1} parent=11 // pred_check
        %p231 = pneg %p82
      $region18: #{af_bottleneck_forward.1} parent=11 // pred_check_branch
        %233 = sbr.rel (%p231) target = $region20
      $region19: #{af_bottleneck_forward.1} parent=11 // pred_region
        _
      $region20: #{af_bottleneck_forward.1} parent=11 // pred_fallthru
        _
      // Predicated region
      $region21: #{af_bottleneck_forward.1} parent=11 // pred_check
        %p234 = pneg %p103
      $region22: #{af_bottleneck_forward.1} parent=11 // pred_check_branch
        %236 = sbr.rel (%p234) target = $region24
      $region23: #{af_bottleneck_forward.1} parent=11 // pred_region
        _
      $region24: #{af_bottleneck_forward.1} parent=11 // pred_fallthru
        _
      // Predicated region
      $region25: #{af_bottleneck_forward.1} parent=11 // pred_check
        %p237 = pneg %p124
      $region26: #{af_bottleneck_forward.1} parent=11 // pred_check_branch
        %239 = sbr.rel (%p237) target = $region28
      $region27: #{af_bottleneck_forward.1} parent=11 // pred_region
        _
      $region28: #{af_bottleneck_forward.1} parent=11 // pred_fallthru
        _
      // Predicated region
      $region29: #{af_bottleneck_forward.1} parent=11 // pred_check
        %p240 = pneg %p145
      $region30: #{af_bottleneck_forward.1} parent=11 // pred_check_branch
        %242 = sbr.rel (%p240) target = $region32
      $region31: #{af_bottleneck_forward.1} parent=11 // pred_region
        _
      $region32: #{af_bottleneck_forward.1} parent=11 // pred_fallthru
        _
      // Predicated region
      $region33: #{af_bottleneck_forward.1} parent=11 // pred_check
        %p243 = pneg %p166
      $region34: #{af_bottleneck_forward.1} parent=11 // pred_check_branch
        %245 = sbr.rel (%p243) target = $region36
      $region35: #{af_bottleneck_forward.1} parent=11 // pred_region
        _
      $region36: #{af_bottleneck_forward.1} parent=11 // pred_fallthru
        _
      // Predicated region
      $region37: #{af_bottleneck_forward.1} parent=11 // pred_check
        %p246 = pneg %p187
      $region38: #{af_bottleneck_forward.1} parent=11 // pred_check_branch
        %248 = sbr.rel (%p246) target = $region40
      $region39: #{af_bottleneck_forward.1} parent=11 // pred_region
        _
      $region40: #{af_bottleneck_forward.1} parent=11 // pred_fallthru
        _
    $region12: #{af_bottleneck_forward.1} parent=5 // pred_fallthru
      _
    %p249 = scmp.lt.s32.totalorder %s14, 2
    // Predicated region
    $region41: #{af_bottleneck_forward.1} parent=5 // pred_check
      %p250 = pneg %p249
    $region42: #{af_bottleneck_forward.1} parent=5 // pred_check_branch
      %252 = sbr.rel (%p250) target = $region44
    $region43: #{af_bottleneck_forward.1} parent=5 // pred_region
      // Predicated region
      $region45: #{af_bottleneck_forward.1} parent=43 // pred_check
        %p253 = pneg %p34
      $region46: #{af_bottleneck_forward.1} parent=43 // pred_check_branch
        %255 = sbr.rel (%p253) target = $region48
      $region47: #{af_bottleneck_forward.1} parent=43 // pred_region
        %p256 = scmp.lt.s32.totalorder %s14, 1
        %s257 = scalar_select %p256, %s14, 1
        %s258 = smul.addr %s257, 32
        %s259 = smul.addr %s258, 4
        %s260 = scalar_lea.vmem %s0, %s259
      $region48: #{af_bottleneck_forward.1} parent=43 // pred_fallthru
        _
    $region44: #{af_bottleneck_forward.1} parent=5 // pred_fallthru
      _
    %p261 = scmp.le.s32.totalorder 1, %s14
    %p262 = scmp.lt.s32.totalorder %s14, 3
    %p263 = pnand %p261, %p262
    %p264 = pneg %p263
    // Predicated region
    $region49: #{af_bottleneck_forward.1} parent=5 // pred_check
      _
    $region50: #{af_bottleneck_forward.1} parent=5 // pred_check_branch
      %266 = sbr.rel (%p263) target = $region52
    $region51: #{af_bottleneck_forward.1} parent=5 // pred_region
      %s267 = ssub.s32 %s14, 1
      %p268 = scmp.lt.s32.totalorder %s19, 1
      %s269 = scalar_select %p268, %s19, 1
      %s270 = smul.addr %s269, 32
      %s271 = smul.addr %s270, 4
      %s272 = scalar_lea.vmem %s0, %s271
      %p273 = pneg %p40
      %p274 = pneg %p37
      %p275 = pneg %p61
      %p276 = pneg %p58
      %p277 = pneg %p82
      %p278 = pneg %p79
      %p279 = pneg %p103
      %p280 = pneg %p100
      %p281 = pneg %p124
      %p282 = pneg %p121
      %p283 = pneg %p145
      %p284 = pneg %p142
      %p285 = pneg %p166
      %p286 = pneg %p163
      %p287 = pneg %p187
      %p288 = pneg %p184
      %p289 = pneg %p213
      %p290 = pneg %p210
      %p291 = scmp.lt.s32.totalorder %s19, 1
      %s292 = scalar_select %p291, %s19, 1
      %s293 = smul.addr %s292, 32
      %s294 = smul.addr %s293, 8
      %s295 = scalar_lea.vmem %s8, %s294
      %p296 = scmp.lt.s32.totalorder %s19, 1
      %s297 = scalar_select %p296, %s19, 1
      %s298 = smul.addr %s297, 32
      %s299 = smul.addr %s298, 4
      %s300 = scalar_lea.vmem %s0, %s299
      %p301 = scmp.lt.s32.totalorder %s19, 1
      %s302 = scalar_select %p301, %s19, 1
      %s303 = smul.addr %s302, 32
      %s304 = smul.addr %s303, 8
      %s305 = scalar_lea.vmem %s8, %s304
      %v307 = vld [vmem:[%s300] sm:$0xf]
      %v308 = vld [vmem:[%s300 + $0x4] sm:$0xf]
      %v309 = vld [vmem:[%s300 + $0x8] sm:$0xf]
      %v310 = vld [vmem:[%s300 + $0xc] sm:$0xf]
      %v311 = vld [vmem:[%s300 + $0x10] sm:$0xf]
      %v312 = vld [vmem:[%s300 + $0x14] sm:$0xf]
      %v313 = vld [vmem:[%s300 + $0x18] sm:$0xf]
      %v314 = vld [vmem:[%s300 + $0x1c] sm:$0xf]
      %v315 = vld [vmem:[%s300 + $0x20] sm:$0xf]
      %v316 = vld [vmem:[%s300 + $0x24] sm:$0xf]
      %v317 = vld [vmem:[%s300 + $0x28] sm:$0xf]
      %v318 = vld [vmem:[%s300 + $0x2c] sm:$0xf]
      %v319 = vld [vmem:[%s300 + $0x30] sm:$0xf]
      %v320 = vld [vmem:[%s300 + $0x34] sm:$0xf]
      %v321 = vld [vmem:[%s300 + $0x38] sm:$0xf]
      %v322 = vld [vmem:[%s300 + $0x3c] sm:$0xf]
      %v323 = vld [vmem:[%s300 + $0x40] sm:$0xf]
      %v324 = vld [vmem:[%s300 + $0x44] sm:$0xf]
      %v325 = vld [vmem:[%s300 + $0x48] sm:$0xf]
      %v326 = vld [vmem:[%s300 + $0x4c] sm:$0xf]
      %v327 = vld [vmem:[%s300 + $0x50] sm:$0xf]
      %v328 = vld [vmem:[%s300 + $0x54] sm:$0xf]
      %v329 = vld [vmem:[%s300 + $0x58] sm:$0xf]
      %v330 = vld [vmem:[%s300 + $0x5c] sm:$0xf]
      %v331 = vld [vmem:[%s300 + $0x60] sm:$0xf]
      %v332 = vld [vmem:[%s300 + $0x64] sm:$0xf]
      %v333 = vld [vmem:[%s300 + $0x68] sm:$0xf]
      %v334 = vld [vmem:[%s300 + $0x6c] sm:$0xf]
      %v335 = vld [vmem:[%s300 + $0x70] sm:$0xf]
      %v336 = vld [vmem:[%s300 + $0x74] sm:$0xf]
      %v337 = vld [vmem:[%s300 + $0x78] sm:$0xf]
      %v338 = vld [vmem:[%s300 + $0x7c] sm:$0xf]
      %v339 = vld [vmem:[%s1] sm:$0xf]
      %v340 = vld [vmem:[%s1 + $0x4] sm:$0xf]
      %v341 = vld [vmem:[%s1 + $0x8] sm:$0xf]
      %v342 = vld [vmem:[%s1 + $0xc] sm:$0xf]
      %v343 = vld [vmem:[%s1 + $0x10] sm:$0xf]
      %v344 = vld [vmem:[%s1 + $0x14] sm:$0xf]
      %v345 = vld [vmem:[%s1 + $0x18] sm:$0xf]
      %v346 = vld [vmem:[%s1 + $0x1c] sm:$0xf]
      %v347 = vld [vmem:[%s1 + $0x20] sm:$0xf]
      %v348 = vld [vmem:[%s1 + $0x24] sm:$0xf]
      %v349 = vld [vmem:[%s1 + $0x28] sm:$0xf]
      %v350 = vld [vmem:[%s1 + $0x2c] sm:$0xf]
      %v351 = vld [vmem:[%s1 + $0x30] sm:$0xf]
      %v352 = vld [vmem:[%s1 + $0x34] sm:$0xf]
      %v353 = vld [vmem:[%s1 + $0x38] sm:$0xf]
      %v354 = vld [vmem:[%s1 + $0x3c] sm:$0xf]
      %v355 = vld [vmem:[%s2] sm:$0x1]
      %v357 = vlaneseq
      %v358 = vshrl.u32 %v357, 7
      %v359 = vsub.s32 0, %v358
      %v360 = vrot.slane %v355, %v359
      %v394 = vunpack.c.l.b16 %v307
      %v395 = vunpack.c.l.b16 %v308
      %v396 = vunpack.c.l.b16 %v309
      %v397 = vunpack.c.l.b16 %v310
      %v398 = vunpack.c.l.b16 %v311
      %v399 = vunpack.c.l.b16 %v312
      %v400 = vunpack.c.l.b16 %v313
      %v401 = vunpack.c.l.b16 %v314
      %v402 = vunpack.c.l.b16 %v315
      %v403 = vunpack.c.l.b16 %v316
      %v404 = vunpack.c.l.b16 %v317
      %v405 = vunpack.c.l.b16 %v318
      %v406 = vunpack.c.l.b16 %v319
      %v407 = vunpack.c.l.b16 %v320
      %v408 = vunpack.c.l.b16 %v321
      %v409 = vunpack.c.l.b16 %v322
      %v410 = vunpack.c.l.b16 %v323
      %v411 = vunpack.c.l.b16 %v324
      %v412 = vunpack.c.l.b16 %v325
      %v413 = vunpack.c.l.b16 %v326
      %v414 = vunpack.c.l.b16 %v327
      %v415 = vunpack.c.l.b16 %v328
      %v416 = vunpack.c.l.b16 %v329
      %v417 = vunpack.c.l.b16 %v330
      %v418 = vunpack.c.l.b16 %v331
      %v419 = vunpack.c.l.b16 %v332
      %v420 = vunpack.c.l.b16 %v333
      %v421 = vunpack.c.l.b16 %v334
      %v422 = vunpack.c.l.b16 %v335
      %v423 = vunpack.c.l.b16 %v336
      %v424 = vunpack.c.l.b16 %v337
      %v425 = vunpack.c.l.b16 %v338
      %v426 = vpack.c.b16 %v395, %v394
      %v427 = vpack.c.b16 %v397, %v396
      %v428 = vpack.c.b16 %v399, %v398
      %v429 = vpack.c.b16 %v401, %v400
      %v430 = vpack.c.b16 %v403, %v402
      %v431 = vpack.c.b16 %v405, %v404
      %v432 = vpack.c.b16 %v407, %v406
      %v433 = vpack.c.b16 %v409, %v408
      %v434 = vpack.c.b16 %v411, %v410
      %v435 = vpack.c.b16 %v413, %v412
      %v436 = vpack.c.b16 %v415, %v414
      %v437 = vpack.c.b16 %v417, %v416
      %v438 = vpack.c.b16 %v419, %v418
      %v439 = vpack.c.b16 %v421, %v420
      %v440 = vpack.c.b16 %v423, %v422
      %v441 = vpack.c.b16 %v425, %v424
      %v474 = vunpack.c.l.b16 %v339
      %v475 = vunpack.c.l.b16 %v340
      %v476 = vunpack.c.l.b16 %v341
      %v477 = vunpack.c.l.b16 %v342
      %v478 = vunpack.c.l.b16 %v343
      %v479 = vunpack.c.l.b16 %v344
      %v480 = vunpack.c.l.b16 %v345
      %v481 = vunpack.c.l.b16 %v346
      %v482 = vunpack.c.l.b16 %v347
      %v483 = vunpack.c.l.b16 %v348
      %v484 = vunpack.c.l.b16 %v349
      %v485 = vunpack.c.l.b16 %v350
      %v486 = vunpack.c.l.b16 %v351
      %v487 = vunpack.c.l.b16 %v352
      %v488 = vunpack.c.l.b16 %v353
      %v489 = vunpack.c.l.b16 %v354
      %v490 = vpack.c.b16 %v475, %v474
      %v491 = vpack.c.b16 %v477, %v476
      %v492 = vpack.c.b16 %v479, %v478
      %v493 = vpack.c.b16 %v481, %v480
      %v494 = vpack.c.b16 %v483, %v482
      %v495 = vpack.c.b16 %v485, %v484
      %v496 = vpack.c.b16 %v487, %v486
      %v497 = vpack.c.b16 %v489, %v488
      %506 = vmatprep.subr.bf16.mxu0 0
      %507 = vmatpush1.bf16.msra.mxu0 %v490
      %508 = vmatprep.subr.bf16.mxu0 0
      %509 = vmatpush1.bf16.msra.mxu0 %v491
      %510 = vmatprep.subr.bf16.mxu0 0
      %511 = vmatpush1.bf16.msra.mxu0 %v492
      %512 = vmatprep.subr.bf16.mxu0 0
      %513 = vmatpush1.bf16.msra.mxu0 %v493
      %514 = vmatprep.subr.bf16.mxu0 0
      %515 = vmatpush1.bf16.msra.mxu0 %v494
      %516 = vmatprep.subr.bf16.mxu0 0
      %517 = vmatpush1.bf16.msra.mxu0 %v495
      %518 = vmatprep.subr.bf16.mxu0 0
      %519 = vmatpush1.bf16.msra.mxu0 %v496
      %520 = vmatprep.subr.bf16.mxu0 0
      %521 = vmatpush1.bf16.msra.mxu0 %v497
      %522 = vmatprep.subr.bf16.mxu0 0
      %523 = vmatpush1.bf16.msra.mxu0 0
      %524 = vmatprep.subr.bf16.mxu0 0
      %525 = vmatpush1.bf16.msra.mxu0 0
      %526 = vmatprep.subr.bf16.mxu0 0
      %527 = vmatpush1.bf16.msra.mxu0 0
      %528 = vmatprep.subr.bf16.mxu0 0
      %529 = vmatpush1.bf16.msra.mxu0 0
      %530 = vmatprep.subr.bf16.mxu0 0
      %531 = vmatpush1.bf16.msra.mxu0 0
      %532 = vmatprep.subr.bf16.mxu0 0
      %533 = vmatpush1.bf16.msra.mxu0 0
      %534 = vmatprep.subr.bf16.mxu0 0
      %535 = vmatpush1.bf16.msra.mxu0 0
      %536 = vmatprep.subr.bf16.mxu0 0
      %537 = vmatpush1.bf16.msra.mxu0 0
      %538 = vmatprep.mubr.bf16.mxu0 0
      %539 = vmatmul.mubr.bf16.gmra.mrb[0].mxu0 %v426
      %v540 = vpop.f32.mrb[0].mxu0
      %v541 = vadd.f32 %v360, %v540
      %v542 = vpop.f32.mrb[0].mxu0
      %v543 = vpop.f32.mrb[0].mxu0
      %v544 = vadd.f32 %v360, %v543
      %v545 = vpop.f32.mrb[0].mxu0
      %546 = vmatprep.mubr.bf16.mxu0 0
      %547 = vmatmul.mubr.bf16.gmra.mrb[0].mxu0 %v427
      %v548 = vpop.f32.mrb[0].mxu0
      %v549 = vadd.f32 %v360, %v548
      %v550 = vpop.f32.mrb[0].mxu0
      %v551 = vpop.f32.mrb[0].mxu0
      %v552 = vadd.f32 %v360, %v551
      %v553 = vpop.f32.mrb[0].mxu0
      %554 = vmatprep.mubr.bf16.mxu0 0
      %555 = vmatmul.mubr.bf16.gmra.mrb[0].mxu0 %v428
      %v556 = vpop.f32.mrb[0].mxu0
      %v557 = vadd.f32 %v360, %v556
      %v558 = vpop.f32.mrb[0].mxu0
      %v559 = vpop.f32.mrb[0].mxu0
      %v560 = vadd.f32 %v360, %v559
      %v561 = vpop.f32.mrb[0].mxu0
      %562 = vmatprep.mubr.bf16.mxu0 0
      %563 = vmatmul.mubr.bf16.gmra.mrb[0].mxu0 %v429
      %v564 = vpop.f32.mrb[0].mxu0
      %v565 = vadd.f32 %v360, %v564
      %v566 = vpop.f32.mrb[0].mxu0
      %v567 = vpop.f32.mrb[0].mxu0
      %v568 = vadd.f32 %v360, %v567
      %v569 = vpop.f32.mrb[0].mxu0
      %570 = vmatprep.mubr.bf16.mxu0 0
      %571 = vmatmul.mubr.bf16.gmra.mrb[0].mxu0 %v430
      %v572 = vpop.f32.mrb[0].mxu0
      %v573 = vadd.f32 %v360, %v572
      %v574 = vpop.f32.mrb[0].mxu0
      %v575 = vpop.f32.mrb[0].mxu0
      %v576 = vadd.f32 %v360, %v575
      %v577 = vpop.f32.mrb[0].mxu0
      %578 = vmatprep.mubr.bf16.mxu0 0
      %579 = vmatmul.mubr.bf16.gmra.mrb[0].mxu0 %v431
      %v580 = vpop.f32.mrb[0].mxu0
      %v581 = vadd.f32 %v360, %v580
      %v582 = vpop.f32.mrb[0].mxu0
      %v583 = vpop.f32.mrb[0].mxu0
      %v584 = vadd.f32 %v360, %v583
      %v585 = vpop.f32.mrb[0].mxu0
      %586 = vmatprep.mubr.bf16.mxu0 0
      %587 = vmatmul.mubr.bf16.gmra.mrb[0].mxu0 %v432
      %v588 = vpop.f32.mrb[0].mxu0
      %v589 = vadd.f32 %v360, %v588
      %v590 = vpop.f32.mrb[0].mxu0
      %v591 = vpop.f32.mrb[0].mxu0
      %v592 = vadd.f32 %v360, %v591
      %v593 = vpop.f32.mrb[0].mxu0
      %594 = vmatprep.mubr.bf16.mxu0 0
      %595 = vmatmul.mubr.bf16.gmra.mrb[0].mxu0 %v433
      %v596 = vpop.f32.mrb[0].mxu0
      %v597 = vadd.f32 %v360, %v596
      %v598 = vpop.f32.mrb[0].mxu0
      %v599 = vpop.f32.mrb[0].mxu0
      %v600 = vadd.f32 %v360, %v599
      %v601 = vpop.f32.mrb[0].mxu0
      %602 = vmatprep.mubr.bf16.mxu0 0
      %603 = vmatmul.mubr.bf16.gmra.mrb[0].mxu0 %v434
      %v604 = vpop.f32.mrb[0].mxu0
      %v605 = vadd.f32 %v360, %v604
      %v606 = vpop.f32.mrb[0].mxu0
      %v607 = vpop.f32.mrb[0].mxu0
      %v608 = vadd.f32 %v360, %v607
      %v609 = vpop.f32.mrb[0].mxu0
      %610 = vmatprep.mubr.bf16.mxu0 0
      %611 = vmatmul.mubr.bf16.gmra.mrb[0].mxu0 %v435
      %v612 = vpop.f32.mrb[0].mxu0
      %v613 = vadd.f32 %v360, %v612
      %v614 = vpop.f32.mrb[0].mxu0
      %v615 = vpop.f32.mrb[0].mxu0
      %v616 = vadd.f32 %v360, %v615
      %v617 = vpop.f32.mrb[0].mxu0
      %618 = vmatprep.mubr.bf16.mxu0 0
      %619 = vmatmul.mubr.bf16.gmra.mrb[0].mxu0 %v436
      %v620 = vpop.f32.mrb[0].mxu0
      %v621 = vadd.f32 %v360, %v620
      %v622 = vpop.f32.mrb[0].mxu0
      %v623 = vpop.f32.mrb[0].mxu0
      %v624 = vadd.f32 %v360, %v623
      %v625 = vpop.f32.mrb[0].mxu0
      %626 = vmatprep.mubr.bf16.mxu0 0
      %627 = vmatmul.mubr.bf16.gmra.mrb[0].mxu0 %v437
      %v628 = vpop.f32.mrb[0].mxu0
      %v629 = vadd.f32 %v360, %v628
      %v630 = vpop.f32.mrb[0].mxu0
      %v631 = vpop.f32.mrb[0].mxu0
      %v632 = vadd.f32 %v360, %v631
      %v633 = vpop.f32.mrb[0].mxu0
      %634 = vmatprep.mubr.bf16.mxu0 0
      %635 = vmatmul.mubr.bf16.gmra.mrb[0].mxu0 %v438
      %v636 = vpop.f32.mrb[0].mxu0
      %v637 = vadd.f32 %v360, %v636
      %v638 = vpop.f32.mrb[0].mxu0
      %v639 = vpop.f32.mrb[0].mxu0
      %v640 = vadd.f32 %v360, %v639
      %v641 = vpop.f32.mrb[0].mxu0
      %642 = vmatprep.mubr.bf16.mxu0 0
      %643 = vmatmul.mubr.bf16.gmra.mrb[0].mxu0 %v439
      %v644 = vpop.f32.mrb[0].mxu0
      %v645 = vadd.f32 %v360, %v644
      %v646 = vpop.f32.mrb[0].mxu0
      %v647 = vpop.f32.mrb[0].mxu0
      %v648 = vadd.f32 %v360, %v647
      %v649 = vpop.f32.mrb[0].mxu0
      %650 = vmatprep.mubr.bf16.mxu0 0
      %651 = vmatmul.mubr.bf16.gmra.mrb[0].mxu0 %v440
      %v652 = vpop.f32.mrb[0].mxu0
      %v653 = vadd.f32 %v360, %v652
      %v654 = vpop.f32.mrb[0].mxu0
      %v655 = vpop.f32.mrb[0].mxu0
      %v656 = vadd.f32 %v360, %v655
      %v657 = vpop.f32.mrb[0].mxu0
      %658 = vmatprep.mubr.bf16.mxu0 0
      %659 = vmatmul.mubr.bf16.gmra.mrb[0].mxu0 %v441
      %v660 = vpop.f32.mrb[0].mxu0
      %v661 = vadd.f32 %v360, %v660
      %v662 = vpop.f32.mrb[0].mxu0
      %v663 = vpop.f32.mrb[0].mxu0
      %v664 = vadd.f32 %v360, %v663
      %v665 = vpop.f32.mrb[0].mxu0
      %666 = vdwg.mxu0
      %v667 = vmax.f32 %v541, 0.0
      %v668 = vmax.f32 %v544, 0.0
      %v669 = vmax.f32 %v549, 0.0
      %v670 = vmax.f32 %v552, 0.0
      %v671 = vmax.f32 %v557, 0.0
      %v672 = vmax.f32 %v560, 0.0
      %v673 = vmax.f32 %v565, 0.0
      %v674 = vmax.f32 %v568, 0.0
      %v675 = vmax.f32 %v573, 0.0
      %v676 = vmax.f32 %v576, 0.0
      %v677 = vmax.f32 %v581, 0.0
      %v678 = vmax.f32 %v584, 0.0
      %v679 = vmax.f32 %v589, 0.0
      %v680 = vmax.f32 %v592, 0.0
      %v681 = vmax.f32 %v597, 0.0
      %v682 = vmax.f32 %v600, 0.0
      %v683 = vmax.f32 %v605, 0.0
      %v684 = vmax.f32 %v608, 0.0
      %v685 = vmax.f32 %v613, 0.0
      %v686 = vmax.f32 %v616, 0.0
      %v687 = vmax.f32 %v621, 0.0
      %v688 = vmax.f32 %v624, 0.0
      %v689 = vmax.f32 %v629, 0.0
      %v690 = vmax.f32 %v632, 0.0
      %v691 = vmax.f32 %v637, 0.0
      %v692 = vmax.f32 %v640, 0.0
      %v693 = vmax.f32 %v645, 0.0
      %v694 = vmax.f32 %v648, 0.0
      %v695 = vmax.f32 %v653, 0.0
      %v696 = vmax.f32 %v656, 0.0
      %v697 = vmax.f32 %v661, 0.0
      %v698 = vmax.f32 %v664, 0.0
      %699 = vst [vmem:[#allocation2] sm:$0xff] 0.0
      %700 = vst [vmem:[#allocation2 + $0x8] sm:$0xff] 0.0
      %701 = vst [vmem:[#allocation2 + $0x10] sm:$0xff] 0.0
      %702 = vst [vmem:[#allocation2 + $0x18] sm:$0xff] 0.0
      %s703 = scalar_lea.vmem [#allocation2], 544
      %704 = vst [vmem:[%s703] sm:$0xff] 0.0
      %705 = vst [vmem:[%s703 + $0x8] sm:$0xff] 0.0
      %706 = vst [vmem:[%s703 + $0x10] sm:$0xff] 0.0
      %707 = vst [vmem:[%s703 + $0x18] sm:$0xff] 0.0
      %708 = vst [vmem:[#allocation2] sm:$0xff] 0.0
      %709 = vst [vmem:[#allocation2 + $0x20] sm:$0xff] 0.0
      %710 = vst [vmem:[#allocation2 + $0x40] sm:$0xff] 0.0
      %711 = vst [vmem:[#allocation2 + $0x60] sm:$0xff] 0.0
      %712 = vst [vmem:[#allocation2 + $0x80] sm:$0xff] 0.0
      %713 = vst [vmem:[#allocation2 + $0xa0] sm:$0xff] 0.0
      %714 = vst [vmem:[#allocation2 + $0xc0] sm:$0xff] 0.0
      %715 = vst [vmem:[#allocation2 + $0xe0] sm:$0xff] 0.0
      %716 = vst [vmem:[#allocation2 + $0x100] sm:$0xff] 0.0
      %717 = vst [vmem:[#allocation2 + $0x120] sm:$0xff] 0.0
      %718 = vst [vmem:[#allocation2 + $0x140] sm:$0xff] 0.0
      %719 = vst [vmem:[#allocation2 + $0x160] sm:$0xff] 0.0
      %720 = vst [vmem:[#allocation2 + $0x180] sm:$0xff] 0.0
      %721 = vst [vmem:[#allocation2 + $0x1a0] sm:$0xff] 0.0
      %722 = vst [vmem:[#allocation2 + $0x1c0] sm:$0xff] 0.0
      %723 = vst [vmem:[#allocation2 + $0x1e0] sm:$0xff] 0.0
      %724 = vst [vmem:[#allocation2 + $0x200] sm:$0xff] 0.0
      %725 = vst [vmem:[#allocation2 + $0x220] sm:$0xff] 0.0
      %726 = vst [vmem:[#allocation2 + $0x18] sm:$0xff] 0.0
      %727 = vst [vmem:[#allocation2 + $0x38] sm:$0xff] 0.0
      %728 = vst [vmem:[#allocation2 + $0x58] sm:$0xff] 0.0
      %729 = vst [vmem:[#allocation2 + $0x78] sm:$0xff] 0.0
      %730 = vst [vmem:[#allocation2 + $0x98] sm:$0xff] 0.0
      %731 = vst [vmem:[#allocation2 + $0xb8] sm:$0xff] 0.0
      %732 = vst [vmem:[#allocation2 + $0xd8] sm:$0xff] 0.0
      %733 = vst [vmem:[#allocation2 + $0xf8] sm:$0xff] 0.0
      %734 = vst [vmem:[#allocation2 + $0x118] sm:$0xff] 0.0
      %735 = vst [vmem:[#allocation2 + $0x138] sm:$0xff] 0.0
      %736 = vst [vmem:[#allocation2 + $0x158] sm:$0xff] 0.0
      %737 = vst [vmem:[#allocation2 + $0x178] sm:$0xff] 0.0
      %738 = vst [vmem:[#allocation2 + $0x198] sm:$0xff] 0.0
      %739 = vst [vmem:[#allocation2 + $0x1b8] sm:$0xff] 0.0
      %740 = vst [vmem:[#allocation2 + $0x1d8] sm:$0xff] 0.0
      %741 = vst [vmem:[#allocation2 + $0x1f8] sm:$0xff] 0.0
      %742 = vst [vmem:[#allocation2 + $0x218] sm:$0xff] 0.0
      %743 = vst [vmem:[#allocation2 + $0x238] sm:$0xff] 0.0
      %s744 = scalar_lea.vmem [#allocation2], 32
      %745 = vst [vmem:[%s744 + $0x8] sm:$0xff] %v667
      %746 = vst [vmem:[%s744 + $0x10] sm:$0xff] %v668
      %747 = vst [vmem:[%s744 + $0x28] sm:$0xff] %v669
      %748 = vst [vmem:[%s744 + $0x30] sm:$0xff] %v670
      %749 = vst [vmem:[%s744 + $0x48] sm:$0xff] %v671
      %750 = vst [vmem:[%s744 + $0x50] sm:$0xff] %v672
      %751 = vst [vmem:[%s744 + $0x68] sm:$0xff] %v673
      %752 = vst [vmem:[%s744 + $0x70] sm:$0xff] %v674
      %753 = vst [vmem:[%s744 + $0x88] sm:$0xff] %v675
      %754 = vst [vmem:[%s744 + $0x90] sm:$0xff] %v676
      %755 = vst [vmem:[%s744 + $0xa8] sm:$0xff] %v677
      %756 = vst [vmem:[%s744 + $0xb0] sm:$0xff] %v678
      %757 = vst [vmem:[%s744 + $0xc8] sm:$0xff] %v679
      %758 = vst [vmem:[%s744 + $0xd0] sm:$0xff] %v680
      %759 = vst [vmem:[%s744 + $0xe8] sm:$0xff] %v681
      %760 = vst [vmem:[%s744 + $0xf0] sm:$0xff] %v682
      %761 = vst [vmem:[%s744 + $0x108] sm:$0xff] %v683
      %762 = vst [vmem:[%s744 + $0x110] sm:$0xff] %v684
      %763 = vst [vmem:[%s744 + $0x128] sm:$0xff] %v685
      %764 = vst [vmem:[%s744 + $0x130] sm:$0xff] %v686
      %765 = vst [vmem:[%s744 + $0x148] sm:$0xff] %v687
      %766 = vst [vmem:[%s744 + $0x150] sm:$0xff] %v688
      %767 = vst [vmem:[%s744 + $0x168] sm:$0xff] %v689
      %768 = vst [vmem:[%s744 + $0x170] sm:$0xff] %v690
      %769 = vst [vmem:[%s744 + $0x188] sm:$0xff] %v691
      %770 = vst [vmem:[%s744 + $0x190] sm:$0xff] %v692
      %771 = vst [vmem:[%s744 + $0x1a8] sm:$0xff] %v693
      %772 = vst [vmem:[%s744 + $0x1b0] sm:$0xff] %v694
      %773 = vst [vmem:[%s744 + $0x1c8] sm:$0xff] %v695
      %774 = vst [vmem:[%s744 + $0x1d0] sm:$0xff] %v696
      %775 = vst [vmem:[%s744 + $0x1e8] sm:$0xff] %v697
      %776 = vst [vmem:[%s744 + $0x1f0] sm:$0xff] %v698
      %v777 = vld [vmem:[#allocation2 + $0x7] sm:$0xff]
      %v778 = vld [vmem:[#allocation2 + $0xf] sm:$0xff]
      %v779 = vld [vmem:[#allocation2 + $0x27] sm:$0xff]
      %v780 = vld [vmem:[#allocation2 + $0x2f] sm:$0xff]
      %v781 = vld [vmem:[#allocation2 + $0x47] sm:$0xff]
      %v782 = vld [vmem:[#allocation2 + $0x4f] sm:$0xff]
      %v783 = vld [vmem:[#allocation2 + $0x67] sm:$0xff]
      %v784 = vld [vmem:[#allocation2 + $0x6f] sm:$0xff]
      %v785 = vld [vmem:[#allocation2 + $0x87] sm:$0xff]
      %v786 = vld [vmem:[#allocation2 + $0x8f] sm:$0xff]
      %v787 = vld [vmem:[#allocation2 + $0xa7] sm:$0xff]
      %v788 = vld [vmem:[#allocation2 + $0xaf] sm:$0xff]
      %v789 = vld [vmem:[#allocation2 + $0xc7] sm:$0xff]
      %v790 = vld [vmem:[#allocation2 + $0xcf] sm:$0xff]
      %v791 = vld [vmem:[#allocation2 + $0xe7] sm:$0xff]
      %v792 = vld [vmem:[#allocation2 + $0xef] sm:$0xff]
      %v793 = vld [vmem:[#allocation2 + $0x107] sm:$0xff]
      %v794 = vld [vmem:[#allocation2 + $0x10f] sm:$0xff]
      %v795 = vld [vmem:[#allocation2 + $0x127] sm:$0xff]
      %v796 = vld [vmem:[#allocation2 + $0x12f] sm:$0xff]
      %v797 = vld [vmem:[#allocation2 + $0x147] sm:$0xff]
      %v798 = vld [vmem:[#allocation2 + $0x14f] sm:$0xff]
      %v799 = vld [vmem:[#allocation2 + $0x167] sm:$0xff]
      %v800 = vld [vmem:[#allocation2 + $0x16f] sm:$0xff]
      %v801 = vld [vmem:[#allocation2 + $0x187] sm:$0xff]
      %v802 = vld [vmem:[#allocation2 + $0x18f] sm:$0xff]
      %v803 = vld [vmem:[#allocation2 + $0x1a7] sm:$0xff]
      %v804 = vld [vmem:[#allocation2 + $0x1af] sm:$0xff]
      %v805 = vld [vmem:[#allocation2 + $0x1c7] sm:$0xff]
      %v806 = vld [vmem:[#allocation2 + $0x1cf] sm:$0xff]
      %v807 = vld [vmem:[#allocation2 + $0x1e7] sm:$0xff]
      %v808 = vld [vmem:[#allocation2 + $0x1ef] sm:$0xff]
      %v809 = vpack.c.bf16 %v778, %v777
      %v810 = vpack.c.bf16 %v780, %v779
      %v811 = vpack.c.bf16 %v782, %v781
      %v812 = vpack.c.bf16 %v784, %v783
      %v813 = vpack.c.bf16 %v786, %v785
      %v814 = vpack.c.bf16 %v788, %v787
      %v815 = vpack.c.bf16 %v790, %v789
      %v816 = vpack.c.bf16 %v792, %v791
      %v817 = vpack.c.bf16 %v794, %v793
      %v818 = vpack.c.bf16 %v796, %v795
      %v819 = vpack.c.bf16 %v798, %v797
      %v820 = vpack.c.bf16 %v800, %v799
      %v821 = vpack.c.bf16 %v802, %v801
      %v822 = vpack.c.bf16 %v804, %v803
      %v823 = vpack.c.bf16 %v806, %v805
      %v824 = vpack.c.bf16 %v808, %v807
      %v825 = vld [vmem:[%s3] sm:$0xf]
      %v826 = vld [vmem:[%s3 + $0x4] sm:$0xf]
      %v827 = vld [vmem:[%s3 + $0x8] sm:$0xf]
      %v828 = vld [vmem:[%s3 + $0xc] sm:$0xf]
      %v829 = vld [vmem:[%s3 + $0x10] sm:$0xf]
      %v830 = vld [vmem:[%s3 + $0x14] sm:$0xf]
      %v831 = vld [vmem:[%s3 + $0x18] sm:$0xf]
      %v832 = vld [vmem:[%s3 + $0x1c] sm:$0xf]
      %v833 = vld [vmem:[%s3 + $0x20] sm:$0xf]
      %v834 = vld [vmem:[%s3 + $0x24] sm:$0xf]
      %v835 = vld [vmem:[%s3 + $0x28] sm:$0xf]
      %v836 = vld [vmem:[%s3 + $0x2c] sm:$0xf]
      %v837 = vld [vmem:[%s3 + $0x30] sm:$0xf]
      %v838 = vld [vmem:[%s3 + $0x34] sm:$0xf]
      %v839 = vld [vmem:[%s3 + $0x38] sm:$0xf]
      %v840 = vld [vmem:[%s3 + $0x3c] sm:$0xf]
      %v841 = vld [vmem:[#allocation2 + $0x8] sm:$0xff]
      %v842 = vld [vmem:[#allocation2 + $0x10] sm:$0xff]
      %v843 = vld [vmem:[#allocation2 + $0x28] sm:$0xff]
      %v844 = vld [vmem:[#allocation2 + $0x30] sm:$0xff]
      %v845 = vld [vmem:[#allocation2 + $0x48] sm:$0xff]
      %v846 = vld [vmem:[#allocation2 + $0x50] sm:$0xff]
      %v847 = vld [vmem:[#allocation2 + $0x68] sm:$0xff]
      %v848 = vld [vmem:[#allocation2 + $0x70] sm:$0xff]
      %v849 = vld [vmem:[#allocation2 + $0x88] sm:$0xff]
      %v850 = vld [vmem:[#allocation2 + $0x90] sm:$0xff]
      %v851 = vld [vmem:[#allocation2 + $0xa8] sm:$0xff]
      %v852 = vld [vmem:[#allocation2 + $0xb0] sm:$0xff]
      %v853 = vld [vmem:[#allocation2 + $0xc8] sm:$0xff]
      %v854 = vld [vmem:[#allocation2 + $0xd0] sm:$0xff]
      %v855 = vld [vmem:[#allocation2 + $0xe8] sm:$0xff]
      %v856 = vld [vmem:[#allocation2 + $0xf0] sm:$0xff]
      %v857 = vld [vmem:[#allocation2 + $0x108] sm:$0xff]
      %v858 = vld [vmem:[#allocation2 + $0x110] sm:$0xff]
      %v859 = vld [vmem:[#allocation2 + $0x128] sm:$0xff]
      %v860 = vld [vmem:[#allocation2 + $0x130] sm:$0xff]
      %v861 = vld [vmem:[#allocation2 + $0x148] sm:$0xff]
      %v862 = vld [vmem:[#allocation2 + $0x150] sm:$0xff]
      %v863 = vld [vmem:[#allocation2 + $0x168] sm:$0xff]
      %v864 = vld [vmem:[#allocation2 + $0x170] sm:$0xff]
      %v865 = vld [vmem:[#allocation2 + $0x188] sm:$0xff]
      %v866 = vld [vmem:[#allocation2 + $0x190] sm:$0xff]
      %v867 = vld [vmem:[#allocation2 + $0x1a8] sm:$0xff]
      %v868 = vld [vmem:[#allocation2 + $0x1b0] sm:$0xff]
      %v869 = vld [vmem:[#allocation2 + $0x1c8] sm:$0xff]
      %v870 = vld [vmem:[#allocation2 + $0x1d0] sm:$0xff]
      %v871 = vld [vmem:[#allocation2 + $0x1e8] sm:$0xff]
      %v872 = vld [vmem:[#allocation2 + $0x1f0] sm:$0xff]
      %v873 = vpack.c.bf16 %v842, %v841
      %v874 = vpack.c.bf16 %v844, %v843
      %v875 = vpack.c.bf16 %v846, %v845
      %v876 = vpack.c.bf16 %v848, %v847
      %v877 = vpack.c.bf16 %v850, %v849
      %v878 = vpack.c.bf16 %v852, %v851
      %v879 = vpack.c.bf16 %v854, %v853
      %v880 = vpack.c.bf16 %v856, %v855
      %v881 = vpack.c.bf16 %v858, %v857
      %v882 = vpack.c.bf16 %v860, %v859
      %v883 = vpack.c.bf16 %v862, %v861
      %v884 = vpack.c.bf16 %v864, %v863
      %v885 = vpack.c.bf16 %v866, %v865
      %v886 = vpack.c.bf16 %v868, %v867
      %v887 = vpack.c.bf16 %v870, %v869
      %v888 = vpack.c.bf16 %v872, %v871
      %s889 = scalar_lea.vmem %s3, 64
      %v890 = vld [vmem:[%s889] sm:$0xf]
      %v891 = vld [vmem:[%s889 + $0x4] sm:$0xf]
      %v892 = vld [vmem:[%s889 + $0x8] sm:$0xf]
      %v893 = vld [vmem:[%s889 + $0xc] sm:$0xf]
      %v894 = vld [vmem:[%s889 + $0x10] sm:$0xf]
      %v895 = vld [vmem:[%s889 + $0x14] sm:$0xf]
      %v896 = vld [vmem:[%s889 + $0x18] sm:$0xf]
      %v897 = vld [vmem:[%s889 + $0x1c] sm:$0xf]
      %v898 = vld [vmem:[%s889 + $0x20] sm:$0xf]
      %v899 = vld [vmem:[%s889 + $0x24] sm:$0xf]
      %v900 = vld [vmem:[%s889 + $0x28] sm:$0xf]
      %v901 = vld [vmem:[%s889 + $0x2c] sm:$0xf]
      %v902 = vld [vmem:[%s889 + $0x30] sm:$0xf]
      %v903 = vld [vmem:[%s889 + $0x34] sm:$0xf]
      %v904 = vld [vmem:[%s889 + $0x38] sm:$0xf]
      %v905 = vld [vmem:[%s889 + $0x3c] sm:$0xf]
      %v922 = vunpack.c.l.b16 %v890
      %v923 = vunpack.c.l.b16 %v891
      %v924 = vunpack.c.l.b16 %v892
      %v925 = vunpack.c.l.b16 %v893
      %v926 = vunpack.c.l.b16 %v894
      %v927 = vunpack.c.l.b16 %v895
      %v928 = vunpack.c.l.b16 %v896
      %v929 = vunpack.c.l.b16 %v897
      %v930 = vunpack.c.l.b16 %v898
      %v931 = vunpack.c.l.b16 %v899
      %v932 = vunpack.c.l.b16 %v900
      %v933 = vunpack.c.l.b16 %v901
      %v934 = vunpack.c.l.b16 %v902
      %v935 = vunpack.c.l.b16 %v903
      %v936 = vunpack.c.l.b16 %v904
      %v937 = vunpack.c.l.b16 %v905
      %v938 = vpack.c.b16 %v923, %v922
      %v939 = vpack.c.b16 %v925, %v924
      %v940 = vpack.c.b16 %v927, %v926
      %v941 = vpack.c.b16 %v929, %v928
      %v942 = vpack.c.b16 %v931, %v930
      %v943 = vpack.c.b16 %v933, %v932
      %v944 = vpack.c.b16 %v935, %v934
      %v945 = vpack.c.b16 %v937, %v936
      %954 = vmatprep.subr.bf16.mxu0 0
      %955 = vmatpush1.bf16.msra.mxu0 %v938
      %956 = vmatprep.subr.bf16.mxu0 0
      %957 = vmatpush1.bf16.msra.mxu0 %v939
      %958 = vmatprep.subr.bf16.mxu0 0
      %959 = vmatpush1.bf16.msra.mxu0 %v940
      %960 = vmatprep.subr.bf16.mxu0 0
      %961 = vmatpush1.bf16.msra.mxu0 %v941
      %962 = vmatprep.subr.bf16.mxu0 0
      %963 = vmatpush1.bf16.msra.mxu0 %v942
      %964 = vmatprep.subr.bf16.mxu0 0
      %965 = vmatpush1.bf16.msra.mxu0 %v943
      %966 = vmatprep.subr.bf16.mxu0 0
      %967 = vmatpush1.bf16.msra.mxu0 %v944
      %968 = vmatprep.subr.bf16.mxu0 0
      %969 = vmatpush1.bf16.msra.mxu0 %v945
      %970 = vmatprep.subr.bf16.mxu0 0
      %971 = vmatpush1.bf16.msra.mxu0 0
      %972 = vmatprep.subr.bf16.mxu0 0
      %973 = vmatpush1.bf16.msra.mxu0 0
      %974 = vmatprep.subr.bf16.mxu0 0
      %975 = vmatpush1.bf16.msra.mxu0 0
      %976 = vmatprep.subr.bf16.mxu0 0
      %977 = vmatpush1.bf16.msra.mxu0 0
      %978 = vmatprep.subr.bf16.mxu0 0
      %979 = vmatpush1.bf16.msra.mxu0 0
      %980 = vmatprep.subr.bf16.mxu0 0
      %981 = vmatpush1.bf16.msra.mxu0 0
      %982 = vmatprep.subr.bf16.mxu0 0
      %983 = vmatpush1.bf16.msra.mxu0 0
      %984 = vmatprep.subr.bf16.mxu0 0
      %985 = vmatpush1.bf16.msra.mxu0 0
      %986 = vmatprep.mubr.bf16.mxu0 0
      %987 = vmatmul.mubr.bf16.gmra.mrb[0].mxu0 %v873
      %v988 = vpop.f32.mrb[0].mxu0
      %v989 = vadd.f32 0.0, %v988
      %v990 = vpop.f32.mrb[0].mxu0
      %v991 = vpop.f32.mrb[0].mxu0
      %v992 = vadd.f32 0.0, %v991
      %v993 = vpop.f32.mrb[0].mxu0
      %994 = vmatprep.mubr.bf16.mxu0 0
      %995 = vmatmul.mubr.bf16.gmra.mrb[0].mxu0 %v874
      %v996 = vpop.f32.mrb[0].mxu0
      %v997 = vadd.f32 0.0, %v996
      %v998 = vpop.f32.mrb[0].mxu0
      %v999 = vpop.f32.mrb[0].mxu0
      %v1000 = vadd.f32 0.0, %v999
      %v1001 = vpop.f32.mrb[0].mxu0
      %1002 = vmatprep.mubr.bf16.mxu0 0
      %1003 = vmatmul.mubr.bf16.gmra.mrb[0].mxu0 %v875
      %v1004 = vpop.f32.mrb[0].mxu0
      %v1005 = vadd.f32 0.0, %v1004
      %v1006 = vpop.f32.mrb[0].mxu0
      %v1007 = vpop.f32.mrb[0].mxu0
      %v1008 = vadd.f32 0.0, %v1007
      %v1009 = vpop.f32.mrb[0].mxu0
      %1010 = vmatprep.mubr.bf16.mxu0 0
      %1011 = vmatmul.mubr.bf16.gmra.mrb[0].mxu0 %v876
      %v1012 = vpop.f32.mrb[0].mxu0
      %v1013 = vadd.f32 0.0, %v1012
      %v1014 = vpop.f32.mrb[0].mxu0
      %v1015 = vpop.f32.mrb[0].mxu0
      %v1016 = vadd.f32 0.0, %v1015
      %v1017 = vpop.f32.mrb[0].mxu0
      %1018 = vmatprep.mubr.bf16.mxu0 0
      %1019 = vmatmul.mubr.bf16.gmra.mrb[0].mxu0 %v877
      %v1020 = vpop.f32.mrb[0].mxu0
      %v1021 = vadd.f32 0.0, %v1020
      %v1022 = vpop.f32.mrb[0].mxu0
      %v1023 = vpop.f32.mrb[0].mxu0
      %v1024 = vadd.f32 0.0, %v1023
      %v1025 = vpop.f32.mrb[0].mxu0
      %1026 = vmatprep.mubr.bf16.mxu0 0
      %1027 = vmatmul.mubr.bf16.gmra.mrb[0].mxu0 %v878
      %v1028 = vpop.f32.mrb[0].mxu0
      %v1029 = vadd.f32 0.0, %v1028
      %v1030 = vpop.f32.mrb[0].mxu0
      %v1031 = vpop.f32.mrb[0].mxu0
      %v1032 = vadd.f32 0.0, %v1031
      %v1033 = vpop.f32.mrb[0].mxu0
      %1034 = vmatprep.mubr.bf16.mxu0 0
      %1035 = vmatmul.mubr.bf16.gmra.mrb[0].mxu0 %v879
      %v1036 = vpop.f32.mrb[0].mxu0
      %v1037 = vadd.f32 0.0, %v1036
      %v1038 = vpop.f32.mrb[0].mxu0
      %v1039 = vpop.f32.mrb[0].mxu0
      %v1040 = vadd.f32 0.0, %v1039
      %v1041 = vpop.f32.mrb[0].mxu0
      %1042 = vmatprep.mubr.bf16.mxu0 0
      %1043 = vmatmul.mubr.bf16.gmra.mrb[0].mxu0 %v880
      %v1044 = vpop.f32.mrb[0].mxu0
      %v1045 = vadd.f32 0.0, %v1044
      %v1046 = vpop.f32.mrb[0].mxu0
      %v1047 = vpop.f32.mrb[0].mxu0
      %v1048 = vadd.f32 0.0, %v1047
      %v1049 = vpop.f32.mrb[0].mxu0
      %1050 = vmatprep.mubr.bf16.mxu0 0
      %1051 = vmatmul.mubr.bf16.gmra.mrb[0].mxu0 %v881
      %v1052 = vpop.f32.mrb[0].mxu0
      %v1053 = vadd.f32 0.0, %v1052
      %v1054 = vpop.f32.mrb[0].mxu0
      %v1055 = vpop.f32.mrb[0].mxu0
      %v1056 = vadd.f32 0.0, %v1055
      %v1057 = vpop.f32.mrb[0].mxu0
      %1058 = vmatprep.mubr.bf16.mxu0 0
      %1059 = vmatmul.mubr.bf16.gmra.mrb[0].mxu0 %v882
      %v1060 = vpop.f32.mrb[0].mxu0
      %v1061 = vadd.f32 0.0, %v1060
      %v1062 = vpop.f32.mrb[0].mxu0
      %v1063 = vpop.f32.mrb[0].mxu0
      %v1064 = vadd.f32 0.0, %v1063
      %v1065 = vpop.f32.mrb[0].mxu0
      %1066 = vmatprep.mubr.bf16.mxu0 0
      %1067 = vmatmul.mubr.bf16.gmra.mrb[0].mxu0 %v883
      %v1068 = vpop.f32.mrb[0].mxu0
      %v1069 = vadd.f32 0.0, %v1068
      %v1070 = vpop.f32.mrb[0].mxu0
      %v1071 = vpop.f32.mrb[0].mxu0
      %v1072 = vadd.f32 0.0, %v1071
      %v1073 = vpop.f32.mrb[0].mxu0
      %1074 = vmatprep.mubr.bf16.mxu0 0
      %1075 = vmatmul.mubr.bf16.gmra.mrb[0].mxu0 %v884
      %v1076 = vpop.f32.mrb[0].mxu0
      %v1077 = vadd.f32 0.0, %v1076
      %v1078 = vpop.f32.mrb[0].mxu0
      %v1079 = vpop.f32.mrb[0].mxu0
      %v1080 = vadd.f32 0.0, %v1079
      %v1081 = vpop.f32.mrb[0].mxu0
      %1082 = vmatprep.mubr.bf16.mxu0 0
      %1083 = vmatmul.mubr.bf16.gmra.mrb[0].mxu0 %v885
      %v1084 = vpop.f32.mrb[0].mxu0
      %v1085 = vadd.f32 0.0, %v1084
      %v1086 = vpop.f32.mrb[0].mxu0
      %v1087 = vpop.f32.mrb[0].mxu0
      %v1088 = vadd.f32 0.0, %v1087
      %v1089 = vpop.f32.mrb[0].mxu0
      %1090 = vmatprep.mubr.bf16.mxu0 0
      %1091 = vmatmul.mubr.bf16.gmra.mrb[0].mxu0 %v886
      %v1092 = vpop.f32.mrb[0].mxu0
      %v1093 = vadd.f32 0.0, %v1092
      %v1094 = vpop.f32.mrb[0].mxu0
      %v1095 = vpop.f32.mrb[0].mxu0
      %v1096 = vadd.f32 0.0, %v1095
      %v1097 = vpop.f32.mrb[0].mxu0
      %1098 = vmatprep.mubr.bf16.mxu0 0
      %1099 = vmatmul.mubr.bf16.gmra.mrb[0].mxu0 %v887
      %v1100 = vpop.f32.mrb[0].mxu0
      %v1101 = vadd.f32 0.0, %v1100
      %v1102 = vpop.f32.mrb[0].mxu0
      %v1103 = vpop.f32.mrb[0].mxu0
      %v1104 = vadd.f32 0.0, %v1103
      %v1105 = vpop.f32.mrb[0].mxu0
      %1106 = vmatprep.mubr.bf16.mxu0 0
      %1107 = vmatmul.mubr.bf16.gmra.mrb[0].mxu0 %v888
      %v1108 = vpop.f32.mrb[0].mxu0
      %v1109 = vadd.f32 0.0, %v1108
      %v1110 = vpop.f32.mrb[0].mxu0
      %v1111 = vpop.f32.mrb[0].mxu0
      %v1112 = vadd.f32 0.0, %v1111
      %v1113 = vpop.f32.mrb[0].mxu0
      %1114 = vdwg.mxu0
      %v1131 = vunpack.c.l.b16 %v825
      %v1132 = vunpack.c.l.b16 %v826
      %v1133 = vunpack.c.l.b16 %v827
      %v1134 = vunpack.c.l.b16 %v828
      %v1135 = vunpack.c.l.b16 %v829
      %v1136 = vunpack.c.l.b16 %v830
      %v1137 = vunpack.c.l.b16 %v831
      %v1138 = vunpack.c.l.b16 %v832
      %v1139 = vunpack.c.l.b16 %v833
      %v1140 = vunpack.c.l.b16 %v834
      %v1141 = vunpack.c.l.b16 %v835
      %v1142 = vunpack.c.l.b16 %v836
      %v1143 = vunpack.c.l.b16 %v837
      %v1144 = vunpack.c.l.b16 %v838
      %v1145 = vunpack.c.l.b16 %v839
      %v1146 = vunpack.c.l.b16 %v840
      %v1147 = vpack.c.b16 %v1132, %v1131
      %v1148 = vpack.c.b16 %v1134, %v1133
      %v1149 = vpack.c.b16 %v1136, %v1135
      %v1150 = vpack.c.b16 %v1138, %v1137
      %v1151 = vpack.c.b16 %v1140, %v1139
      %v1152 = vpack.c.b16 %v1142, %v1141
      %v1153 = vpack.c.b16 %v1144, %v1143
      %v1154 = vpack.c.b16 %v1146, %v1145
      %1163 = vmatprep.subr.bf16.mxu0 0
      %1164 = vmatpush1.bf16.msra.mxu0 %v1147
      %1165 = vmatprep.subr.bf16.mxu0 0
      %1166 = vmatpush1.bf16.msra.mxu0 %v1148
      %1167 = vmatprep.subr.bf16.mxu0 0
      %1168 = vmatpush1.bf16.msra.mxu0 %v1149
      %1169 = vmatprep.subr.bf16.mxu0 0
      %1170 = vmatpush1.bf16.msra.mxu0 %v1150
      %1171 = vmatprep.subr.bf16.mxu0 0
      %1172 = vmatpush1.bf16.msra.mxu0 %v1151
      %1173 = vmatprep.subr.bf16.mxu0 0
      %1174 = vmatpush1.bf16.msra.mxu0 %v1152
      %1175 = vmatprep.subr.bf16.mxu0 0
      %1176 = vmatpush1.bf16.msra.mxu0 %v1153
      %1177 = vmatprep.subr.bf16.mxu0 0
      %1178 = vmatpush1.bf16.msra.mxu0 %v1154
      %1179 = vmatprep.subr.bf16.mxu0 0
      %1180 = vmatpush1.bf16.msra.mxu0 0
      %1181 = vmatprep.subr.bf16.mxu0 0
      %1182 = vmatpush1.bf16.msra.mxu0 0
      %1183 = vmatprep.subr.bf16.mxu0 0
      %1184 = vmatpush1.bf16.msra.mxu0 0
      %1185 = vmatprep.subr.bf16.mxu0 0
      %1186 = vmatpush1.bf16.msra.mxu0 0
      %1187 = vmatprep.subr.bf16.mxu0 0
      %1188 = vmatpush1.bf16.msra.mxu0 0
      %1189 = vmatprep.subr.bf16.mxu0 0
      %1190 = vmatpush1.bf16.msra.mxu0 0
      %1191 = vmatprep.subr.bf16.mxu0 0
      %1192 = vmatpush1.bf16.msra.mxu0 0
      %1193 = vmatprep.subr.bf16.mxu0 0
      %1194 = vmatpush1.bf16.msra.mxu0 0
      %1195 = vmatprep.mubr.bf16.mxu0 0
      %1196 = vmatmul.mubr.bf16.gmra.mrb[0].mxu0 %v809
      %v1197 = vpop.f32.mrb[0].mxu0
      %v1198 = vadd.f32 %v989, %v1197
      %v1199 = vpop.f32.mrb[0].mxu0
      %v1200 = vpop.f32.mrb[0].mxu0
      %v1201 = vadd.f32 %v992, %v1200
      %v1202 = vpop.f32.mrb[0].mxu0
      %1203 = vmatprep.mubr.bf16.mxu0 0
      %1204 = vmatmul.mubr.bf16.gmra.mrb[0].mxu0 %v810
      %v1205 = vpop.f32.mrb[0].mxu0
      %v1206 = vadd.f32 %v997, %v1205
      %v1207 = vpop.f32.mrb[0].mxu0
      %v1208 = vpop.f32.mrb[0].mxu0
      %v1209 = vadd.f32 %v1000, %v1208
      %v1210 = vpop.f32.mrb[0].mxu0
      %1211 = vmatprep.mubr.bf16.mxu0 0
      %1212 = vmatmul.mubr.bf16.gmra.mrb[0].mxu0 %v811
      %v1213 = vpop.f32.mrb[0].mxu0
      %v1214 = vadd.f32 %v1005, %v1213
      %v1215 = vpop.f32.mrb[0].mxu0
      %v1216 = vpop.f32.mrb[0].mxu0
      %v1217 = vadd.f32 %v1008, %v1216
      %v1218 = vpop.f32.mrb[0].mxu0
      %1219 = vmatprep.mubr.bf16.mxu0 0
      %1220 = vmatmul.mubr.bf16.gmra.mrb[0].mxu0 %v812
      %v1221 = vpop.f32.mrb[0].mxu0
      %v1222 = vadd.f32 %v1013, %v1221
      %v1223 = vpop.f32.mrb[0].mxu0
      %v1224 = vpop.f32.mrb[0].mxu0
      %v1225 = vadd.f32 %v1016, %v1224
      %v1226 = vpop.f32.mrb[0].mxu0
      %1227 = vmatprep.mubr.bf16.mxu0 0
      %1228 = vmatmul.mubr.bf16.gmra.mrb[0].mxu0 %v813
      %v1229 = vpop.f32.mrb[0].mxu0
      %v1230 = vadd.f32 %v1021, %v1229
      %v1231 = vpop.f32.mrb[0].mxu0
      %v1232 = vpop.f32.mrb[0].mxu0
      %v1233 = vadd.f32 %v1024, %v1232
      %v1234 = vpop.f32.mrb[0].mxu0
      %1235 = vmatprep.mubr.bf16.mxu0 0
      %1236 = vmatmul.mubr.bf16.gmra.mrb[0].mxu0 %v814
      %v1237 = vpop.f32.mrb[0].mxu0
      %v1238 = vadd.f32 %v1029, %v1237
      %v1239 = vpop.f32.mrb[0].mxu0
      %v1240 = vpop.f32.mrb[0].mxu0
      %v1241 = vadd.f32 %v1032, %v1240
      %v1242 = vpop.f32.mrb[0].mxu0
      %1243 = vmatprep.mubr.bf16.mxu0 0
      %1244 = vmatmul.mubr.bf16.gmra.mrb[0].mxu0 %v815
      %v1245 = vpop.f32.mrb[0].mxu0
      %v1246 = vadd.f32 %v1037, %v1245
      %v1247 = vpop.f32.mrb[0].mxu0
      %v1248 = vpop.f32.mrb[0].mxu0
      %v1249 = vadd.f32 %v1040, %v1248
      %v1250 = vpop.f32.mrb[0].mxu0
      %1251 = vmatprep.mubr.bf16.mxu0 0
      %1252 = vmatmul.mubr.bf16.gmra.mrb[0].mxu0 %v816
      %v1253 = vpop.f32.mrb[0].mxu0
      %v1254 = vadd.f32 %v1045, %v1253
      %v1255 = vpop.f32.mrb[0].mxu0
      %v1256 = vpop.f32.mrb[0].mxu0
      %v1257 = vadd.f32 %v1048, %v1256
      %v1258 = vpop.f32.mrb[0].mxu0
      %1259 = vmatprep.mubr.bf16.mxu0 0
      %1260 = vmatmul.mubr.bf16.gmra.mrb[0].mxu0 %v817
      %v1261 = vpop.f32.mrb[0].mxu0
      %v1262 = vadd.f32 %v1053, %v1261
      %v1263 = vpop.f32.mrb[0].mxu0
      %v1264 = vpop.f32.mrb[0].mxu0
      %v1265 = vadd.f32 %v1056, %v1264
      %v1266 = vpop.f32.mrb[0].mxu0
      %1267 = vmatprep.mubr.bf16.mxu0 0
      %1268 = vmatmul.mubr.bf16.gmra.mrb[0].mxu0 %v818
      %v1269 = vpop.f32.mrb[0].mxu0
      %v1270 = vadd.f32 %v1061, %v1269
      %v1271 = vpop.f32.mrb[0].mxu0
      %v1272 = vpop.f32.mrb[0].mxu0
      %v1273 = vadd.f32 %v1064, %v1272
      %v1274 = vpop.f32.mrb[0].mxu0
      %1275 = vmatprep.mubr.bf16.mxu0 0
      %1276 = vmatmul.mubr.bf16.gmra.mrb[0].mxu0 %v819
      %v1277 = vpop.f32.mrb[0].mxu0
      %v1278 = vadd.f32 %v1069, %v1277
      %v1279 = vpop.f32.mrb[0].mxu0
      %v1280 = vpop.f32.mrb[0].mxu0
      %v1281 = vadd.f32 %v1072, %v1280
      %v1282 = vpop.f32.mrb[0].mxu0
      %1283 = vmatprep.mubr.bf16.mxu0 0
      %1284 = vmatmul.mubr.bf16.gmra.mrb[0].mxu0 %v820
      %v1285 = vpop.f32.mrb[0].mxu0
      %v1286 = vadd.f32 %v1077, %v1285
      %v1287 = vpop.f32.mrb[0].mxu0
      %v1288 = vpop.f32.mrb[0].mxu0
      %v1289 = vadd.f32 %v1080, %v1288
      %v1290 = vpop.f32.mrb[0].mxu0
      %1291 = vmatprep.mubr.bf16.mxu0 0
      %1292 = vmatmul.mubr.bf16.gmra.mrb[0].mxu0 %v821
      %v1293 = vpop.f32.mrb[0].mxu0
      %v1294 = vadd.f32 %v1085, %v1293
      %v1295 = vpop.f32.mrb[0].mxu0
      %v1296 = vpop.f32.mrb[0].mxu0
      %v1297 = vadd.f32 %v1088, %v1296
      %v1298 = vpop.f32.mrb[0].mxu0
      %1299 = vmatprep.mubr.bf16.mxu0 0
      %1300 = vmatmul.mubr.bf16.gmra.mrb[0].mxu0 %v822
      %v1301 = vpop.f32.mrb[0].mxu0
      %v1302 = vadd.f32 %v1093, %v1301
      %v1303 = vpop.f32.mrb[0].mxu0
      %v1304 = vpop.f32.mrb[0].mxu0
      %v1305 = vadd.f32 %v1096, %v1304
      %v1306 = vpop.f32.mrb[0].mxu0
      %1307 = vmatprep.mubr.bf16.mxu0 0
      %1308 = vmatmul.mubr.bf16.gmra.mrb[0].mxu0 %v823
      %v1309 = vpop.f32.mrb[0].mxu0
      %v1310 = vadd.f32 %v1101, %v1309
      %v1311 = vpop.f32.mrb[0].mxu0
      %v1312 = vpop.f32.mrb[0].mxu0
      %v1313 = vadd.f32 %v1104, %v1312
      %v1314 = vpop.f32.mrb[0].mxu0
      %1315 = vmatprep.mubr.bf16.mxu0 0
      %1316 = vmatmul.mubr.bf16.gmra.mrb[0].mxu0 %v824
      %v1317 = vpop.f32.mrb[0].mxu0
      %v1318 = vadd.f32 %v1109, %v1317
      %v1319 = vpop.f32.mrb[0].mxu0
      %v1320 = vpop.f32.mrb[0].mxu0
      %v1321 = vadd.f32 %v1112, %v1320
      %v1322 = vpop.f32.mrb[0].mxu0
      %1323 = vdwg.mxu0
      %v1324 = vld [vmem:[#allocation2 + $0x9] sm:$0xff]
      %v1325 = vld [vmem:[#allocation2 + $0x11] sm:$0xff]
      %v1326 = vld [vmem:[#allocation2 + $0x29] sm:$0xff]
      %v1327 = vld [vmem:[#allocation2 + $0x31] sm:$0xff]
      %v1328 = vld [vmem:[#allocation2 + $0x49] sm:$0xff]
      %v1329 = vld [vmem:[#allocation2 + $0x51] sm:$0xff]
      %v1330 = vld [vmem:[#allocation2 + $0x69] sm:$0xff]
      %v1331 = vld [vmem:[#allocation2 + $0x71] sm:$0xff]
      %v1332 = vld [vmem:[#allocation2 + $0x89] sm:$0xff]
      %v1333 = vld [vmem:[#allocation2 + $0x91] sm:$0xff]
      %v1334 = vld [vmem:[#allocation2 + $0xa9] sm:$0xff]
      %v1335 = vld [vmem:[#allocation2 + $0xb1] sm:$0xff]
      %v1336 = vld [vmem:[#allocation2 + $0xc9] sm:$0xff]
      %v1337 = vld [vmem:[#allocation2 + $0xd1] sm:$0xff]
      %v1338 = vld [vmem:[#allocation2 + $0xe9] sm:$0xff]
      %v1339 = vld [vmem:[#allocation2 + $0xf1] sm:$0xff]
      %v1340 = vld [vmem:[#allocation2 + $0x109] sm:$0xff]
      %v1341 = vld [vmem:[#allocation2 + $0x111] sm:$0xff]
      %v1342 = vld [vmem:[#allocation2 + $0x129] sm:$0xff]
      %v1343 = vld [vmem:[#allocation2 + $0x131] sm:$0xff]
      %v1344 = vld [vmem:[#allocation2 + $0x149] sm:$0xff]
      %v1345 = vld [vmem:[#allocation2 + $0x151] sm:$0xff]
      %v1346 = vld [vmem:[#allocation2 + $0x169] sm:$0xff]
      %v1347 = vld [vmem:[#allocation2 + $0x171] sm:$0xff]
      %v1348 = vld [vmem:[#allocation2 + $0x189] sm:$0xff]
      %v1349 = vld [vmem:[#allocation2 + $0x191] sm:$0xff]
      %v1350 = vld [vmem:[#allocation2 + $0x1a9] sm:$0xff]
      %v1351 = vld [vmem:[#allocation2 + $0x1b1] sm:$0xff]
      %v1352 = vld [vmem:[#allocation2 + $0x1c9] sm:$0xff]
      %v1353 = vld [vmem:[#allocation2 + $0x1d1] sm:$0xff]
      %v1354 = vld [vmem:[#allocation2 + $0x1e9] sm:$0xff]
      %v1355 = vld [vmem:[#allocation2 + $0x1f1] sm:$0xff]
      %v1356 = vpack.c.bf16 %v1325, %v1324
      %v1357 = vpack.c.bf16 %v1327, %v1326
      %v1358 = vpack.c.bf16 %v1329, %v1328
      %v1359 = vpack.c.bf16 %v1331, %v1330
      %v1360 = vpack.c.bf16 %v1333, %v1332
      %v1361 = vpack.c.bf16 %v1335, %v1334
      %v1362 = vpack.c.bf16 %v1337, %v1336
      %v1363 = vpack.c.bf16 %v1339, %v1338
      %v1364 = vpack.c.bf16 %v1341, %v1340
      %v1365 = vpack.c.bf16 %v1343, %v1342
      %v1366 = vpack.c.bf16 %v1345, %v1344
      %v1367 = vpack.c.bf16 %v1347, %v1346
      %v1368 = vpack.c.bf16 %v1349, %v1348
      %v1369 = vpack.c.bf16 %v1351, %v1350
      %v1370 = vpack.c.bf16 %v1353, %v1352
      %v1371 = vpack.c.bf16 %v1355, %v1354
      %s1372 = scalar_lea.vmem %s3, 128
      %v1373 = vld [vmem:[%s1372] sm:$0xf]
      %v1374 = vld [vmem:[%s1372 + $0x4] sm:$0xf]
      %v1375 = vld [vmem:[%s1372 + $0x8] sm:$0xf]
      %v1376 = vld [vmem:[%s1372 + $0xc] sm:$0xf]
      %v1377 = vld [vmem:[%s1372 + $0x10] sm:$0xf]
      %v1378 = vld [vmem:[%s1372 + $0x14] sm:$0xf]
      %v1379 = vld [vmem:[%s1372 + $0x18] sm:$0xf]
      %v1380 = vld [vmem:[%s1372 + $0x1c] sm:$0xf]
      %v1381 = vld [vmem:[%s1372 + $0x20] sm:$0xf]
      %v1382 = vld [vmem:[%s1372 + $0x24] sm:$0xf]
      %v1383 = vld [vmem:[%s1372 + $0x28] sm:$0xf]
      %v1384 = vld [vmem:[%s1372 + $0x2c] sm:$0xf]
      %v1385 = vld [vmem:[%s1372 + $0x30] sm:$0xf]
      %v1386 = vld [vmem:[%s1372 + $0x34] sm:$0xf]
      %v1387 = vld [vmem:[%s1372 + $0x38] sm:$0xf]
      %v1388 = vld [vmem:[%s1372 + $0x3c] sm:$0xf]
      %v1405 = vunpack.c.l.b16 %v1373
      %v1406 = vunpack.c.l.b16 %v1374
      %v1407 = vunpack.c.l.b16 %v1375
      %v1408 = vunpack.c.l.b16 %v1376
      %v1409 = vunpack.c.l.b16 %v1377
      %v1410 = vunpack.c.l.b16 %v1378
      %v1411 = vunpack.c.l.b16 %v1379
      %v1412 = vunpack.c.l.b16 %v1380
      %v1413 = vunpack.c.l.b16 %v1381
      %v1414 = vunpack.c.l.b16 %v1382
      %v1415 = vunpack.c.l.b16 %v1383
      %v1416 = vunpack.c.l.b16 %v1384
      %v1417 = vunpack.c.l.b16 %v1385
      %v1418 = vunpack.c.l.b16 %v1386
      %v1419 = vunpack.c.l.b16 %v1387
      %v1420 = vunpack.c.l.b16 %v1388
      %v1421 = vpack.c.b16 %v1406, %v1405
      %v1422 = vpack.c.b16 %v1408, %v1407
      %v1423 = vpack.c.b16 %v1410, %v1409
      %v1424 = vpack.c.b16 %v1412, %v1411
      %v1425 = vpack.c.b16 %v1414, %v1413
      %v1426 = vpack.c.b16 %v1416, %v1415
      %v1427 = vpack.c.b16 %v1418, %v1417
      %v1428 = vpack.c.b16 %v1420, %v1419
      %1437 = vmatprep.subr.bf16.mxu0 0
      %1438 = vmatpush1.bf16.msra.mxu0 %v1421
      %1439 = vmatprep.subr.bf16.mxu0 0
      %1440 = vmatpush1.bf16.msra.mxu0 %v1422
      %1441 = vmatprep.subr.bf16.mxu0 0
      %1442 = vmatpush1.bf16.msra.mxu0 %v1423
      %1443 = vmatprep.subr.bf16.mxu0 0
      %1444 = vmatpush1.bf16.msra.mxu0 %v1424
      %1445 = vmatprep.subr.bf16.mxu0 0
      %1446 = vmatpush1.bf16.msra.mxu0 %v1425
      %1447 = vmatprep.subr.bf16.mxu0 0
      %1448 = vmatpush1.bf16.msra.mxu0 %v1426
      %1449 = vmatprep.subr.bf16.mxu0 0
      %1450 = vmatpush1.bf16.msra.mxu0 %v1427
      %1451 = vmatprep.subr.bf16.mxu0 0
      %1452 = vmatpush1.bf16.msra.mxu0 %v1428
      %1453 = vmatprep.subr.bf16.mxu0 0
      %1454 = vmatpush1.bf16.msra.mxu0 0
      %1455 = vmatprep.subr.bf16.mxu0 0
      %1456 = vmatpush1.bf16.msra.mxu0 0
      %1457 = vmatprep.subr.bf16.mxu0 0
      %1458 = vmatpush1.bf16.msra.mxu0 0
      %1459 = vmatprep.subr.bf16.mxu0 0
      %1460 = vmatpush1.bf16.msra.mxu0 0
      %1461 = vmatprep.subr.bf16.mxu0 0
      %1462 = vmatpush1.bf16.msra.mxu0 0
      %1463 = vmatprep.subr.bf16.mxu0 0
      %1464 = vmatpush1.bf16.msra.mxu0 0
      %1465 = vmatprep.subr.bf16.mxu0 0
      %1466 = vmatpush1.bf16.msra.mxu0 0
      %1467 = vmatprep.subr.bf16.mxu0 0
      %1468 = vmatpush1.bf16.msra.mxu0 0
      %1469 = vmatprep.mubr.bf16.mxu0 0
      %1470 = vmatmul.mubr.bf16.gmra.mrb[0].mxu0 %v1356
      %v1471 = vpop.f32.mrb[0].mxu0
      %v1472 = vadd.f32 0.0, %v1471
      %v1473 = vpop.f32.mrb[0].mxu0
      %v1474 = vpop.f32.mrb[0].mxu0
      %v1475 = vadd.f32 0.0, %v1474
      %v1476 = vpop.f32.mrb[0].mxu0
      %1477 = vmatprep.mubr.bf16.mxu0 0
      %1478 = vmatmul.mubr.bf16.gmra.mrb[0].mxu0 %v1357
      %v1479 = vpop.f32.mrb[0].mxu0
      %v1480 = vadd.f32 0.0, %v1479
      %v1481 = vpop.f32.mrb[0].mxu0
      %v1482 = vpop.f32.mrb[0].mxu0
      %v1483 = vadd.f32 0.0, %v1482
      %v1484 = vpop.f32.mrb[0].mxu0
      %1485 = vmatprep.mubr.bf16.mxu0 0
      %1486 = vmatmul.mubr.bf16.gmra.mrb[0].mxu0 %v1358
      %v1487 = vpop.f32.mrb[0].mxu0
      %v1488 = vadd.f32 0.0, %v1487
      %v1489 = vpop.f32.mrb[0].mxu0
      %v1490 = vpop.f32.mrb[0].mxu0
      %v1491 = vadd.f32 0.0, %v1490
      %v1492 = vpop.f32.mrb[0].mxu0
      %1493 = vmatprep.mubr.bf16.mxu0 0
      %1494 = vmatmul.mubr.bf16.gmra.mrb[0].mxu0 %v1359
      %v1495 = vpop.f32.mrb[0].mxu0
      %v1496 = vadd.f32 0.0, %v1495
      %v1497 = vpop.f32.mrb[0].mxu0
      %v1498 = vpop.f32.mrb[0].mxu0
      %v1499 = vadd.f32 0.0, %v1498
      %v1500 = vpop.f32.mrb[0].mxu0
      %1501 = vmatprep.mubr.bf16.mxu0 0
      %1502 = vmatmul.mubr.bf16.gmra.mrb[0].mxu0 %v1360
      %v1503 = vpop.f32.mrb[0].mxu0
      %v1504 = vadd.f32 0.0, %v1503
      %v1505 = vpop.f32.mrb[0].mxu0
      %v1506 = vpop.f32.mrb[0].mxu0
      %v1507 = vadd.f32 0.0, %v1506
      %v1508 = vpop.f32.mrb[0].mxu0
      %1509 = vmatprep.mubr.bf16.mxu0 0
      %1510 = vmatmul.mubr.bf16.gmra.mrb[0].mxu0 %v1361
      %v1511 = vpop.f32.mrb[0].mxu0
      %v1512 = vadd.f32 0.0, %v1511
      %v1513 = vpop.f32.mrb[0].mxu0
      %v1514 = vpop.f32.mrb[0].mxu0
      %v1515 = vadd.f32 0.0, %v1514
      %v1516 = vpop.f32.mrb[0].mxu0
      %1517 = vmatprep.mubr.bf16.mxu0 0
      %1518 = vmatmul.mubr.bf16.gmra.mrb[0].mxu0 %v1362
      %v1519 = vpop.f32.mrb[0].mxu0
      %v1520 = vadd.f32 0.0, %v1519
      %v1521 = vpop.f32.mrb[0].mxu0
      %v1522 = vpop.f32.mrb[0].mxu0
      %v1523 = vadd.f32 0.0, %v1522
      %v1524 = vpop.f32.mrb[0].mxu0
      %1525 = vmatprep.mubr.bf16.mxu0 0
      %1526 = vmatmul.mubr.bf16.gmra.mrb[0].mxu0 %v1363
      %v1527 = vpop.f32.mrb[0].mxu0
      %v1528 = vadd.f32 0.0, %v1527
      %v1529 = vpop.f32.mrb[0].mxu0
      %v1530 = vpop.f32.mrb[0].mxu0
      %v1531 = vadd.f32 0.0, %v1530
      %v1532 = vpop.f32.mrb[0].mxu0
      %1533 = vmatprep.mubr.bf16.mxu0 0
      %1534 = vmatmul.mubr.bf16.gmra.mrb[0].mxu0 %v1364
      %v1535 = vpop.f32.mrb[0].mxu0
      %v1536 = vadd.f32 0.0, %v1535
      %v1537 = vpop.f32.mrb[0].mxu0
      %v1538 = vpop.f32.mrb[0].mxu0
      %v1539 = vadd.f32 0.0, %v1538
      %v1540 = vpop.f32.mrb[0].mxu0
      %1541 = vmatprep.mubr.bf16.mxu0 0
      %1542 = vmatmul.mubr.bf16.gmra.mrb[0].mxu0 %v1365
      %v1543 = vpop.f32.mrb[0].mxu0
      %v1544 = vadd.f32 0.0, %v1543
      %v1545 = vpop.f32.mrb[0].mxu0
      %v1546 = vpop.f32.mrb[0].mxu0
      %v1547 = vadd.f32 0.0, %v1546
      %v1548 = vpop.f32.mrb[0].mxu0
      %1549 = vmatprep.mubr.bf16.mxu0 0
      %1550 = vmatmul.mubr.bf16.gmra.mrb[0].mxu0 %v1366
      %v1551 = vpop.f32.mrb[0].mxu0
      %v1552 = vadd.f32 0.0, %v1551
      %v1553 = vpop.f32.mrb[0].mxu0
      %v1554 = vpop.f32.mrb[0].mxu0
      %v1555 = vadd.f32 0.0, %v1554
      %v1556 = vpop.f32.mrb[0].mxu0
      %1557 = vmatprep.mubr.bf16.mxu0 0
      %1558 = vmatmul.mubr.bf16.gmra.mrb[0].mxu0 %v1367
      %v1559 = vpop.f32.mrb[0].mxu0
      %v1560 = vadd.f32 0.0, %v1559
      %v1561 = vpop.f32.mrb[0].mxu0
      %v1562 = vpop.f32.mrb[0].mxu0
      %v1563 = vadd.f32 0.0, %v1562
      %v1564 = vpop.f32.mrb[0].mxu0
      %1565 = vmatprep.mubr.bf16.mxu0 0
      %1566 = vmatmul.mubr.bf16.gmra.mrb[0].mxu0 %v1368
      %v1567 = vpop.f32.mrb[0].mxu0
      %v1568 = vadd.f32 0.0, %v1567
      %v1569 = vpop.f32.mrb[0].mxu0
      %v1570 = vpop.f32.mrb[0].mxu0
      %v1571 = vadd.f32 0.0, %v1570
      %v1572 = vpop.f32.mrb[0].mxu0
      %1573 = vmatprep.mubr.bf16.mxu0 0
      %1574 = vmatmul.mubr.bf16.gmra.mrb[0].mxu0 %v1369
      %v1575 = vpop.f32.mrb[0].mxu0
      %v1576 = vadd.f32 0.0, %v1575
      %v1577 = vpop.f32.mrb[0].mxu0
      %v1578 = vpop.f32.mrb[0].mxu0
      %v1579 = vadd.f32 0.0, %v1578
      %v1580 = vpop.f32.mrb[0].mxu0
      %1581 = vmatprep.mubr.bf16.mxu0 0
      %1582 = vmatmul.mubr.bf16.gmra.mrb[0].mxu0 %v1370
      %v1583 = vpop.f32.mrb[0].mxu0
      %v1584 = vadd.f32 0.0, %v1583
      %v1585 = vpop.f32.mrb[0].mxu0
      %v1586 = vpop.f32.mrb[0].mxu0
      %v1587 = vadd.f32 0.0, %v1586
      %v1588 = vpop.f32.mrb[0].mxu0
      %1589 = vmatprep.mubr.bf16.mxu0 0
      %1590 = vmatmul.mubr.bf16.gmra.mrb[0].mxu0 %v1371
      %v1591 = vpop.f32.mrb[0].mxu0
      %v1592 = vadd.f32 0.0, %v1591
      %v1593 = vpop.f32.mrb[0].mxu0
      %v1594 = vpop.f32.mrb[0].mxu0
      %v1595 = vadd.f32 0.0, %v1594
      %v1596 = vpop.f32.mrb[0].mxu0
      %1597 = vdwg.mxu0
      %v1598 = vadd.f32 %v1198, %v1472
      %v1599 = vadd.f32 %v1201, %v1475
      %v1600 = vadd.f32 %v1206, %v1480
      %v1601 = vadd.f32 %v1209, %v1483
      %v1602 = vadd.f32 %v1214, %v1488
      %v1603 = vadd.f32 %v1217, %v1491
      %v1604 = vadd.f32 %v1222, %v1496
      %v1605 = vadd.f32 %v1225, %v1499
      %v1606 = vadd.f32 %v1230, %v1504
      %v1607 = vadd.f32 %v1233, %v1507
      %v1608 = vadd.f32 %v1238, %v1512
      %v1609 = vadd.f32 %v1241, %v1515
      %v1610 = vadd.f32 %v1246, %v1520
      %v1611 = vadd.f32 %v1249, %v1523
      %v1612 = vadd.f32 %v1254, %v1528
      %v1613 = vadd.f32 %v1257, %v1531
      %v1614 = vadd.f32 %v1262, %v1536
      %v1615 = vadd.f32 %v1265, %v1539
      %v1616 = vadd.f32 %v1270, %v1544
      %v1617 = vadd.f32 %v1273, %v1547
      %v1618 = vadd.f32 %v1278, %v1552
      %v1619 = vadd.f32 %v1281, %v1555
      %v1620 = vadd.f32 %v1286, %v1560
      %v1621 = vadd.f32 %v1289, %v1563
      %v1622 = vadd.f32 %v1294, %v1568
      %v1623 = vadd.f32 %v1297, %v1571
      %v1624 = vadd.f32 %v1302, %v1576
      %v1625 = vadd.f32 %v1305, %v1579
      %v1626 = vadd.f32 %v1310, %v1584
      %v1627 = vadd.f32 %v1313, %v1587
      %v1628 = vadd.f32 %v1318, %v1592
      %v1629 = vadd.f32 %v1321, %v1595
      %v1630 = vld [vmem:[%s744 + $0x7] sm:$0xff]
      %v1631 = vld [vmem:[%s744 + $0xf] sm:$0xff]
      %v1632 = vld [vmem:[%s744 + $0x27] sm:$0xff]
      %v1633 = vld [vmem:[%s744 + $0x2f] sm:$0xff]
      %v1634 = vld [vmem:[%s744 + $0x47] sm:$0xff]
      %v1635 = vld [vmem:[%s744 + $0x4f] sm:$0xff]
      %v1636 = vld [vmem:[%s744 + $0x67] sm:$0xff]
      %v1637 = vld [vmem:[%s744 + $0x6f] sm:$0xff]
      %v1638 = vld [vmem:[%s744 + $0x87] sm:$0xff]
      %v1639 = vld [vmem:[%s744 + $0x8f] sm:$0xff]
      %v1640 = vld [vmem:[%s744 + $0xa7] sm:$0xff]
      %v1641 = vld [vmem:[%s744 + $0xaf] sm:$0xff]
      %v1642 = vld [vmem:[%s744 + $0xc7] sm:$0xff]
      %v1643 = vld [vmem:[%s744 + $0xcf] sm:$0xff]
      %v1644 = vld [vmem:[%s744 + $0xe7] sm:$0xff]
      %v1645 = vld [vmem:[%s744 + $0xef] sm:$0xff]
      %v1646 = vld [vmem:[%s744 + $0x107] sm:$0xff]
      %v1647 = vld [vmem:[%s744 + $0x10f] sm:$0xff]
      %v1648 = vld [vmem:[%s744 + $0x127] sm:$0xff]
      %v1649 = vld [vmem:[%s744 + $0x12f] sm:$0xff]
      %v1650 = vld [vmem:[%s744 + $0x147] sm:$0xff]
      %v1651 = vld [vmem:[%s744 + $0x14f] sm:$0xff]
      %v1652 = vld [vmem:[%s744 + $0x167] sm:$0xff]
      %v1653 = vld [vmem:[%s744 + $0x16f] sm:$0xff]
      %v1654 = vld [vmem:[%s744 + $0x187] sm:$0xff]
      %v1655 = vld [vmem:[%s744 + $0x18f] sm:$0xff]
      %v1656 = vld [vmem:[%s744 + $0x1a7] sm:$0xff]
      %v1657 = vld [vmem:[%s744 + $0x1af] sm:$0xff]
      %v1658 = vld [vmem:[%s744 + $0x1c7] sm:$0xff]
      %v1659 = vld [vmem:[%s744 + $0x1cf] sm:$0xff]
      %v1660 = vld [vmem:[%s744 + $0x1e7] sm:$0xff]
      %v1661 = vld [vmem:[%s744 + $0x1ef] sm:$0xff]
      %v1662 = vpack.c.bf16 %v1631, %v1630
      %v1663 = vpack.c.bf16 %v1633, %v1632
      %v1664 = vpack.c.bf16 %v1635, %v1634
      %v1665 = vpack.c.bf16 %v1637, %v1636
      %v1666 = vpack.c.bf16 %v1639, %v1638
      %v1667 = vpack.c.bf16 %v1641, %v1640
      %v1668 = vpack.c.bf16 %v1643, %v1642
      %v1669 = vpack.c.bf16 %v1645, %v1644
      %v1670 = vpack.c.bf16 %v1647, %v1646
      %v1671 = vpack.c.bf16 %v1649, %v1648
      %v1672 = vpack.c.bf16 %v1651, %v1650
      %v1673 = vpack.c.bf16 %v1653, %v1652
      %v1674 = vpack.c.bf16 %v1655, %v1654
      %v1675 = vpack.c.bf16 %v1657, %v1656
      %v1676 = vpack.c.bf16 %v1659, %v1658
      %v1677 = vpack.c.bf16 %v1661, %v1660
      %s1678 = scalar_lea.vmem %s3, 192
      %v1679 = vld [vmem:[%s1678] sm:$0xf]
      %v1680 = vld [vmem:[%s1678 + $0x4] sm:$0xf]
      %v1681 = vld [vmem:[%s1678 + $0x8] sm:$0xf]
      %v1682 = vld [vmem:[%s1678 + $0xc] sm:$0xf]
      %v1683 = vld [vmem:[%s1678 + $0x10] sm:$0xf]
      %v1684 = vld [vmem:[%s1678 + $0x14] sm:$0xf]
      %v1685 = vld [vmem:[%s1678 + $0x18] sm:$0xf]
      %v1686 = vld [vmem:[%s1678 + $0x1c] sm:$0xf]
      %v1687 = vld [vmem:[%s1678 + $0x20] sm:$0xf]
      %v1688 = vld [vmem:[%s1678 + $0x24] sm:$0xf]
      %v1689 = vld [vmem:[%s1678 + $0x28] sm:$0xf]
      %v1690 = vld [vmem:[%s1678 + $0x2c] sm:$0xf]
      %v1691 = vld [vmem:[%s1678 + $0x30] sm:$0xf]
      %v1692 = vld [vmem:[%s1678 + $0x34] sm:$0xf]
      %v1693 = vld [vmem:[%s1678 + $0x38] sm:$0xf]
      %v1694 = vld [vmem:[%s1678 + $0x3c] sm:$0xf]
      %v1711 = vunpack.c.l.b16 %v1679
      %v1712 = vunpack.c.l.b16 %v1680
      %v1713 = vunpack.c.l.b16 %v1681
      %v1714 = vunpack.c.l.b16 %v1682
      %v1715 = vunpack.c.l.b16 %v1683
      %v1716 = vunpack.c.l.b16 %v1684
      %v1717 = vunpack.c.l.b16 %v1685
      %v1718 = vunpack.c.l.b16 %v1686
      %v1719 = vunpack.c.l.b16 %v1687
      %v1720 = vunpack.c.l.b16 %v1688
      %v1721 = vunpack.c.l.b16 %v1689
      %v1722 = vunpack.c.l.b16 %v1690
      %v1723 = vunpack.c.l.b16 %v1691
      %v1724 = vunpack.c.l.b16 %v1692
      %v1725 = vunpack.c.l.b16 %v1693
      %v1726 = vunpack.c.l.b16 %v1694
      %v1727 = vpack.c.b16 %v1712, %v1711
      %v1728 = vpack.c.b16 %v1714, %v1713
      %v1729 = vpack.c.b16 %v1716, %v1715
      %v1730 = vpack.c.b16 %v1718, %v1717
      %v1731 = vpack.c.b16 %v1720, %v1719
      %v1732 = vpack.c.b16 %v1722, %v1721
      %v1733 = vpack.c.b16 %v1724, %v1723
      %v1734 = vpack.c.b16 %v1726, %v1725
      %1743 = vmatprep.subr.bf16.mxu0 0
      %1744 = vmatpush1.bf16.msra.mxu0 %v1727
      %1745 = vmatprep.subr.bf16.mxu0 0
      %1746 = vmatpush1.bf16.msra.mxu0 %v1728
      %1747 = vmatprep.subr.bf16.mxu0 0
      %1748 = vmatpush1.bf16.msra.mxu0 %v1729
      %1749 = vmatprep.subr.bf16.mxu0 0
      %1750 = vmatpush1.bf16.msra.mxu0 %v1730
      %1751 = vmatprep.subr.bf16.mxu0 0
      %1752 = vmatpush1.bf16.msra.mxu0 %v1731
      %1753 = vmatprep.subr.bf16.mxu0 0
      %1754 = vmatpush1.bf16.msra.mxu0 %v1732
      %1755 = vmatprep.subr.bf16.mxu0 0
      %1756 = vmatpush1.bf16.msra.mxu0 %v1733
      %1757 = vmatprep.subr.bf16.mxu0 0
      %1758 = vmatpush1.bf16.msra.mxu0 %v1734
      %1759 = vmatprep.subr.bf16.mxu0 0
      %1760 = vmatpush1.bf16.msra.mxu0 0
      %1761 = vmatprep.subr.bf16.mxu0 0
      %1762 = vmatpush1.bf16.msra.mxu0 0
      %1763 = vmatprep.subr.bf16.mxu0 0
      %1764 = vmatpush1.bf16.msra.mxu0 0
      %1765 = vmatprep.subr.bf16.mxu0 0
      %1766 = vmatpush1.bf16.msra.mxu0 0
      %1767 = vmatprep.subr.bf16.mxu0 0
      %1768 = vmatpush1.bf16.msra.mxu0 0
      %1769 = vmatprep.subr.bf16.mxu0 0
      %1770 = vmatpush1.bf16.msra.mxu0 0
      %1771 = vmatprep.subr.bf16.mxu0 0
      %1772 = vmatpush1.bf16.msra.mxu0 0
      %1773 = vmatprep.subr.bf16.mxu0 0
      %1774 = vmatpush1.bf16.msra.mxu0 0
      %1775 = vmatprep.mubr.bf16.mxu0 0
      %1776 = vmatmul.mubr.bf16.gmra.mrb[0].mxu0 %v1662
      %v1777 = vpop.f32.mrb[0].mxu0
      %v1778 = vadd.f32 0.0, %v1777
      %v1779 = vpop.f32.mrb[0].mxu0
      %v1780 = vpop.f32.mrb[0].mxu0
      %v1781 = vadd.f32 0.0, %v1780
      %v1782 = vpop.f32.mrb[0].mxu0
      %1783 = vmatprep.mubr.bf16.mxu0 0
      %1784 = vmatmul.mubr.bf16.gmra.mrb[0].mxu0 %v1663
      %v1785 = vpop.f32.mrb[0].mxu0
      %v1786 = vadd.f32 0.0, %v1785
      %v1787 = vpop.f32.mrb[0].mxu0
      %v1788 = vpop.f32.mrb[0].mxu0
      %v1789 = vadd.f32 0.0, %v1788
      %v1790 = vpop.f32.mrb[0].mxu0
      %1791 = vmatprep.mubr.bf16.mxu0 0
      %1792 = vmatmul.mubr.bf16.gmra.mrb[0].mxu0 %v1664
      %v1793 = vpop.f32.mrb[0].mxu0
      %v1794 = vadd.f32 0.0, %v1793
      %v1795 = vpop.f32.mrb[0].mxu0
      %v1796 = vpop.f32.mrb[0].mxu0
      %v1797 = vadd.f32 0.0, %v1796
      %v1798 = vpop.f32.mrb[0].mxu0
      %1799 = vmatprep.mubr.bf16.mxu0 0
      %1800 = vmatmul.mubr.bf16.gmra.mrb[0].mxu0 %v1665
      %v1801 = vpop.f32.mrb[0].mxu0
      %v1802 = vadd.f32 0.0, %v1801
      %v1803 = vpop.f32.mrb[0].mxu0
      %v1804 = vpop.f32.mrb[0].mxu0
      %v1805 = vadd.f32 0.0, %v1804
      %v1806 = vpop.f32.mrb[0].mxu0
      %1807 = vmatprep.mubr.bf16.mxu0 0
      %1808 = vmatmul.mubr.bf16.gmra.mrb[0].mxu0 %v1666
      %v1809 = vpop.f32.mrb[0].mxu0
      %v1810 = vadd.f32 0.0, %v1809
      %v1811 = vpop.f32.mrb[0].mxu0
      %v1812 = vpop.f32.mrb[0].mxu0
      %v1813 = vadd.f32 0.0, %v1812
      %v1814 = vpop.f32.mrb[0].mxu0
      %1815 = vmatprep.mubr.bf16.mxu0 0
      %1816 = vmatmul.mubr.bf16.gmra.mrb[0].mxu0 %v1667
      %v1817 = vpop.f32.mrb[0].mxu0
      %v1818 = vadd.f32 0.0, %v1817
      %v1819 = vpop.f32.mrb[0].mxu0
      %v1820 = vpop.f32.mrb[0].mxu0
      %v1821 = vadd.f32 0.0, %v1820
      %v1822 = vpop.f32.mrb[0].mxu0
      %1823 = vmatprep.mubr.bf16.mxu0 0
      %1824 = vmatmul.mubr.bf16.gmra.mrb[0].mxu0 %v1668
      %v1825 = vpop.f32.mrb[0].mxu0
      %v1826 = vadd.f32 0.0, %v1825
      %v1827 = vpop.f32.mrb[0].mxu0
      %v1828 = vpop.f32.mrb[0].mxu0
      %v1829 = vadd.f32 0.0, %v1828
      %v1830 = vpop.f32.mrb[0].mxu0
      %1831 = vmatprep.mubr.bf16.mxu0 0
      %1832 = vmatmul.mubr.bf16.gmra.mrb[0].mxu0 %v1669
      %v1833 = vpop.f32.mrb[0].mxu0
      %v1834 = vadd.f32 0.0, %v1833
      %v1835 = vpop.f32.mrb[0].mxu0
      %v1836 = vpop.f32.mrb[0].mxu0
      %v1837 = vadd.f32 0.0, %v1836
      %v1838 = vpop.f32.mrb[0].mxu0
      %1839 = vmatprep.mubr.bf16.mxu0 0
      %1840 = vmatmul.mubr.bf16.gmra.mrb[0].mxu0 %v1670
      %v1841 = vpop.f32.mrb[0].mxu0
      %v1842 = vadd.f32 0.0, %v1841
      %v1843 = vpop.f32.mrb[0].mxu0
      %v1844 = vpop.f32.mrb[0].mxu0
      %v1845 = vadd.f32 0.0, %v1844
      %v1846 = vpop.f32.mrb[0].mxu0
      %1847 = vmatprep.mubr.bf16.mxu0 0
      %1848 = vmatmul.mubr.bf16.gmra.mrb[0].mxu0 %v1671
      %v1849 = vpop.f32.mrb[0].mxu0
      %v1850 = vadd.f32 0.0, %v1849
      %v1851 = vpop.f32.mrb[0].mxu0
      %v1852 = vpop.f32.mrb[0].mxu0
      %v1853 = vadd.f32 0.0, %v1852
      %v1854 = vpop.f32.mrb[0].mxu0
      %1855 = vmatprep.mubr.bf16.mxu0 0
      %1856 = vmatmul.mubr.bf16.gmra.mrb[0].mxu0 %v1672
      %v1857 = vpop.f32.mrb[0].mxu0
      %v1858 = vadd.f32 0.0, %v1857
      %v1859 = vpop.f32.mrb[0].mxu0
      %v1860 = vpop.f32.mrb[0].mxu0
      %v1861 = vadd.f32 0.0, %v1860
      %v1862 = vpop.f32.mrb[0].mxu0
      %1863 = vmatprep.mubr.bf16.mxu0 0
      %1864 = vmatmul.mubr.bf16.gmra.mrb[0].mxu0 %v1673
      %v1865 = vpop.f32.mrb[0].mxu0
      %v1866 = vadd.f32 0.0, %v1865
      %v1867 = vpop.f32.mrb[0].mxu0
      %v1868 = vpop.f32.mrb[0].mxu0
      %v1869 = vadd.f32 0.0, %v1868
      %v1870 = vpop.f32.mrb[0].mxu0
      %1871 = vmatprep.mubr.bf16.mxu0 0
      %1872 = vmatmul.mubr.bf16.gmra.mrb[0].mxu0 %v1674
      %v1873 = vpop.f32.mrb[0].mxu0
      %v1874 = vadd.f32 0.0, %v1873
      %v1875 = vpop.f32.mrb[0].mxu0
      %v1876 = vpop.f32.mrb[0].mxu0
      %v1877 = vadd.f32 0.0, %v1876
      %v1878 = vpop.f32.mrb[0].mxu0
      %1879 = vmatprep.mubr.bf16.mxu0 0
      %1880 = vmatmul.mubr.bf16.gmra.mrb[0].mxu0 %v1675
      %v1881 = vpop.f32.mrb[0].mxu0
      %v1882 = vadd.f32 0.0, %v1881
      %v1883 = vpop.f32.mrb[0].mxu0
      %v1884 = vpop.f32.mrb[0].mxu0
      %v1885 = vadd.f32 0.0, %v1884
      %v1886 = vpop.f32.mrb[0].mxu0
      %1887 = vmatprep.mubr.bf16.mxu0 0
      %1888 = vmatmul.mubr.bf16.gmra.mrb[0].mxu0 %v1676
      %v1889 = vpop.f32.mrb[0].mxu0
      %v1890 = vadd.f32 0.0, %v1889
      %v1891 = vpop.f32.mrb[0].mxu0
      %v1892 = vpop.f32.mrb[0].mxu0
      %v1893 = vadd.f32 0.0, %v1892
      %v1894 = vpop.f32.mrb[0].mxu0
      %1895 = vmatprep.mubr.bf16.mxu0 0
      %1896 = vmatmul.mubr.bf16.gmra.mrb[0].mxu0 %v1677
      %v1897 = vpop.f32.mrb[0].mxu0
      %v1898 = vadd.f32 0.0, %v1897
      %v1899 = vpop.f32.mrb[0].mxu0
      %v1900 = vpop.f32.mrb[0].mxu0
      %v1901 = vadd.f32 0.0, %v1900
      %v1902 = vpop.f32.mrb[0].mxu0
      %1903 = vdwg.mxu0
      %v1904 = vadd.f32 %v1598, %v1778
      %v1905 = vadd.f32 %v1599, %v1781
      %v1906 = vadd.f32 %v1600, %v1786
      %v1907 = vadd.f32 %v1601, %v1789
      %v1908 = vadd.f32 %v1602, %v1794
      %v1909 = vadd.f32 %v1603, %v1797
      %v1910 = vadd.f32 %v1604, %v1802
      %v1911 = vadd.f32 %v1605, %v1805
      %v1912 = vadd.f32 %v1606, %v1810
      %v1913 = vadd.f32 %v1607, %v1813
      %v1914 = vadd.f32 %v1608, %v1818
      %v1915 = vadd.f32 %v1609, %v1821
      %v1916 = vadd.f32 %v1610, %v1826
      %v1917 = vadd.f32 %v1611, %v1829
      %v1918 = vadd.f32 %v1612, %v1834
      %v1919 = vadd.f32 %v1613, %v1837
      %v1920 = vadd.f32 %v1614, %v1842
      %v1921 = vadd.f32 %v1615, %v1845
      %v1922 = vadd.f32 %v1616, %v1850
      %v1923 = vadd.f32 %v1617, %v1853
      %v1924 = vadd.f32 %v1618, %v1858
      %v1925 = vadd.f32 %v1619, %v1861
      %v1926 = vadd.f32 %v1620, %v1866
      %v1927 = vadd.f32 %v1621, %v1869
      %v1928 = vadd.f32 %v1622, %v1874
      %v1929 = vadd.f32 %v1623, %v1877
      %v1930 = vadd.f32 %v1624, %v1882
      %v1931 = vadd.f32 %v1625, %v1885
      %v1932 = vadd.f32 %v1626, %v1890
      %v1933 = vadd.f32 %v1627, %v1893
      %v1934 = vadd.f32 %v1628, %v1898
      %v1935 = vadd.f32 %v1629, %v1901
      %v1936 = vld [vmem:[%s744 + $0x8] sm:$0xff]
      %v1937 = vld [vmem:[%s744 + $0x10] sm:$0xff]
      %v1938 = vld [vmem:[%s744 + $0x28] sm:$0xff]
      %v1939 = vld [vmem:[%s744 + $0x30] sm:$0xff]
      %v1940 = vld [vmem:[%s744 + $0x48] sm:$0xff]
      %v1941 = vld [vmem:[%s744 + $0x50] sm:$0xff]
      %v1942 = vld [vmem:[%s744 + $0x68] sm:$0xff]
      %v1943 = vld [vmem:[%s744 + $0x70] sm:$0xff]
      %v1944 = vld [vmem:[%s744 + $0x88] sm:$0xff]
      %v1945 = vld [vmem:[%s744 + $0x90] sm:$0xff]
      %v1946 = vld [vmem:[%s744 + $0xa8] sm:$0xff]
      %v1947 = vld [vmem:[%s744 + $0xb0] sm:$0xff]
      %v1948 = vld [vmem:[%s744 + $0xc8] sm:$0xff]
      %v1949 = vld [vmem:[%s744 + $0xd0] sm:$0xff]
      %v1950 = vld [vmem:[%s744 + $0xe8] sm:$0xff]
      %v1951 = vld [vmem:[%s744 + $0xf0] sm:$0xff]
      %v1952 = vld [vmem:[%s744 + $0x108] sm:$0xff]
      %v1953 = vld [vmem:[%s744 + $0x110] sm:$0xff]
      %v1954 = vld [vmem:[%s744 + $0x128] sm:$0xff]
      %v1955 = vld [vmem:[%s744 + $0x130] sm:$0xff]
      %v1956 = vld [vmem:[%s744 + $0x148] sm:$0xff]
      %v1957 = vld [vmem:[%s744 + $0x150] sm:$0xff]
      %v1958 = vld [vmem:[%s744 + $0x168] sm:$0xff]
      %v1959 = vld [vmem:[%s744 + $0x170] sm:$0xff]
      %v1960 = vld [vmem:[%s744 + $0x188] sm:$0xff]
      %v1961 = vld [vmem:[%s744 + $0x190] sm:$0xff]
      %v1962 = vld [vmem:[%s744 + $0x1a8] sm:$0xff]
      %v1963 = vld [vmem:[%s744 + $0x1b0] sm:$0xff]
      %v1964 = vld [vmem:[%s744 + $0x1c8] sm:$0xff]
      %v1965 = vld [vmem:[%s744 + $0x1d0] sm:$0xff]
      %v1966 = vld [vmem:[%s744 + $0x1e8] sm:$0xff]
      %v1967 = vld [vmem:[%s744 + $0x1f0] sm:$0xff]
      %v1968 = vpack.c.bf16 %v1937, %v1936
      %v1969 = vpack.c.bf16 %v1939, %v1938
      %v1970 = vpack.c.bf16 %v1941, %v1940
      %v1971 = vpack.c.bf16 %v1943, %v1942
      %v1972 = vpack.c.bf16 %v1945, %v1944
      %v1973 = vpack.c.bf16 %v1947, %v1946
      %v1974 = vpack.c.bf16 %v1949, %v1948
      %v1975 = vpack.c.bf16 %v1951, %v1950
      %v1976 = vpack.c.bf16 %v1953, %v1952
      %v1977 = vpack.c.bf16 %v1955, %v1954
      %v1978 = vpack.c.bf16 %v1957, %v1956
      %v1979 = vpack.c.bf16 %v1959, %v1958
      %v1980 = vpack.c.bf16 %v1961, %v1960
      %v1981 = vpack.c.bf16 %v1963, %v1962
      %v1982 = vpack.c.bf16 %v1965, %v1964
      %v1983 = vpack.c.bf16 %v1967, %v1966
      %s1984 = scalar_lea.vmem %s3, 256
      %v1985 = vld [vmem:[%s1984] sm:$0xf]
      %v1986 = vld [vmem:[%s1984 + $0x4] sm:$0xf]
      %v1987 = vld [vmem:[%s1984 + $0x8] sm:$0xf]
      %v1988 = vld [vmem:[%s1984 + $0xc] sm:$0xf]
      %v1989 = vld [vmem:[%s1984 + $0x10] sm:$0xf]
      %v1990 = vld [vmem:[%s1984 + $0x14] sm:$0xf]
      %v1991 = vld [vmem:[%s1984 + $0x18] sm:$0xf]
      %v1992 = vld [vmem:[%s1984 + $0x1c] sm:$0xf]
      %v1993 = vld [vmem:[%s1984 + $0x20] sm:$0xf]
      %v1994 = vld [vmem:[%s1984 + $0x24] sm:$0xf]
      %v1995 = vld [vmem:[%s1984 + $0x28] sm:$0xf]
      %v1996 = vld [vmem:[%s1984 + $0x2c] sm:$0xf]
      %v1997 = vld [vmem:[%s1984 + $0x30] sm:$0xf]
      %v1998 = vld [vmem:[%s1984 + $0x34] sm:$0xf]
      %v1999 = vld [vmem:[%s1984 + $0x38] sm:$0xf]
      %v2000 = vld [vmem:[%s1984 + $0x3c] sm:$0xf]
      %v2017 = vunpack.c.l.b16 %v1985
      %v2018 = vunpack.c.l.b16 %v1986
      %v2019 = vunpack.c.l.b16 %v1987
      %v2020 = vunpack.c.l.b16 %v1988
      %v2021 = vunpack.c.l.b16 %v1989
      %v2022 = vunpack.c.l.b16 %v1990
      %v2023 = vunpack.c.l.b16 %v1991
      %v2024 = vunpack.c.l.b16 %v1992
      %v2025 = vunpack.c.l.b16 %v1993
      %v2026 = vunpack.c.l.b16 %v1994
      %v2027 = vunpack.c.l.b16 %v1995
      %v2028 = vunpack.c.l.b16 %v1996
      %v2029 = vunpack.c.l.b16 %v1997
      %v2030 = vunpack.c.l.b16 %v1998
      %v2031 = vunpack.c.l.b16 %v1999
      %v2032 = vunpack.c.l.b16 %v2000
      %v2033 = vpack.c.b16 %v2018, %v2017
      %v2034 = vpack.c.b16 %v2020, %v2019
      %v2035 = vpack.c.b16 %v2022, %v2021
      %v2036 = vpack.c.b16 %v2024, %v2023
      %v2037 = vpack.c.b16 %v2026, %v2025
      %v2038 = vpack.c.b16 %v2028, %v2027
      %v2039 = vpack.c.b16 %v2030, %v2029
      %v2040 = vpack.c.b16 %v2032, %v2031
      %2049 = vmatprep.subr.bf16.mxu0 0
      %2050 = vmatpush1.bf16.msra.mxu0 %v2033
      %2051 = vmatprep.subr.bf16.mxu0 0
      %2052 = vmatpush1.bf16.msra.mxu0 %v2034
      %2053 = vmatprep.subr.bf16.mxu0 0
      %2054 = vmatpush1.bf16.msra.mxu0 %v2035
      %2055 = vmatprep.subr.bf16.mxu0 0
      %2056 = vmatpush1.bf16.msra.mxu0 %v2036
      %2057 = vmatprep.subr.bf16.mxu0 0
      %2058 = vmatpush1.bf16.msra.mxu0 %v2037
      %2059 = vmatprep.subr.bf16.mxu0 0
      %2060 = vmatpush1.bf16.msra.mxu0 %v2038
      %2061 = vmatprep.subr.bf16.mxu0 0
      %2062 = vmatpush1.bf16.msra.mxu0 %v2039
      %2063 = vmatprep.subr.bf16.mxu0 0
      %2064 = vmatpush1.bf16.msra.mxu0 %v2040
      %2065 = vmatprep.subr.bf16.mxu0 0
      %2066 = vmatpush1.bf16.msra.mxu0 0
      %2067 = vmatprep.subr.bf16.mxu0 0
      %2068 = vmatpush1.bf16.msra.mxu0 0
      %2069 = vmatprep.subr.bf16.mxu0 0
      %2070 = vmatpush1.bf16.msra.mxu0 0
      %2071 = vmatprep.subr.bf16.mxu0 0
      %2072 = vmatpush1.bf16.msra.mxu0 0
      %2073 = vmatprep.subr.bf16.mxu0 0
      %2074 = vmatpush1.bf16.msra.mxu0 0
      %2075 = vmatprep.subr.bf16.mxu0 0
      %2076 = vmatpush1.bf16.msra.mxu0 0
      %2077 = vmatprep.subr.bf16.mxu0 0
      %2078 = vmatpush1.bf16.msra.mxu0 0
      %2079 = vmatprep.subr.bf16.mxu0 0
      %2080 = vmatpush1.bf16.msra.mxu0 0
      %2081 = vmatprep.mubr.bf16.mxu0 0
      %2082 = vmatmul.mubr.bf16.gmra.mrb[0].mxu0 %v1968
      %v2083 = vpop.f32.mrb[0].mxu0
      %v2084 = vadd.f32 0.0, %v2083
      %v2085 = vpop.f32.mrb[0].mxu0
      %v2086 = vpop.f32.mrb[0].mxu0
      %v2087 = vadd.f32 0.0, %v2086
      %v2088 = vpop.f32.mrb[0].mxu0
      %2089 = vmatprep.mubr.bf16.mxu0 0
      %2090 = vmatmul.mubr.bf16.gmra.mrb[0].mxu0 %v1969
      %v2091 = vpop.f32.mrb[0].mxu0
      %v2092 = vadd.f32 0.0, %v2091
      %v2093 = vpop.f32.mrb[0].mxu0
      %v2094 = vpop.f32.mrb[0].mxu0
      %v2095 = vadd.f32 0.0, %v2094
      %v2096 = vpop.f32.mrb[0].mxu0
      %2097 = vmatprep.mubr.bf16.mxu0 0
      %2098 = vmatmul.mubr.bf16.gmra.mrb[0].mxu0 %v1970
      %v2099 = vpop.f32.mrb[0].mxu0
      %v2100 = vadd.f32 0.0, %v2099
      %v2101 = vpop.f32.mrb[0].mxu0
      %v2102 = vpop.f32.mrb[0].mxu0
      %v2103 = vadd.f32 0.0, %v2102
      %v2104 = vpop.f32.mrb[0].mxu0
      %2105 = vmatprep.mubr.bf16.mxu0 0
      %2106 = vmatmul.mubr.bf16.gmra.mrb[0].mxu0 %v1971
      %v2107 = vpop.f32.mrb[0].mxu0
      %v2108 = vadd.f32 0.0, %v2107
      %v2109 = vpop.f32.mrb[0].mxu0
      %v2110 = vpop.f32.mrb[0].mxu0
      %v2111 = vadd.f32 0.0, %v2110
      %v2112 = vpop.f32.mrb[0].mxu0
      %2113 = vmatprep.mubr.bf16.mxu0 0
      %2114 = vmatmul.mubr.bf16.gmra.mrb[0].mxu0 %v1972
      %v2115 = vpop.f32.mrb[0].mxu0
      %v2116 = vadd.f32 0.0, %v2115
      %v2117 = vpop.f32.mrb[0].mxu0
      %v2118 = vpop.f32.mrb[0].mxu0
      %v2119 = vadd.f32 0.0, %v2118
      %v2120 = vpop.f32.mrb[0].mxu0
      %2121 = vmatprep.mubr.bf16.mxu0 0
      %2122 = vmatmul.mubr.bf16.gmra.mrb[0].mxu0 %v1973
      %v2123 = vpop.f32.mrb[0].mxu0
      %v2124 = vadd.f32 0.0, %v2123
      %v2125 = vpop.f32.mrb[0].mxu0
      %v2126 = vpop.f32.mrb[0].mxu0
      %v2127 = vadd.f32 0.0, %v2126
      %v2128 = vpop.f32.mrb[0].mxu0
      %2129 = vmatprep.mubr.bf16.mxu0 0
      %2130 = vmatmul.mubr.bf16.gmra.mrb[0].mxu0 %v1974
      %v2131 = vpop.f32.mrb[0].mxu0
      %v2132 = vadd.f32 0.0, %v2131
      %v2133 = vpop.f32.mrb[0].mxu0
      %v2134 = vpop.f32.mrb[0].mxu0
      %v2135 = vadd.f32 0.0, %v2134
      %v2136 = vpop.f32.mrb[0].mxu0
      %2137 = vmatprep.mubr.bf16.mxu0 0
      %2138 = vmatmul.mubr.bf16.gmra.mrb[0].mxu0 %v1975
      %v2139 = vpop.f32.mrb[0].mxu0
      %v2140 = vadd.f32 0.0, %v2139
      %v2141 = vpop.f32.mrb[0].mxu0
      %v2142 = vpop.f32.mrb[0].mxu0
      %v2143 = vadd.f32 0.0, %v2142
      %v2144 = vpop.f32.mrb[0].mxu0
      %2145 = vmatprep.mubr.bf16.mxu0 0
      %2146 = vmatmul.mubr.bf16.gmra.mrb[0].mxu0 %v1976
      %v2147 = vpop.f32.mrb[0].mxu0
      %v2148 = vadd.f32 0.0, %v2147
      %v2149 = vpop.f32.mrb[0].mxu0
      %v2150 = vpop.f32.mrb[0].mxu0
      %v2151 = vadd.f32 0.0, %v2150
      %v2152 = vpop.f32.mrb[0].mxu0
      %2153 = vmatprep.mubr.bf16.mxu0 0
      %2154 = vmatmul.mubr.bf16.gmra.mrb[0].mxu0 %v1977
      %v2155 = vpop.f32.mrb[0].mxu0
      %v2156 = vadd.f32 0.0, %v2155
      %v2157 = vpop.f32.mrb[0].mxu0
      %v2158 = vpop.f32.mrb[0].mxu0
      %v2159 = vadd.f32 0.0, %v2158
      %v2160 = vpop.f32.mrb[0].mxu0
      %2161 = vmatprep.mubr.bf16.mxu0 0
      %2162 = vmatmul.mubr.bf16.gmra.mrb[0].mxu0 %v1978
      %v2163 = vpop.f32.mrb[0].mxu0
      %v2164 = vadd.f32 0.0, %v2163
      %v2165 = vpop.f32.mrb[0].mxu0
      %v2166 = vpop.f32.mrb[0].mxu0
      %v2167 = vadd.f32 0.0, %v2166
      %v2168 = vpop.f32.mrb[0].mxu0
      %2169 = vmatprep.mubr.bf16.mxu0 0
      %2170 = vmatmul.mubr.bf16.gmra.mrb[0].mxu0 %v1979
      %v2171 = vpop.f32.mrb[0].mxu0
      %v2172 = vadd.f32 0.0, %v2171
      %v2173 = vpop.f32.mrb[0].mxu0
      %v2174 = vpop.f32.mrb[0].mxu0
      %v2175 = vadd.f32 0.0, %v2174
      %v2176 = vpop.f32.mrb[0].mxu0
      %2177 = vmatprep.mubr.bf16.mxu0 0
      %2178 = vmatmul.mubr.bf16.gmra.mrb[0].mxu0 %v1980
      %v2179 = vpop.f32.mrb[0].mxu0
      %v2180 = vadd.f32 0.0, %v2179
      %v2181 = vpop.f32.mrb[0].mxu0
      %v2182 = vpop.f32.mrb[0].mxu0
      %v2183 = vadd.f32 0.0, %v2182
      %v2184 = vpop.f32.mrb[0].mxu0
      %2185 = vmatprep.mubr.bf16.mxu0 0
      %2186 = vmatmul.mubr.bf16.gmra.mrb[0].mxu0 %v1981
      %v2187 = vpop.f32.mrb[0].mxu0
      %v2188 = vadd.f32 0.0, %v2187
      %v2189 = vpop.f32.mrb[0].mxu0
      %v2190 = vpop.f32.mrb[0].mxu0
      %v2191 = vadd.f32 0.0, %v2190
      %v2192 = vpop.f32.mrb[0].mxu0
      %2193 = vmatprep.mubr.bf16.mxu0 0
      %2194 = vmatmul.mubr.bf16.gmra.mrb[0].mxu0 %v1982
      %v2195 = vpop.f32.mrb[0].mxu0
      %v2196 = vadd.f32 0.0, %v2195
      %v2197 = vpop.f32.mrb[0].mxu0
      %v2198 = vpop.f32.mrb[0].mxu0
      %v2199 = vadd.f32 0.0, %v2198
      %v2200 = vpop.f32.mrb[0].mxu0
      %2201 = vmatprep.mubr.bf16.mxu0 0
      %2202 = vmatmul.mubr.bf16.gmra.mrb[0].mxu0 %v1983
      %v2203 = vpop.f32.mrb[0].mxu0
      %v2204 = vadd.f32 0.0, %v2203
      %v2205 = vpop.f32.mrb[0].mxu0
      %v2206 = vpop.f32.mrb[0].mxu0
      %v2207 = vadd.f32 0.0, %v2206
      %v2208 = vpop.f32.mrb[0].mxu0
      %2209 = vdwg.mxu0
      %v2210 = vadd.f32 %v1904, %v2084
      %v2211 = vadd.f32 %v1905, %v2087
      %v2212 = vadd.f32 %v1906, %v2092
      %v2213 = vadd.f32 %v1907, %v2095
      %v2214 = vadd.f32 %v1908, %v2100
      %v2215 = vadd.f32 %v1909, %v2103
      %v2216 = vadd.f32 %v1910, %v2108
      %v2217 = vadd.f32 %v1911, %v2111
      %v2218 = vadd.f32 %v1912, %v2116
      %v2219 = vadd.f32 %v1913, %v2119
      %v2220 = vadd.f32 %v1914, %v2124
      %v2221 = vadd.f32 %v1915, %v2127
      %v2222 = vadd.f32 %v1916, %v2132
      %v2223 = vadd.f32 %v1917, %v2135
      %v2224 = vadd.f32 %v1918, %v2140
      %v2225 = vadd.f32 %v1919, %v2143
      %v2226 = vadd.f32 %v1920, %v2148
      %v2227 = vadd.f32 %v1921, %v2151
      %v2228 = vadd.f32 %v1922, %v2156
      %v2229 = vadd.f32 %v1923, %v2159
      %v2230 = vadd.f32 %v1924, %v2164
      %v2231 = vadd.f32 %v1925, %v2167
      %v2232 = vadd.f32 %v1926, %v2172
      %v2233 = vadd.f32 %v1927, %v2175
      %v2234 = vadd.f32 %v1928, %v2180
      %v2235 = vadd.f32 %v1929, %v2183
      %v2236 = vadd.f32 %v1930, %v2188
      %v2237 = vadd.f32 %v1931, %v2191
      %v2238 = vadd.f32 %v1932, %v2196
      %v2239 = vadd.f32 %v1933, %v2199
      %v2240 = vadd.f32 %v1934, %v2204
      %v2241 = vadd.f32 %v1935, %v2207
      %v2242 = vld [vmem:[%s744 + $0x9] sm:$0xff]
      %v2243 = vld [vmem:[%s744 + $0x11] sm:$0xff]
      %v2244 = vld [vmem:[%s744 + $0x29] sm:$0xff]
      %v2245 = vld [vmem:[%s744 + $0x31] sm:$0xff]
      %v2246 = vld [vmem:[%s744 + $0x49] sm:$0xff]
      %v2247 = vld [vmem:[%s744 + $0x51] sm:$0xff]
      %v2248 = vld [vmem:[%s744 + $0x69] sm:$0xff]
      %v2249 = vld [vmem:[%s744 + $0x71] sm:$0xff]
      %v2250 = vld [vmem:[%s744 + $0x89] sm:$0xff]
      %v2251 = vld [vmem:[%s744 + $0x91] sm:$0xff]
      %v2252 = vld [vmem:[%s744 + $0xa9] sm:$0xff]
      %v2253 = vld [vmem:[%s744 + $0xb1] sm:$0xff]
      %v2254 = vld [vmem:[%s744 + $0xc9] sm:$0xff]
      %v2255 = vld [vmem:[%s744 + $0xd1] sm:$0xff]
      %v2256 = vld [vmem:[%s744 + $0xe9] sm:$0xff]
      %v2257 = vld [vmem:[%s744 + $0xf1] sm:$0xff]
      %v2258 = vld [vmem:[%s744 + $0x109] sm:$0xff]
      %v2259 = vld [vmem:[%s744 + $0x111] sm:$0xff]
      %v2260 = vld [vmem:[%s744 + $0x129] sm:$0xff]
      %v2261 = vld [vmem:[%s744 + $0x131] sm:$0xff]
      %v2262 = vld [vmem:[%s744 + $0x149] sm:$0xff]
      %v2263 = vld [vmem:[%s744 + $0x151] sm:$0xff]
      %v2264 = vld [vmem:[%s744 + $0x169] sm:$0xff]
      %v2265 = vld [vmem:[%s744 + $0x171] sm:$0xff]
      %v2266 = vld [vmem:[%s744 + $0x189] sm:$0xff]
      %v2267 = vld [vmem:[%s744 + $0x191] sm:$0xff]
      %v2268 = vld [vmem:[%s744 + $0x1a9] sm:$0xff]
      %v2269 = vld [vmem:[%s744 + $0x1b1] sm:$0xff]
      %v2270 = vld [vmem:[%s744 + $0x1c9] sm:$0xff]
      %v2271 = vld [vmem:[%s744 + $0x1d1] sm:$0xff]
      %v2272 = vld [vmem:[%s744 + $0x1e9] sm:$0xff]
      %v2273 = vld [vmem:[%s744 + $0x1f1] sm:$0xff]
      %v2274 = vpack.c.bf16 %v2243, %v2242
      %v2275 = vpack.c.bf16 %v2245, %v2244
      %v2276 = vpack.c.bf16 %v2247, %v2246
      %v2277 = vpack.c.bf16 %v2249, %v2248
      %v2278 = vpack.c.bf16 %v2251, %v2250
      %v2279 = vpack.c.bf16 %v2253, %v2252
      %v2280 = vpack.c.bf16 %v2255, %v2254
      %v2281 = vpack.c.bf16 %v2257, %v2256
      %v2282 = vpack.c.bf16 %v2259, %v2258
      %v2283 = vpack.c.bf16 %v2261, %v2260
      %v2284 = vpack.c.bf16 %v2263, %v2262
      %v2285 = vpack.c.bf16 %v2265, %v2264
      %v2286 = vpack.c.bf16 %v2267, %v2266
      %v2287 = vpack.c.bf16 %v2269, %v2268
      %v2288 = vpack.c.bf16 %v2271, %v2270
      %v2289 = vpack.c.bf16 %v2273, %v2272
      %s2290 = scalar_lea.vmem %s3, 320
      %v2291 = vld [vmem:[%s2290] sm:$0xf]
      %v2292 = vld [vmem:[%s2290 + $0x4] sm:$0xf]
      %v2293 = vld [vmem:[%s2290 + $0x8] sm:$0xf]
      %v2294 = vld [vmem:[%s2290 + $0xc] sm:$0xf]
      %v2295 = vld [vmem:[%s2290 + $0x10] sm:$0xf]
      %v2296 = vld [vmem:[%s2290 + $0x14] sm:$0xf]
      %v2297 = vld [vmem:[%s2290 + $0x18] sm:$0xf]
      %v2298 = vld [vmem:[%s2290 + $0x1c] sm:$0xf]
      %v2299 = vld [vmem:[%s2290 + $0x20] sm:$0xf]
      %v2300 = vld [vmem:[%s2290 + $0x24] sm:$0xf]
      %v2301 = vld [vmem:[%s2290 + $0x28] sm:$0xf]
      %v2302 = vld [vmem:[%s2290 + $0x2c] sm:$0xf]
      %v2303 = vld [vmem:[%s2290 + $0x30] sm:$0xf]
      %v2304 = vld [vmem:[%s2290 + $0x34] sm:$0xf]
      %v2305 = vld [vmem:[%s2290 + $0x38] sm:$0xf]
      %v2306 = vld [vmem:[%s2290 + $0x3c] sm:$0xf]
      %v2323 = vunpack.c.l.b16 %v2291
      %v2324 = vunpack.c.l.b16 %v2292
      %v2325 = vunpack.c.l.b16 %v2293
      %v2326 = vunpack.c.l.b16 %v2294
      %v2327 = vunpack.c.l.b16 %v2295
      %v2328 = vunpack.c.l.b16 %v2296
      %v2329 = vunpack.c.l.b16 %v2297
      %v2330 = vunpack.c.l.b16 %v2298
      %v2331 = vunpack.c.l.b16 %v2299
      %v2332 = vunpack.c.l.b16 %v2300
      %v2333 = vunpack.c.l.b16 %v2301
      %v2334 = vunpack.c.l.b16 %v2302
      %v2335 = vunpack.c.l.b16 %v2303
      %v2336 = vunpack.c.l.b16 %v2304
      %v2337 = vunpack.c.l.b16 %v2305
      %v2338 = vunpack.c.l.b16 %v2306
      %v2339 = vpack.c.b16 %v2324, %v2323
      %v2340 = vpack.c.b16 %v2326, %v2325
      %v2341 = vpack.c.b16 %v2328, %v2327
      %v2342 = vpack.c.b16 %v2330, %v2329
      %v2343 = vpack.c.b16 %v2332, %v2331
      %v2344 = vpack.c.b16 %v2334, %v2333
      %v2345 = vpack.c.b16 %v2336, %v2335
      %v2346 = vpack.c.b16 %v2338, %v2337
      %2355 = vmatprep.subr.bf16.mxu0 0
      %2356 = vmatpush1.bf16.msra.mxu0 %v2339
      %2357 = vmatprep.subr.bf16.mxu0 0
      %2358 = vmatpush1.bf16.msra.mxu0 %v2340
      %2359 = vmatprep.subr.bf16.mxu0 0
      %2360 = vmatpush1.bf16.msra.mxu0 %v2341
      %2361 = vmatprep.subr.bf16.mxu0 0
      %2362 = vmatpush1.bf16.msra.mxu0 %v2342
      %2363 = vmatprep.subr.bf16.mxu0 0
      %2364 = vmatpush1.bf16.msra.mxu0 %v2343
      %2365 = vmatprep.subr.bf16.mxu0 0
      %2366 = vmatpush1.bf16.msra.mxu0 %v2344
      %2367 = vmatprep.subr.bf16.mxu0 0
      %2368 = vmatpush1.bf16.msra.mxu0 %v2345
      %2369 = vmatprep.subr.bf16.mxu0 0
      %2370 = vmatpush1.bf16.msra.mxu0 %v2346
      %2371 = vmatprep.subr.bf16.mxu0 0
      %2372 = vmatpush1.bf16.msra.mxu0 0
      %2373 = vmatprep.subr.bf16.mxu0 0
      %2374 = vmatpush1.bf16.msra.mxu0 0
      %2375 = vmatprep.subr.bf16.mxu0 0
      %2376 = vmatpush1.bf16.msra.mxu0 0
      %2377 = vmatprep.subr.bf16.mxu0 0
      %2378 = vmatpush1.bf16.msra.mxu0 0
      %2379 = vmatprep.subr.bf16.mxu0 0
      %2380 = vmatpush1.bf16.msra.mxu0 0
      %2381 = vmatprep.subr.bf16.mxu0 0
      %2382 = vmatpush1.bf16.msra.mxu0 0
      %2383 = vmatprep.subr.bf16.mxu0 0
      %2384 = vmatpush1.bf16.msra.mxu0 0
      %2385 = vmatprep.subr.bf16.mxu0 0
      %2386 = vmatpush1.bf16.msra.mxu0 0
      %2387 = vmatprep.mubr.bf16.mxu0 0
      %2388 = vmatmul.mubr.bf16.gmra.mrb[0].mxu0 %v2274
      %v2389 = vpop.f32.mrb[0].mxu0
      %v2390 = vadd.f32 0.0, %v2389
      %v2391 = vpop.f32.mrb[0].mxu0
      %v2392 = vpop.f32.mrb[0].mxu0
      %v2393 = vadd.f32 0.0, %v2392
      %v2394 = vpop.f32.mrb[0].mxu0
      %2395 = vmatprep.mubr.bf16.mxu0 0
      %2396 = vmatmul.mubr.bf16.gmra.mrb[0].mxu0 %v2275
      %v2397 = vpop.f32.mrb[0].mxu0
      %v2398 = vadd.f32 0.0, %v2397
      %v2399 = vpop.f32.mrb[0].mxu0
      %v2400 = vpop.f32.mrb[0].mxu0
      %v2401 = vadd.f32 0.0, %v2400
      %v2402 = vpop.f32.mrb[0].mxu0
      %2403 = vmatprep.mubr.bf16.mxu0 0
      %2404 = vmatmul.mubr.bf16.gmra.mrb[0].mxu0 %v2276
      %v2405 = vpop.f32.mrb[0].mxu0
      %v2406 = vadd.f32 0.0, %v2405
      %v2407 = vpop.f32.mrb[0].mxu0
      %v2408 = vpop.f32.mrb[0].mxu0
      %v2409 = vadd.f32 0.0, %v2408
      %v2410 = vpop.f32.mrb[0].mxu0
      %2411 = vmatprep.mubr.bf16.mxu0 0
      %2412 = vmatmul.mubr.bf16.gmra.mrb[0].mxu0 %v2277
      %v2413 = vpop.f32.mrb[0].mxu0
      %v2414 = vadd.f32 0.0, %v2413
      %v2415 = vpop.f32.mrb[0].mxu0
      %v2416 = vpop.f32.mrb[0].mxu0
      %v2417 = vadd.f32 0.0, %v2416
      %v2418 = vpop.f32.mrb[0].mxu0
      %2419 = vmatprep.mubr.bf16.mxu0 0
      %2420 = vmatmul.mubr.bf16.gmra.mrb[0].mxu0 %v2278
      %v2421 = vpop.f32.mrb[0].mxu0
      %v2422 = vadd.f32 0.0, %v2421
      %v2423 = vpop.f32.mrb[0].mxu0
      %v2424 = vpop.f32.mrb[0].mxu0
      %v2425 = vadd.f32 0.0, %v2424
      %v2426 = vpop.f32.mrb[0].mxu0
      %2427 = vmatprep.mubr.bf16.mxu0 0
      %2428 = vmatmul.mubr.bf16.gmra.mrb[0].mxu0 %v2279
      %v2429 = vpop.f32.mrb[0].mxu0
      %v2430 = vadd.f32 0.0, %v2429
      %v2431 = vpop.f32.mrb[0].mxu0
      %v2432 = vpop.f32.mrb[0].mxu0
      %v2433 = vadd.f32 0.0, %v2432
      %v2434 = vpop.f32.mrb[0].mxu0
      %2435 = vmatprep.mubr.bf16.mxu0 0
      %2436 = vmatmul.mubr.bf16.gmra.mrb[0].mxu0 %v2280
      %v2437 = vpop.f32.mrb[0].mxu0
      %v2438 = vadd.f32 0.0, %v2437
      %v2439 = vpop.f32.mrb[0].mxu0
      %v2440 = vpop.f32.mrb[0].mxu0
      %v2441 = vadd.f32 0.0, %v2440
      %v2442 = vpop.f32.mrb[0].mxu0
      %2443 = vmatprep.mubr.bf16.mxu0 0
      %2444 = vmatmul.mubr.bf16.gmra.mrb[0].mxu0 %v2281
      %v2445 = vpop.f32.mrb[0].mxu0
      %v2446 = vadd.f32 0.0, %v2445
      %v2447 = vpop.f32.mrb[0].mxu0
      %v2448 = vpop.f32.mrb[0].mxu0
      %v2449 = vadd.f32 0.0, %v2448
      %v2450 = vpop.f32.mrb[0].mxu0
      %2451 = vmatprep.mubr.bf16.mxu0 0
      %2452 = vmatmul.mubr.bf16.gmra.mrb[0].mxu0 %v2282
      %v2453 = vpop.f32.mrb[0].mxu0
      %v2454 = vadd.f32 0.0, %v2453
      %v2455 = vpop.f32.mrb[0].mxu0
      %v2456 = vpop.f32.mrb[0].mxu0
      %v2457 = vadd.f32 0.0, %v2456
      %v2458 = vpop.f32.mrb[0].mxu0
      %2459 = vmatprep.mubr.bf16.mxu0 0
      %2460 = vmatmul.mubr.bf16.gmra.mrb[0].mxu0 %v2283
      %v2461 = vpop.f32.mrb[0].mxu0
      %v2462 = vadd.f32 0.0, %v2461
      %v2463 = vpop.f32.mrb[0].mxu0
      %v2464 = vpop.f32.mrb[0].mxu0
      %v2465 = vadd.f32 0.0, %v2464
      %v2466 = vpop.f32.mrb[0].mxu0
      %2467 = vmatprep.mubr.bf16.mxu0 0
      %2468 = vmatmul.mubr.bf16.gmra.mrb[0].mxu0 %v2284
      %v2469 = vpop.f32.mrb[0].mxu0
      %v2470 = vadd.f32 0.0, %v2469
      %v2471 = vpop.f32.mrb[0].mxu0
      %v2472 = vpop.f32.mrb[0].mxu0
      %v2473 = vadd.f32 0.0, %v2472
      %v2474 = vpop.f32.mrb[0].mxu0
      %2475 = vmatprep.mubr.bf16.mxu0 0
      %2476 = vmatmul.mubr.bf16.gmra.mrb[0].mxu0 %v2285
      %v2477 = vpop.f32.mrb[0].mxu0
      %v2478 = vadd.f32 0.0, %v2477
      %v2479 = vpop.f32.mrb[0].mxu0
      %v2480 = vpop.f32.mrb[0].mxu0
      %v2481 = vadd.f32 0.0, %v2480
      %v2482 = vpop.f32.mrb[0].mxu0
      %2483 = vmatprep.mubr.bf16.mxu0 0
      %2484 = vmatmul.mubr.bf16.gmra.mrb[0].mxu0 %v2286
      %v2485 = vpop.f32.mrb[0].mxu0
      %v2486 = vadd.f32 0.0, %v2485
      %v2487 = vpop.f32.mrb[0].mxu0
      %v2488 = vpop.f32.mrb[0].mxu0
      %v2489 = vadd.f32 0.0, %v2488
      %v2490 = vpop.f32.mrb[0].mxu0
      %2491 = vmatprep.mubr.bf16.mxu0 0
      %2492 = vmatmul.mubr.bf16.gmra.mrb[0].mxu0 %v2287
      %v2493 = vpop.f32.mrb[0].mxu0
      %v2494 = vadd.f32 0.0, %v2493
      %v2495 = vpop.f32.mrb[0].mxu0
      %v2496 = vpop.f32.mrb[0].mxu0
      %v2497 = vadd.f32 0.0, %v2496
      %v2498 = vpop.f32.mrb[0].mxu0
      %2499 = vmatprep.mubr.bf16.mxu0 0
      %2500 = vmatmul.mubr.bf16.gmra.mrb[0].mxu0 %v2288
      %v2501 = vpop.f32.mrb[0].mxu0
      %v2502 = vadd.f32 0.0, %v2501
      %v2503 = vpop.f32.mrb[0].mxu0
      %v2504 = vpop.f32.mrb[0].mxu0
      %v2505 = vadd.f32 0.0, %v2504
      %v2506 = vpop.f32.mrb[0].mxu0
      %2507 = vmatprep.mubr.bf16.mxu0 0
      %2508 = vmatmul.mubr.bf16.gmra.mrb[0].mxu0 %v2289
      %v2509 = vpop.f32.mrb[0].mxu0
      %v2510 = vadd.f32 0.0, %v2509
      %v2511 = vpop.f32.mrb[0].mxu0
      %v2512 = vpop.f32.mrb[0].mxu0
      %v2513 = vadd.f32 0.0, %v2512
      %v2514 = vpop.f32.mrb[0].mxu0
      %2515 = vdwg.mxu0
      %v2516 = vadd.f32 %v2210, %v2390
      %v2517 = vadd.f32 %v2211, %v2393
      %v2518 = vadd.f32 %v2212, %v2398
      %v2519 = vadd.f32 %v2213, %v2401
      %v2520 = vadd.f32 %v2214, %v2406
      %v2521 = vadd.f32 %v2215, %v2409
      %v2522 = vadd.f32 %v2216, %v2414
      %v2523 = vadd.f32 %v2217, %v2417
      %v2524 = vadd.f32 %v2218, %v2422
      %v2525 = vadd.f32 %v2219, %v2425
      %v2526 = vadd.f32 %v2220, %v2430
      %v2527 = vadd.f32 %v2221, %v2433
      %v2528 = vadd.f32 %v2222, %v2438
      %v2529 = vadd.f32 %v2223, %v2441
      %v2530 = vadd.f32 %v2224, %v2446
      %v2531 = vadd.f32 %v2225, %v2449
      %v2532 = vadd.f32 %v2226, %v2454
      %v2533 = vadd.f32 %v2227, %v2457
      %v2534 = vadd.f32 %v2228, %v2462
      %v2535 = vadd.f32 %v2229, %v2465
      %v2536 = vadd.f32 %v2230, %v2470
      %v2537 = vadd.f32 %v2231, %v2473
      %v2538 = vadd.f32 %v2232, %v2478
      %v2539 = vadd.f32 %v2233, %v2481
      %v2540 = vadd.f32 %v2234, %v2486
      %v2541 = vadd.f32 %v2235, %v2489
      %v2542 = vadd.f32 %v2236, %v2494
      %v2543 = vadd.f32 %v2237, %v2497
      %v2544 = vadd.f32 %v2238, %v2502
      %v2545 = vadd.f32 %v2239, %v2505
      %v2546 = vadd.f32 %v2240, %v2510
      %v2547 = vadd.f32 %v2241, %v2513
      %s2548 = scalar_lea.vmem [#allocation2], 64
      %v2549 = vld [vmem:[%s2548 + $0x7] sm:$0xff]
      %v2550 = vld [vmem:[%s2548 + $0xf] sm:$0xff]
      %v2551 = vld [vmem:[%s2548 + $0x27] sm:$0xff]
      %v2552 = vld [vmem:[%s2548 + $0x2f] sm:$0xff]
      %v2553 = vld [vmem:[%s2548 + $0x47] sm:$0xff]
      %v2554 = vld [vmem:[%s2548 + $0x4f] sm:$0xff]
      %v2555 = vld [vmem:[%s2548 + $0x67] sm:$0xff]
      %v2556 = vld [vmem:[%s2548 + $0x6f] sm:$0xff]
      %v2557 = vld [vmem:[%s2548 + $0x87] sm:$0xff]
      %v2558 = vld [vmem:[%s2548 + $0x8f] sm:$0xff]
      %v2559 = vld [vmem:[%s2548 + $0xa7] sm:$0xff]
      %v2560 = vld [vmem:[%s2548 + $0xaf] sm:$0xff]
      %v2561 = vld [vmem:[%s2548 + $0xc7] sm:$0xff]
      %v2562 = vld [vmem:[%s2548 + $0xcf] sm:$0xff]
      %v2563 = vld [vmem:[%s2548 + $0xe7] sm:$0xff]
      %v2564 = vld [vmem:[%s2548 + $0xef] sm:$0xff]
      %v2565 = vld [vmem:[%s2548 + $0x107] sm:$0xff]
      %v2566 = vld [vmem:[%s2548 + $0x10f] sm:$0xff]
      %v2567 = vld [vmem:[%s2548 + $0x127] sm:$0xff]
      %v2568 = vld [vmem:[%s2548 + $0x12f] sm:$0xff]
      %v2569 = vld [vmem:[%s2548 + $0x147] sm:$0xff]
      %v2570 = vld [vmem:[%s2548 + $0x14f] sm:$0xff]
      %v2571 = vld [vmem:[%s2548 + $0x167] sm:$0xff]
      %v2572 = vld [vmem:[%s2548 + $0x16f] sm:$0xff]
      %v2573 = vld [vmem:[%s2548 + $0x187] sm:$0xff]
      %v2574 = vld [vmem:[%s2548 + $0x18f] sm:$0xff]
      %v2575 = vld [vmem:[%s2548 + $0x1a7] sm:$0xff]
      %v2576 = vld [vmem:[%s2548 + $0x1af] sm:$0xff]
      %v2577 = vld [vmem:[%s2548 + $0x1c7] sm:$0xff]
      %v2578 = vld [vmem:[%s2548 + $0x1cf] sm:$0xff]
      %v2579 = vld [vmem:[%s2548 + $0x1e7] sm:$0xff]
      %v2580 = vld [vmem:[%s2548 + $0x1ef] sm:$0xff]
      %v2581 = vpack.c.bf16 %v2550, %v2549
      %v2582 = vpack.c.bf16 %v2552, %v2551
      %v2583 = vpack.c.bf16 %v2554, %v2553
      %v2584 = vpack.c.bf16 %v2556, %v2555
      %v2585 = vpack.c.bf16 %v2558, %v2557
      %v2586 = vpack.c.bf16 %v2560, %v2559
      %v2587 = vpack.c.bf16 %v2562, %v2561
      %v2588 = vpack.c.bf16 %v2564, %v2563
      %v2589 = vpack.c.bf16 %v2566, %v2565
      %v2590 = vpack.c.bf16 %v2568, %v2567
      %v2591 = vpack.c.bf16 %v2570, %v2569
      %v2592 = vpack.c.bf16 %v2572, %v2571
      %v2593 = vpack.c.bf16 %v2574, %v2573
      %v2594 = vpack.c.bf16 %v2576, %v2575
      %v2595 = vpack.c.bf16 %v2578, %v2577
      %v2596 = vpack.c.bf16 %v2580, %v2579
      %s2597 = scalar_lea.vmem %s3, 384
      %v2598 = vld [vmem:[%s2597] sm:$0xf]
      %v2599 = vld [vmem:[%s2597 + $0x4] sm:$0xf]
      %v2600 = vld [vmem:[%s2597 + $0x8] sm:$0xf]
      %v2601 = vld [vmem:[%s2597 + $0xc] sm:$0xf]
      %v2602 = vld [vmem:[%s2597 + $0x10] sm:$0xf]
      %v2603 = vld [vmem:[%s2597 + $0x14] sm:$0xf]
      %v2604 = vld [vmem:[%s2597 + $0x18] sm:$0xf]
      %v2605 = vld [vmem:[%s2597 + $0x1c] sm:$0xf]
      %v2606 = vld [vmem:[%s2597 + $0x20] sm:$0xf]
      %v2607 = vld [vmem:[%s2597 + $0x24] sm:$0xf]
      %v2608 = vld [vmem:[%s2597 + $0x28] sm:$0xf]
      %v2609 = vld [vmem:[%s2597 + $0x2c] sm:$0xf]
      %v2610 = vld [vmem:[%s2597 + $0x30] sm:$0xf]
      %v2611 = vld [vmem:[%s2597 + $0x34] sm:$0xf]
      %v2612 = vld [vmem:[%s2597 + $0x38] sm:$0xf]
      %v2613 = vld [vmem:[%s2597 + $0x3c] sm:$0xf]
      %v2630 = vunpack.c.l.b16 %v2598
      %v2631 = vunpack.c.l.b16 %v2599
      %v2632 = vunpack.c.l.b16 %v2600
      %v2633 = vunpack.c.l.b16 %v2601
      %v2634 = vunpack.c.l.b16 %v2602
      %v2635 = vunpack.c.l.b16 %v2603
      %v2636 = vunpack.c.l.b16 %v2604
      %v2637 = vunpack.c.l.b16 %v2605
      %v2638 = vunpack.c.l.b16 %v2606
      %v2639 = vunpack.c.l.b16 %v2607
      %v2640 = vunpack.c.l.b16 %v2608
      %v2641 = vunpack.c.l.b16 %v2609
      %v2642 = vunpack.c.l.b16 %v2610
      %v2643 = vunpack.c.l.b16 %v2611
      %v2644 = vunpack.c.l.b16 %v2612
      %v2645 = vunpack.c.l.b16 %v2613
      %v2646 = vpack.c.b16 %v2631, %v2630
      %v2647 = vpack.c.b16 %v2633, %v2632
      %v2648 = vpack.c.b16 %v2635, %v2634
      %v2649 = vpack.c.b16 %v2637, %v2636
      %v2650 = vpack.c.b16 %v2639, %v2638
      %v2651 = vpack.c.b16 %v2641, %v2640
      %v2652 = vpack.c.b16 %v2643, %v2642
      %v2653 = vpack.c.b16 %v2645, %v2644
      %2662 = vmatprep.subr.bf16.mxu0 0
      %2663 = vmatpush1.bf16.msra.mxu0 %v2646
      %2664 = vmatprep.subr.bf16.mxu0 0
      %2665 = vmatpush1.bf16.msra.mxu0 %v2647
      %2666 = vmatprep.subr.bf16.mxu0 0
      %2667 = vmatpush1.bf16.msra.mxu0 %v2648
      %2668 = vmatprep.subr.bf16.mxu0 0
      %2669 = vmatpush1.bf16.msra.mxu0 %v2649
      %2670 = vmatprep.subr.bf16.mxu0 0
      %2671 = vmatpush1.bf16.msra.mxu0 %v2650
      %2672 = vmatprep.subr.bf16.mxu0 0
      %2673 = vmatpush1.bf16.msra.mxu0 %v2651
      %2674 = vmatprep.subr.bf16.mxu0 0
      %2675 = vmatpush1.bf16.msra.mxu0 %v2652
      %2676 = vmatprep.subr.bf16.mxu0 0
      %2677 = vmatpush1.bf16.msra.mxu0 %v2653
      %2678 = vmatprep.subr.bf16.mxu0 0
      %2679 = vmatpush1.bf16.msra.mxu0 0
      %2680 = vmatprep.subr.bf16.mxu0 0
      %2681 = vmatpush1.bf16.msra.mxu0 0
      %2682 = vmatprep.subr.bf16.mxu0 0
      %2683 = vmatpush1.bf16.msra.mxu0 0
      %2684 = vmatprep.subr.bf16.mxu0 0
      %2685 = vmatpush1.bf16.msra.mxu0 0
      %2686 = vmatprep.subr.bf16.mxu0 0
      %2687 = vmatpush1.bf16.msra.mxu0 0
      %2688 = vmatprep.subr.bf16.mxu0 0
      %2689 = vmatpush1.bf16.msra.mxu0 0
      %2690 = vmatprep.subr.bf16.mxu0 0
      %2691 = vmatpush1.bf16.msra.mxu0 0
      %2692 = vmatprep.subr.bf16.mxu0 0
      %2693 = vmatpush1.bf16.msra.mxu0 0
      %2694 = vmatprep.mubr.bf16.mxu0 0
      %2695 = vmatmul.mubr.bf16.gmra.mrb[0].mxu0 %v2581
      %v2696 = vpop.f32.mrb[0].mxu0
      %v2697 = vadd.f32 0.0, %v2696
      %v2698 = vpop.f32.mrb[0].mxu0
      %v2699 = vpop.f32.mrb[0].mxu0
      %v2700 = vadd.f32 0.0, %v2699
      %v2701 = vpop.f32.mrb[0].mxu0
      %2702 = vmatprep.mubr.bf16.mxu0 0
      %2703 = vmatmul.mubr.bf16.gmra.mrb[0].mxu0 %v2582
      %v2704 = vpop.f32.mrb[0].mxu0
      %v2705 = vadd.f32 0.0, %v2704
      %v2706 = vpop.f32.mrb[0].mxu0
      %v2707 = vpop.f32.mrb[0].mxu0
      %v2708 = vadd.f32 0.0, %v2707
      %v2709 = vpop.f32.mrb[0].mxu0
      %2710 = vmatprep.mubr.bf16.mxu0 0
      %2711 = vmatmul.mubr.bf16.gmra.mrb[0].mxu0 %v2583
      %v2712 = vpop.f32.mrb[0].mxu0
      %v2713 = vadd.f32 0.0, %v2712
      %v2714 = vpop.f32.mrb[0].mxu0
      %v2715 = vpop.f32.mrb[0].mxu0
      %v2716 = vadd.f32 0.0, %v2715
      %v2717 = vpop.f32.mrb[0].mxu0
      %2718 = vmatprep.mubr.bf16.mxu0 0
      %2719 = vmatmul.mubr.bf16.gmra.mrb[0].mxu0 %v2584
      %v2720 = vpop.f32.mrb[0].mxu0
      %v2721 = vadd.f32 0.0, %v2720
      %v2722 = vpop.f32.mrb[0].mxu0
      %v2723 = vpop.f32.mrb[0].mxu0
      %v2724 = vadd.f32 0.0, %v2723
      %v2725 = vpop.f32.mrb[0].mxu0
      %2726 = vmatprep.mubr.bf16.mxu0 0
      %2727 = vmatmul.mubr.bf16.gmra.mrb[0].mxu0 %v2585
      %v2728 = vpop.f32.mrb[0].mxu0
      %v2729 = vadd.f32 0.0, %v2728
      %v2730 = vpop.f32.mrb[0].mxu0
      %v2731 = vpop.f32.mrb[0].mxu0
      %v2732 = vadd.f32 0.0, %v2731
      %v2733 = vpop.f32.mrb[0].mxu0
      %2734 = vmatprep.mubr.bf16.mxu0 0
      %2735 = vmatmul.mubr.bf16.gmra.mrb[0].mxu0 %v2586
      %v2736 = vpop.f32.mrb[0].mxu0
      %v2737 = vadd.f32 0.0, %v2736
      %v2738 = vpop.f32.mrb[0].mxu0
      %v2739 = vpop.f32.mrb[0].mxu0
      %v2740 = vadd.f32 0.0, %v2739
      %v2741 = vpop.f32.mrb[0].mxu0
      %2742 = vmatprep.mubr.bf16.mxu0 0
      %2743 = vmatmul.mubr.bf16.gmra.mrb[0].mxu0 %v2587
      %v2744 = vpop.f32.mrb[0].mxu0
      %v2745 = vadd.f32 0.0, %v2744
      %v2746 = vpop.f32.mrb[0].mxu0
      %v2747 = vpop.f32.mrb[0].mxu0
      %v2748 = vadd.f32 0.0, %v2747
      %v2749 = vpop.f32.mrb[0].mxu0
      %2750 = vmatprep.mubr.bf16.mxu0 0
      %2751 = vmatmul.mubr.bf16.gmra.mrb[0].mxu0 %v2588
      %v2752 = vpop.f32.mrb[0].mxu0
      %v2753 = vadd.f32 0.0, %v2752
      %v2754 = vpop.f32.mrb[0].mxu0
      %v2755 = vpop.f32.mrb[0].mxu0
      %v2756 = vadd.f32 0.0, %v2755
      %v2757 = vpop.f32.mrb[0].mxu0
      %2758 = vmatprep.mubr.bf16.mxu0 0
      %2759 = vmatmul.mubr.bf16.gmra.mrb[0].mxu0 %v2589
      %v2760 = vpop.f32.mrb[0].mxu0
      %v2761 = vadd.f32 0.0, %v2760
      %v2762 = vpop.f32.mrb[0].mxu0
      %v2763 = vpop.f32.mrb[0].mxu0
      %v2764 = vadd.f32 0.0, %v2763
      %v2765 = vpop.f32.mrb[0].mxu0
      %2766 = vmatprep.mubr.bf16.mxu0 0
      %2767 = vmatmul.mubr.bf16.gmra.mrb[0].mxu0 %v2590
      %v2768 = vpop.f32.mrb[0].mxu0
      %v2769 = vadd.f32 0.0, %v2768
      %v2770 = vpop.f32.mrb[0].mxu0
      %v2771 = vpop.f32.mrb[0].mxu0
      %v2772 = vadd.f32 0.0, %v2771
      %v2773 = vpop.f32.mrb[0].mxu0
      %2774 = vmatprep.mubr.bf16.mxu0 0
      %2775 = vmatmul.mubr.bf16.gmra.mrb[0].mxu0 %v2591
      %v2776 = vpop.f32.mrb[0].mxu0
      %v2777 = vadd.f32 0.0, %v2776
      %v2778 = vpop.f32.mrb[0].mxu0
      %v2779 = vpop.f32.mrb[0].mxu0
      %v2780 = vadd.f32 0.0, %v2779
      %v2781 = vpop.f32.mrb[0].mxu0
      %2782 = vmatprep.mubr.bf16.mxu0 0
      %2783 = vmatmul.mubr.bf16.gmra.mrb[0].mxu0 %v2592
      %v2784 = vpop.f32.mrb[0].mxu0
      %v2785 = vadd.f32 0.0, %v2784
      %v2786 = vpop.f32.mrb[0].mxu0
      %v2787 = vpop.f32.mrb[0].mxu0
      %v2788 = vadd.f32 0.0, %v2787
      %v2789 = vpop.f32.mrb[0].mxu0
      %2790 = vmatprep.mubr.bf16.mxu0 0
      %2791 = vmatmul.mubr.bf16.gmra.mrb[0].mxu0 %v2593
      %v2792 = vpop.f32.mrb[0].mxu0
      %v2793 = vadd.f32 0.0, %v2792
      %v2794 = vpop.f32.mrb[0].mxu0
      %v2795 = vpop.f32.mrb[0].mxu0
      %v2796 = vadd.f32 0.0, %v2795
      %v2797 = vpop.f32.mrb[0].mxu0
      %2798 = vmatprep.mubr.bf16.mxu0 0
      %2799 = vmatmul.mubr.bf16.gmra.mrb[0].mxu0 %v2594
      %v2800 = vpop.f32.mrb[0].mxu0
      %v2801 = vadd.f32 0.0, %v2800
      %v2802 = vpop.f32.mrb[0].mxu0
      %v2803 = vpop.f32.mrb[0].mxu0
      %v2804 = vadd.f32 0.0, %v2803
      %v2805 = vpop.f32.mrb[0].mxu0
      %2806 = vmatprep.mubr.bf16.mxu0 0
      %2807 = vmatmul.mubr.bf16.gmra.mrb[0].mxu0 %v2595
      %v2808 = vpop.f32.mrb[0].mxu0
      %v2809 = vadd.f32 0.0, %v2808
      %v2810 = vpop.f32.mrb[0].mxu0
      %v2811 = vpop.f32.mrb[0].mxu0
      %v2812 = vadd.f32 0.0, %v2811
      %v2813 = vpop.f32.mrb[0].mxu0
      %2814 = vmatprep.mubr.bf16.mxu0 0
      %2815 = vmatmul.mubr.bf16.gmra.mrb[0].mxu0 %v2596
      %v2816 = vpop.f32.mrb[0].mxu0
      %v2817 = vadd.f32 0.0, %v2816
      %v2818 = vpop.f32.mrb[0].mxu0
      %v2819 = vpop.f32.mrb[0].mxu0
      %v2820 = vadd.f32 0.0, %v2819
      %v2821 = vpop.f32.mrb[0].mxu0
      %2822 = vdwg.mxu0
      %v2823 = vadd.f32 %v2516, %v2697
      %v2824 = vadd.f32 %v2517, %v2700
      %v2825 = vadd.f32 %v2518, %v2705
      %v2826 = vadd.f32 %v2519, %v2708
      %v2827 = vadd.f32 %v2520, %v2713
      %v2828 = vadd.f32 %v2521, %v2716
      %v2829 = vadd.f32 %v2522, %v2721
      %v2830 = vadd.f32 %v2523, %v2724
      %v2831 = vadd.f32 %v2524, %v2729
      %v2832 = vadd.f32 %v2525, %v2732
      %v2833 = vadd.f32 %v2526, %v2737
      %v2834 = vadd.f32 %v2527, %v2740
      %v2835 = vadd.f32 %v2528, %v2745
      %v2836 = vadd.f32 %v2529, %v2748
      %v2837 = vadd.f32 %v2530, %v2753
      %v2838 = vadd.f32 %v2531, %v2756
      %v2839 = vadd.f32 %v2532, %v2761
      %v2840 = vadd.f32 %v2533, %v2764
      %v2841 = vadd.f32 %v2534, %v2769
      %v2842 = vadd.f32 %v2535, %v2772
      %v2843 = vadd.f32 %v2536, %v2777
      %v2844 = vadd.f32 %v2537, %v2780
      %v2845 = vadd.f32 %v2538, %v2785
      %v2846 = vadd.f32 %v2539, %v2788
      %v2847 = vadd.f32 %v2540, %v2793
      %v2848 = vadd.f32 %v2541, %v2796
      %v2849 = vadd.f32 %v2542, %v2801
      %v2850 = vadd.f32 %v2543, %v2804
      %v2851 = vadd.f32 %v2544, %v2809
      %v2852 = vadd.f32 %v2545, %v2812
      %v2853 = vadd.f32 %v2546, %v2817
      %v2854 = vadd.f32 %v2547, %v2820
      %v2855 = vld [vmem:[%s2548 + $0x8] sm:$0xff]
      %v2856 = vld [vmem:[%s2548 + $0x10] sm:$0xff]
      %v2857 = vld [vmem:[%s2548 + $0x28] sm:$0xff]
      %v2858 = vld [vmem:[%s2548 + $0x30] sm:$0xff]
      %v2859 = vld [vmem:[%s2548 + $0x48] sm:$0xff]
      %v2860 = vld [vmem:[%s2548 + $0x50] sm:$0xff]
      %v2861 = vld [vmem:[%s2548 + $0x68] sm:$0xff]
      %v2862 = vld [vmem:[%s2548 + $0x70] sm:$0xff]
      %v2863 = vld [vmem:[%s2548 + $0x88] sm:$0xff]
      %v2864 = vld [vmem:[%s2548 + $0x90] sm:$0xff]
      %v2865 = vld [vmem:[%s2548 + $0xa8] sm:$0xff]
      %v2866 = vld [vmem:[%s2548 + $0xb0] sm:$0xff]
      %v2867 = vld [vmem:[%s2548 + $0xc8] sm:$0xff]
      %v2868 = vld [vmem:[%s2548 + $0xd0] sm:$0xff]
      %v2869 = vld [vmem:[%s2548 + $0xe8] sm:$0xff]
      %v2870 = vld [vmem:[%s2548 + $0xf0] sm:$0xff]
      %v2871 = vld [vmem:[%s2548 + $0x108] sm:$0xff]
      %v2872 = vld [vmem:[%s2548 + $0x110] sm:$0xff]
      %v2873 = vld [vmem:[%s2548 + $0x128] sm:$0xff]
      %v2874 = vld [vmem:[%s2548 + $0x130] sm:$0xff]
      %v2875 = vld [vmem:[%s2548 + $0x148] sm:$0xff]
      %v2876 = vld [vmem:[%s2548 + $0x150] sm:$0xff]
      %v2877 = vld [vmem:[%s2548 + $0x168] sm:$0xff]
      %v2878 = vld [vmem:[%s2548 + $0x170] sm:$0xff]
      %v2879 = vld [vmem:[%s2548 + $0x188] sm:$0xff]
      %v2880 = vld [vmem:[%s2548 + $0x190] sm:$0xff]
      %v2881 = vld [vmem:[%s2548 + $0x1a8] sm:$0xff]
      %v2882 = vld [vmem:[%s2548 + $0x1b0] sm:$0xff]
      %v2883 = vld [vmem:[%s2548 + $0x1c8] sm:$0xff]
      %v2884 = vld [vmem:[%s2548 + $0x1d0] sm:$0xff]
      %v2885 = vld [vmem:[%s2548 + $0x1e8] sm:$0xff]
      %v2886 = vld [vmem:[%s2548 + $0x1f0] sm:$0xff]
      %v2887 = vpack.c.bf16 %v2856, %v2855
      %v2888 = vpack.c.bf16 %v2858, %v2857
      %v2889 = vpack.c.bf16 %v2860, %v2859
      %v2890 = vpack.c.bf16 %v2862, %v2861
      %v2891 = vpack.c.bf16 %v2864, %v2863
      %v2892 = vpack.c.bf16 %v2866, %v2865
      %v2893 = vpack.c.bf16 %v2868, %v2867
      %v2894 = vpack.c.bf16 %v2870, %v2869
      %v2895 = vpack.c.bf16 %v2872, %v2871
      %v2896 = vpack.c.bf16 %v2874, %v2873
      %v2897 = vpack.c.bf16 %v2876, %v2875
      %v2898 = vpack.c.bf16 %v2878, %v2877
      %v2899 = vpack.c.bf16 %v2880, %v2879
      %v2900 = vpack.c.bf16 %v2882, %v2881
      %v2901 = vpack.c.bf16 %v2884, %v2883
      %v2902 = vpack.c.bf16 %v2886, %v2885
      %s2903 = scalar_lea.vmem %s3, 448
      %v2904 = vld [vmem:[%s2903] sm:$0xf]
      %v2905 = vld [vmem:[%s2903 + $0x4] sm:$0xf]
      %v2906 = vld [vmem:[%s2903 + $0x8] sm:$0xf]
      %v2907 = vld [vmem:[%s2903 + $0xc] sm:$0xf]
      %v2908 = vld [vmem:[%s2903 + $0x10] sm:$0xf]
      %v2909 = vld [vmem:[%s2903 + $0x14] sm:$0xf]
      %v2910 = vld [vmem:[%s2903 + $0x18] sm:$0xf]
      %v2911 = vld [vmem:[%s2903 + $0x1c] sm:$0xf]
      %v2912 = vld [vmem:[%s2903 + $0x20] sm:$0xf]
      %v2913 = vld [vmem:[%s2903 + $0x24] sm:$0xf]
      %v2914 = vld [vmem:[%s2903 + $0x28] sm:$0xf]
      %v2915 = vld [vmem:[%s2903 + $0x2c] sm:$0xf]
      %v2916 = vld [vmem:[%s2903 + $0x30] sm:$0xf]
      %v2917 = vld [vmem:[%s2903 + $0x34] sm:$0xf]
      %v2918 = vld [vmem:[%s2903 + $0x38] sm:$0xf]
      %v2919 = vld [vmem:[%s2903 + $0x3c] sm:$0xf]
      %v2936 = vunpack.c.l.b16 %v2904
      %v2937 = vunpack.c.l.b16 %v2905
      %v2938 = vunpack.c.l.b16 %v2906
      %v2939 = vunpack.c.l.b16 %v2907
      %v2940 = vunpack.c.l.b16 %v2908
      %v2941 = vunpack.c.l.b16 %v2909
      %v2942 = vunpack.c.l.b16 %v2910
      %v2943 = vunpack.c.l.b16 %v2911
      %v2944 = vunpack.c.l.b16 %v2912
      %v2945 = vunpack.c.l.b16 %v2913
      %v2946 = vunpack.c.l.b16 %v2914
      %v2947 = vunpack.c.l.b16 %v2915
      %v2948 = vunpack.c.l.b16 %v2916
      %v2949 = vunpack.c.l.b16 %v2917
      %v2950 = vunpack.c.l.b16 %v2918
      %v2951 = vunpack.c.l.b16 %v2919
      %v2952 = vpack.c.b16 %v2937, %v2936
      %v2953 = vpack.c.b16 %v2939, %v2938
      %v2954 = vpack.c.b16 %v2941, %v2940
      %v2955 = vpack.c.b16 %v2943, %v2942
      %v2956 = vpack.c.b16 %v2945, %v2944
      %v2957 = vpack.c.b16 %v2947, %v2946
      %v2958 = vpack.c.b16 %v2949, %v2948
      %v2959 = vpack.c.b16 %v2951, %v2950
      %2968 = vmatprep.subr.bf16.mxu0 0
      %2969 = vmatpush1.bf16.msra.mxu0 %v2952
      %2970 = vmatprep.subr.bf16.mxu0 0
      %2971 = vmatpush1.bf16.msra.mxu0 %v2953
      %2972 = vmatprep.subr.bf16.mxu0 0
      %2973 = vmatpush1.bf16.msra.mxu0 %v2954
      %2974 = vmatprep.subr.bf16.mxu0 0
      %2975 = vmatpush1.bf16.msra.mxu0 %v2955
      %2976 = vmatprep.subr.bf16.mxu0 0
      %2977 = vmatpush1.bf16.msra.mxu0 %v2956
      %2978 = vmatprep.subr.bf16.mxu0 0
      %2979 = vmatpush1.bf16.msra.mxu0 %v2957
      %2980 = vmatprep.subr.bf16.mxu0 0
      %2981 = vmatpush1.bf16.msra.mxu0 %v2958
      %2982 = vmatprep.subr.bf16.mxu0 0
      %2983 = vmatpush1.bf16.msra.mxu0 %v2959
      %2984 = vmatprep.subr.bf16.mxu0 0
      %2985 = vmatpush1.bf16.msra.mxu0 0
      %2986 = vmatprep.subr.bf16.mxu0 0
      %2987 = vmatpush1.bf16.msra.mxu0 0
      %2988 = vmatprep.subr.bf16.mxu0 0
      %2989 = vmatpush1.bf16.msra.mxu0 0
      %2990 = vmatprep.subr.bf16.mxu0 0
      %2991 = vmatpush1.bf16.msra.mxu0 0
      %2992 = vmatprep.subr.bf16.mxu0 0
      %2993 = vmatpush1.bf16.msra.mxu0 0
      %2994 = vmatprep.subr.bf16.mxu0 0
      %2995 = vmatpush1.bf16.msra.mxu0 0
      %2996 = vmatprep.subr.bf16.mxu0 0
      %2997 = vmatpush1.bf16.msra.mxu0 0
      %2998 = vmatprep.subr.bf16.mxu0 0
      %2999 = vmatpush1.bf16.msra.mxu0 0
      %3000 = vmatprep.mubr.bf16.mxu0 0
      %3001 = vmatmul.mubr.bf16.gmra.mrb[0].mxu0 %v2887
      %v3002 = vpop.f32.mrb[0].mxu0
      %v3003 = vadd.f32 0.0, %v3002
      %v3004 = vpop.f32.mrb[0].mxu0
      %v3005 = vpop.f32.mrb[0].mxu0
      %v3006 = vadd.f32 0.0, %v3005
      %v3007 = vpop.f32.mrb[0].mxu0
      %3008 = vmatprep.mubr.bf16.mxu0 0
      %3009 = vmatmul.mubr.bf16.gmra.mrb[0].mxu0 %v2888
      %v3010 = vpop.f32.mrb[0].mxu0
      %v3011 = vadd.f32 0.0, %v3010
      %v3012 = vpop.f32.mrb[0].mxu0
      %v3013 = vpop.f32.mrb[0].mxu0
      %v3014 = vadd.f32 0.0, %v3013
      %v3015 = vpop.f32.mrb[0].mxu0
      %3016 = vmatprep.mubr.bf16.mxu0 0
      %3017 = vmatmul.mubr.bf16.gmra.mrb[0].mxu0 %v2889
      %v3018 = vpop.f32.mrb[0].mxu0
      %v3019 = vadd.f32 0.0, %v3018
      %v3020 = vpop.f32.mrb[0].mxu0
      %v3021 = vpop.f32.mrb[0].mxu0
      %v3022 = vadd.f32 0.0, %v3021
      %v3023 = vpop.f32.mrb[0].mxu0
      %3024 = vmatprep.mubr.bf16.mxu0 0
      %3025 = vmatmul.mubr.bf16.gmra.mrb[0].mxu0 %v2890
      %v3026 = vpop.f32.mrb[0].mxu0
      %v3027 = vadd.f32 0.0, %v3026
      %v3028 = vpop.f32.mrb[0].mxu0
      %v3029 = vpop.f32.mrb[0].mxu0
      %v3030 = vadd.f32 0.0, %v3029
      %v3031 = vpop.f32.mrb[0].mxu0
      %3032 = vmatprep.mubr.bf16.mxu0 0
      %3033 = vmatmul.mubr.bf16.gmra.mrb[0].mxu0 %v2891
      %v3034 = vpop.f32.mrb[0].mxu0
      %v3035 = vadd.f32 0.0, %v3034
      %v3036 = vpop.f32.mrb[0].mxu0
      %v3037 = vpop.f32.mrb[0].mxu0
      %v3038 = vadd.f32 0.0, %v3037
      %v3039 = vpop.f32.mrb[0].mxu0
      %3040 = vmatprep.mubr.bf16.mxu0 0
      %3041 = vmatmul.mubr.bf16.gmra.mrb[0].mxu0 %v2892
      %v3042 = vpop.f32.mrb[0].mxu0
      %v3043 = vadd.f32 0.0, %v3042
      %v3044 = vpop.f32.mrb[0].mxu0
      %v3045 = vpop.f32.mrb[0].mxu0
      %v3046 = vadd.f32 0.0, %v3045
      %v3047 = vpop.f32.mrb[0].mxu0
      %3048 = vmatprep.mubr.bf16.mxu0 0
      %3049 = vmatmul.mubr.bf16.gmra.mrb[0].mxu0 %v2893
      %v3050 = vpop.f32.mrb[0].mxu0
      %v3051 = vadd.f32 0.0, %v3050
      %v3052 = vpop.f32.mrb[0].mxu0
      %v3053 = vpop.f32.mrb[0].mxu0
      %v3054 = vadd.f32 0.0, %v3053
      %v3055 = vpop.f32.mrb[0].mxu0
      %3056 = vmatprep.mubr.bf16.mxu0 0
      %3057 = vmatmul.mubr.bf16.gmra.mrb[0].mxu0 %v2894
      %v3058 = vpop.f32.mrb[0].mxu0
      %v3059 = vadd.f32 0.0, %v3058
      %v3060 = vpop.f32.mrb[0].mxu0
      %v3061 = vpop.f32.mrb[0].mxu0
      %v3062 = vadd.f32 0.0, %v3061
      %v3063 = vpop.f32.mrb[0].mxu0
      %3064 = vmatprep.mubr.bf16.mxu0 0
      %3065 = vmatmul.mubr.bf16.gmra.mrb[0].mxu0 %v2895
      %v3066 = vpop.f32.mrb[0].mxu0
      %v3067 = vadd.f32 0.0, %v3066
      %v3068 = vpop.f32.mrb[0].mxu0
      %v3069 = vpop.f32.mrb[0].mxu0
      %v3070 = vadd.f32 0.0, %v3069
      %v3071 = vpop.f32.mrb[0].mxu0
      %3072 = vmatprep.mubr.bf16.mxu0 0
      %3073 = vmatmul.mubr.bf16.gmra.mrb[0].mxu0 %v2896
      %v3074 = vpop.f32.mrb[0].mxu0
      %v3075 = vadd.f32 0.0, %v3074
      %v3076 = vpop.f32.mrb[0].mxu0
      %v3077 = vpop.f32.mrb[0].mxu0
      %v3078 = vadd.f32 0.0, %v3077
      %v3079 = vpop.f32.mrb[0].mxu0
      %3080 = vmatprep.mubr.bf16.mxu0 0
      %3081 = vmatmul.mubr.bf16.gmra.mrb[0].mxu0 %v2897
      %v3082 = vpop.f32.mrb[0].mxu0
      %v3083 = vadd.f32 0.0, %v3082
      %v3084 = vpop.f32.mrb[0].mxu0
      %v3085 = vpop.f32.mrb[0].mxu0
      %v3086 = vadd.f32 0.0, %v3085
      %v3087 = vpop.f32.mrb[0].mxu0
      %3088 = vmatprep.mubr.bf16.mxu0 0
      %3089 = vmatmul.mubr.bf16.gmra.mrb[0].mxu0 %v2898
      %v3090 = vpop.f32.mrb[0].mxu0
      %v3091 = vadd.f32 0.0, %v3090
      %v3092 = vpop.f32.mrb[0].mxu0
      %v3093 = vpop.f32.mrb[0].mxu0
      %v3094 = vadd.f32 0.0, %v3093
      %v3095 = vpop.f32.mrb[0].mxu0
      %3096 = vmatprep.mubr.bf16.mxu0 0
      %3097 = vmatmul.mubr.bf16.gmra.mrb[0].mxu0 %v2899
      %v3098 = vpop.f32.mrb[0].mxu0
      %v3099 = vadd.f32 0.0, %v3098
      %v3100 = vpop.f32.mrb[0].mxu0
      %v3101 = vpop.f32.mrb[0].mxu0
      %v3102 = vadd.f32 0.0, %v3101
      %v3103 = vpop.f32.mrb[0].mxu0
      %3104 = vmatprep.mubr.bf16.mxu0 0
      %3105 = vmatmul.mubr.bf16.gmra.mrb[0].mxu0 %v2900
      %v3106 = vpop.f32.mrb[0].mxu0
      %v3107 = vadd.f32 0.0, %v3106
      %v3108 = vpop.f32.mrb[0].mxu0
      %v3109 = vpop.f32.mrb[0].mxu0
      %v3110 = vadd.f32 0.0, %v3109
      %v3111 = vpop.f32.mrb[0].mxu0
      %3112 = vmatprep.mubr.bf16.mxu0 0
      %3113 = vmatmul.mubr.bf16.gmra.mrb[0].mxu0 %v2901
      %v3114 = vpop.f32.mrb[0].mxu0
      %v3115 = vadd.f32 0.0, %v3114
      %v3116 = vpop.f32.mrb[0].mxu0
      %v3117 = vpop.f32.mrb[0].mxu0
      %v3118 = vadd.f32 0.0, %v3117
      %v3119 = vpop.f32.mrb[0].mxu0
      %3120 = vmatprep.mubr.bf16.mxu0 0
      %3121 = vmatmul.mubr.bf16.gmra.mrb[0].mxu0 %v2902
      %v3122 = vpop.f32.mrb[0].mxu0
      %v3123 = vadd.f32 0.0, %v3122
      %v3124 = vpop.f32.mrb[0].mxu0
      %v3125 = vpop.f32.mrb[0].mxu0
      %v3126 = vadd.f32 0.0, %v3125
      %v3127 = vpop.f32.mrb[0].mxu0
      %3128 = vdwg.mxu0
      %v3129 = vadd.f32 %v2823, %v3003
      %v3130 = vadd.f32 %v2824, %v3006
      %v3131 = vadd.f32 %v2825, %v3011
      %v3132 = vadd.f32 %v2826, %v3014
      %v3133 = vadd.f32 %v2827, %v3019
      %v3134 = vadd.f32 %v2828, %v3022
      %v3135 = vadd.f32 %v2829, %v3027
      %v3136 = vadd.f32 %v2830, %v3030
      %v3137 = vadd.f32 %v2831, %v3035
      %v3138 = vadd.f32 %v2832, %v3038
      %v3139 = vadd.f32 %v2833, %v3043
      %v3140 = vadd.f32 %v2834, %v3046
      %v3141 = vadd.f32 %v2835, %v3051
      %v3142 = vadd.f32 %v2836, %v3054
      %v3143 = vadd.f32 %v2837, %v3059
      %v3144 = vadd.f32 %v2838, %v3062
      %v3145 = vadd.f32 %v2839, %v3067
      %v3146 = vadd.f32 %v2840, %v3070
      %v3147 = vadd.f32 %v2841, %v3075
      %v3148 = vadd.f32 %v2842, %v3078
      %v3149 = vadd.f32 %v2843, %v3083
      %v3150 = vadd.f32 %v2844, %v3086
      %v3151 = vadd.f32 %v2845, %v3091
      %v3152 = vadd.f32 %v2846, %v3094
      %v3153 = vadd.f32 %v2847, %v3099
      %v3154 = vadd.f32 %v2848, %v3102
      %v3155 = vadd.f32 %v2849, %v3107
      %v3156 = vadd.f32 %v2850, %v3110
      %v3157 = vadd.f32 %v2851, %v3115
      %v3158 = vadd.f32 %v2852, %v3118
      %v3159 = vadd.f32 %v2853, %v3123
      %v3160 = vadd.f32 %v2854, %v3126
      %v3161 = vld [vmem:[%s2548 + $0x9] sm:$0xff]
      %v3162 = vld [vmem:[%s2548 + $0x11] sm:$0xff]
      %v3163 = vld [vmem:[%s2548 + $0x29] sm:$0xff]
      %v3164 = vld [vmem:[%s2548 + $0x31] sm:$0xff]
      %v3165 = vld [vmem:[%s2548 + $0x49] sm:$0xff]
      %v3166 = vld [vmem:[%s2548 + $0x51] sm:$0xff]
      %v3167 = vld [vmem:[%s2548 + $0x69] sm:$0xff]
      %v3168 = vld [vmem:[%s2548 + $0x71] sm:$0xff]
      %v3169 = vld [vmem:[%s2548 + $0x89] sm:$0xff]
      %v3170 = vld [vmem:[%s2548 + $0x91] sm:$0xff]
      %v3171 = vld [vmem:[%s2548 + $0xa9] sm:$0xff]
      %v3172 = vld [vmem:[%s2548 + $0xb1] sm:$0xff]
      %v3173 = vld [vmem:[%s2548 + $0xc9] sm:$0xff]
      %v3174 = vld [vmem:[%s2548 + $0xd1] sm:$0xff]
      %v3175 = vld [vmem:[%s2548 + $0xe9] sm:$0xff]
      %v3176 = vld [vmem:[%s2548 + $0xf1] sm:$0xff]
      %v3177 = vld [vmem:[%s2548 + $0x109] sm:$0xff]
      %v3178 = vld [vmem:[%s2548 + $0x111] sm:$0xff]
      %v3179 = vld [vmem:[%s2548 + $0x129] sm:$0xff]
      %v3180 = vld [vmem:[%s2548 + $0x131] sm:$0xff]
      %v3181 = vld [vmem:[%s2548 + $0x149] sm:$0xff]
      %v3182 = vld [vmem:[%s2548 + $0x151] sm:$0xff]
      %v3183 = vld [vmem:[%s2548 + $0x169] sm:$0xff]
      %v3184 = vld [vmem:[%s2548 + $0x171] sm:$0xff]
      %v3185 = vld [vmem:[%s2548 + $0x189] sm:$0xff]
      %v3186 = vld [vmem:[%s2548 + $0x191] sm:$0xff]
      %v3187 = vld [vmem:[%s2548 + $0x1a9] sm:$0xff]
      %v3188 = vld [vmem:[%s2548 + $0x1b1] sm:$0xff]
      %v3189 = vld [vmem:[%s2548 + $0x1c9] sm:$0xff]
      %v3190 = vld [vmem:[%s2548 + $0x1d1] sm:$0xff]
      %v3191 = vld [vmem:[%s2548 + $0x1e9] sm:$0xff]
      %v3192 = vld [vmem:[%s2548 + $0x1f1] sm:$0xff]
      %v3193 = vpack.c.bf16 %v3162, %v3161
      %v3194 = vpack.c.bf16 %v3164, %v3163
      %v3195 = vpack.c.bf16 %v3166, %v3165
      %v3196 = vpack.c.bf16 %v3168, %v3167
      %v3197 = vpack.c.bf16 %v3170, %v3169
      %v3198 = vpack.c.bf16 %v3172, %v3171
      %v3199 = vpack.c.bf16 %v3174, %v3173
      %v3200 = vpack.c.bf16 %v3176, %v3175
      %v3201 = vpack.c.bf16 %v3178, %v3177
      %v3202 = vpack.c.bf16 %v3180, %v3179
      %v3203 = vpack.c.bf16 %v3182, %v3181
      %v3204 = vpack.c.bf16 %v3184, %v3183
      %v3205 = vpack.c.bf16 %v3186, %v3185
      %v3206 = vpack.c.bf16 %v3188, %v3187
      %v3207 = vpack.c.bf16 %v3190, %v3189
      %v3208 = vpack.c.bf16 %v3192, %v3191
      %s3209 = scalar_lea.vmem %s3, 512
      %v3210 = vld [vmem:[%s3209] sm:$0xf]
      %v3211 = vld [vmem:[%s3209 + $0x4] sm:$0xf]
      %v3212 = vld [vmem:[%s3209 + $0x8] sm:$0xf]
      %v3213 = vld [vmem:[%s3209 + $0xc] sm:$0xf]
      %v3214 = vld [vmem:[%s3209 + $0x10] sm:$0xf]
      %v3215 = vld [vmem:[%s3209 + $0x14] sm:$0xf]
      %v3216 = vld [vmem:[%s3209 + $0x18] sm:$0xf]
      %v3217 = vld [vmem:[%s3209 + $0x1c] sm:$0xf]
      %v3218 = vld [vmem:[%s3209 + $0x20] sm:$0xf]
      %v3219 = vld [vmem:[%s3209 + $0x24] sm:$0xf]
      %v3220 = vld [vmem:[%s3209 + $0x28] sm:$0xf]
      %v3221 = vld [vmem:[%s3209 + $0x2c] sm:$0xf]
      %v3222 = vld [vmem:[%s3209 + $0x30] sm:$0xf]
      %v3223 = vld [vmem:[%s3209 + $0x34] sm:$0xf]
      %v3224 = vld [vmem:[%s3209 + $0x38] sm:$0xf]
      %v3225 = vld [vmem:[%s3209 + $0x3c] sm:$0xf]
      %v3242 = vunpack.c.l.b16 %v3210
      %v3243 = vunpack.c.l.b16 %v3211
      %v3244 = vunpack.c.l.b16 %v3212
      %v3245 = vunpack.c.l.b16 %v3213
      %v3246 = vunpack.c.l.b16 %v3214
      %v3247 = vunpack.c.l.b16 %v3215
      %v3248 = vunpack.c.l.b16 %v3216
      %v3249 = vunpack.c.l.b16 %v3217
      %v3250 = vunpack.c.l.b16 %v3218
      %v3251 = vunpack.c.l.b16 %v3219
      %v3252 = vunpack.c.l.b16 %v3220
      %v3253 = vunpack.c.l.b16 %v3221
      %v3254 = vunpack.c.l.b16 %v3222
      %v3255 = vunpack.c.l.b16 %v3223
      %v3256 = vunpack.c.l.b16 %v3224
      %v3257 = vunpack.c.l.b16 %v3225
      %v3258 = vpack.c.b16 %v3243, %v3242
      %v3259 = vpack.c.b16 %v3245, %v3244
      %v3260 = vpack.c.b16 %v3247, %v3246
      %v3261 = vpack.c.b16 %v3249, %v3248
      %v3262 = vpack.c.b16 %v3251, %v3250
      %v3263 = vpack.c.b16 %v3253, %v3252
      %v3264 = vpack.c.b16 %v3255, %v3254
      %v3265 = vpack.c.b16 %v3257, %v3256
      %3274 = vmatprep.subr.bf16.mxu0 0
      %3275 = vmatpush1.bf16.msra.mxu0 %v3258
      %3276 = vmatprep.subr.bf16.mxu0 0
      %3277 = vmatpush1.bf16.msra.mxu0 %v3259
      %3278 = vmatprep.subr.bf16.mxu0 0
      %3279 = vmatpush1.bf16.msra.mxu0 %v3260
      %3280 = vmatprep.subr.bf16.mxu0 0
      %3281 = vmatpush1.bf16.msra.mxu0 %v3261
      %3282 = vmatprep.subr.bf16.mxu0 0
      %3283 = vmatpush1.bf16.msra.mxu0 %v3262
      %3284 = vmatprep.subr.bf16.mxu0 0
      %3285 = vmatpush1.bf16.msra.mxu0 %v3263
      %3286 = vmatprep.subr.bf16.mxu0 0
      %3287 = vmatpush1.bf16.msra.mxu0 %v3264
      %3288 = vmatprep.subr.bf16.mxu0 0
      %3289 = vmatpush1.bf16.msra.mxu0 %v3265
      %3290 = vmatprep.subr.bf16.mxu0 0
      %3291 = vmatpush1.bf16.msra.mxu0 0
      %3292 = vmatprep.subr.bf16.mxu0 0
      %3293 = vmatpush1.bf16.msra.mxu0 0
      %3294 = vmatprep.subr.bf16.mxu0 0
      %3295 = vmatpush1.bf16.msra.mxu0 0
      %3296 = vmatprep.subr.bf16.mxu0 0
      %3297 = vmatpush1.bf16.msra.mxu0 0
      %3298 = vmatprep.subr.bf16.mxu0 0
      %3299 = vmatpush1.bf16.msra.mxu0 0
      %3300 = vmatprep.subr.bf16.mxu0 0
      %3301 = vmatpush1.bf16.msra.mxu0 0
      %3302 = vmatprep.subr.bf16.mxu0 0
      %3303 = vmatpush1.bf16.msra.mxu0 0
      %3304 = vmatprep.subr.bf16.mxu0 0
      %3305 = vmatpush1.bf16.msra.mxu0 0
      %3306 = vmatprep.mubr.bf16.mxu0 0
      %3307 = vmatmul.mubr.bf16.gmra.mrb[0].mxu0 %v3193
      %v3308 = vpop.f32.mrb[0].mxu0
      %v3309 = vadd.f32 0.0, %v3308
      %v3310 = vpop.f32.mrb[0].mxu0
      %v3311 = vpop.f32.mrb[0].mxu0
      %v3312 = vadd.f32 0.0, %v3311
      %v3313 = vpop.f32.mrb[0].mxu0
      %3314 = vmatprep.mubr.bf16.mxu0 0
      %3315 = vmatmul.mubr.bf16.gmra.mrb[0].mxu0 %v3194
      %v3316 = vpop.f32.mrb[0].mxu0
      %v3317 = vadd.f32 0.0, %v3316
      %v3318 = vpop.f32.mrb[0].mxu0
      %v3319 = vpop.f32.mrb[0].mxu0
      %v3320 = vadd.f32 0.0, %v3319
      %v3321 = vpop.f32.mrb[0].mxu0
      %3322 = vmatprep.mubr.bf16.mxu0 0
      %3323 = vmatmul.mubr.bf16.gmra.mrb[0].mxu0 %v3195
      %v3324 = vpop.f32.mrb[0].mxu0
      %v3325 = vadd.f32 0.0, %v3324
      %v3326 = vpop.f32.mrb[0].mxu0
      %v3327 = vpop.f32.mrb[0].mxu0
      %v3328 = vadd.f32 0.0, %v3327
      %v3329 = vpop.f32.mrb[0].mxu0
      %3330 = vmatprep.mubr.bf16.mxu0 0
      %3331 = vmatmul.mubr.bf16.gmra.mrb[0].mxu0 %v3196
      %v3332 = vpop.f32.mrb[0].mxu0
      %v3333 = vadd.f32 0.0, %v3332
      %v3334 = vpop.f32.mrb[0].mxu0
      %v3335 = vpop.f32.mrb[0].mxu0
      %v3336 = vadd.f32 0.0, %v3335
      %v3337 = vpop.f32.mrb[0].mxu0
      %3338 = vmatprep.mubr.bf16.mxu0 0
      %3339 = vmatmul.mubr.bf16.gmra.mrb[0].mxu0 %v3197
      %v3340 = vpop.f32.mrb[0].mxu0
      %v3341 = vadd.f32 0.0, %v3340
      %v3342 = vpop.f32.mrb[0].mxu0
      %v3343 = vpop.f32.mrb[0].mxu0
      %v3344 = vadd.f32 0.0, %v3343
      %v3345 = vpop.f32.mrb[0].mxu0
      %3346 = vmatprep.mubr.bf16.mxu0 0
      %3347 = vmatmul.mubr.bf16.gmra.mrb[0].mxu0 %v3198
      %v3348 = vpop.f32.mrb[0].mxu0
      %v3349 = vadd.f32 0.0, %v3348
      %v3350 = vpop.f32.mrb[0].mxu0
      %v3351 = vpop.f32.mrb[0].mxu0
      %v3352 = vadd.f32 0.0, %v3351
      %v3353 = vpop.f32.mrb[0].mxu0
      %3354 = vmatprep.mubr.bf16.mxu0 0
      %3355 = vmatmul.mubr.bf16.gmra.mrb[0].mxu0 %v3199
      %v3356 = vpop.f32.mrb[0].mxu0
      %v3357 = vadd.f32 0.0, %v3356
      %v3358 = vpop.f32.mrb[0].mxu0
      %v3359 = vpop.f32.mrb[0].mxu0
      %v3360 = vadd.f32 0.0, %v3359
      %v3361 = vpop.f32.mrb[0].mxu0
      %3362 = vmatprep.mubr.bf16.mxu0 0
      %3363 = vmatmul.mubr.bf16.gmra.mrb[0].mxu0 %v3200
      %v3364 = vpop.f32.mrb[0].mxu0
      %v3365 = vadd.f32 0.0, %v3364
      %v3366 = vpop.f32.mrb[0].mxu0
      %v3367 = vpop.f32.mrb[0].mxu0
      %v3368 = vadd.f32 0.0, %v3367
      %v3369 = vpop.f32.mrb[0].mxu0
      %3370 = vmatprep.mubr.bf16.mxu0 0
      %3371 = vmatmul.mubr.bf16.gmra.mrb[0].mxu0 %v3201
      %v3372 = vpop.f32.mrb[0].mxu0
      %v3373 = vadd.f32 0.0, %v3372
      %v3374 = vpop.f32.mrb[0].mxu0
      %v3375 = vpop.f32.mrb[0].mxu0
      %v3376 = vadd.f32 0.0, %v3375
      %v3377 = vpop.f32.mrb[0].mxu0
      %3378 = vmatprep.mubr.bf16.mxu0 0
      %3379 = vmatmul.mubr.bf16.gmra.mrb[0].mxu0 %v3202
      %v3380 = vpop.f32.mrb[0].mxu0
      %v3381 = vadd.f32 0.0, %v3380
      %v3382 = vpop.f32.mrb[0].mxu0
      %v3383 = vpop.f32.mrb[0].mxu0
      %v3384 = vadd.f32 0.0, %v3383
      %v3385 = vpop.f32.mrb[0].mxu0
      %3386 = vmatprep.mubr.bf16.mxu0 0
      %3387 = vmatmul.mubr.bf16.gmra.mrb[0].mxu0 %v3203
      %v3388 = vpop.f32.mrb[0].mxu0
      %v3389 = vadd.f32 0.0, %v3388
      %v3390 = vpop.f32.mrb[0].mxu0
      %v3391 = vpop.f32.mrb[0].mxu0
      %v3392 = vadd.f32 0.0, %v3391
      %v3393 = vpop.f32.mrb[0].mxu0
      %3394 = vmatprep.mubr.bf16.mxu0 0
      %3395 = vmatmul.mubr.bf16.gmra.mrb[0].mxu0 %v3204
      %v3396 = vpop.f32.mrb[0].mxu0
      %v3397 = vadd.f32 0.0, %v3396
      %v3398 = vpop.f32.mrb[0].mxu0
      %v3399 = vpop.f32.mrb[0].mxu0
      %v3400 = vadd.f32 0.0, %v3399
      %v3401 = vpop.f32.mrb[0].mxu0
      %3402 = vmatprep.mubr.bf16.mxu0 0
      %3403 = vmatmul.mubr.bf16.gmra.mrb[0].mxu0 %v3205
      %v3404 = vpop.f32.mrb[0].mxu0
      %v3405 = vadd.f32 0.0, %v3404
      %v3406 = vpop.f32.mrb[0].mxu0
      %v3407 = vpop.f32.mrb[0].mxu0
      %v3408 = vadd.f32 0.0, %v3407
      %v3409 = vpop.f32.mrb[0].mxu0
      %3410 = vmatprep.mubr.bf16.mxu0 0
      %3411 = vmatmul.mubr.bf16.gmra.mrb[0].mxu0 %v3206
      %v3412 = vpop.f32.mrb[0].mxu0
      %v3413 = vadd.f32 0.0, %v3412
      %v3414 = vpop.f32.mrb[0].mxu0
      %v3415 = vpop.f32.mrb[0].mxu0
      %v3416 = vadd.f32 0.0, %v3415
      %v3417 = vpop.f32.mrb[0].mxu0
      %3418 = vmatprep.mubr.bf16.mxu0 0
      %3419 = vmatmul.mubr.bf16.gmra.mrb[0].mxu0 %v3207
      %v3420 = vpop.f32.mrb[0].mxu0
      %v3421 = vadd.f32 0.0, %v3420
      %v3422 = vpop.f32.mrb[0].mxu0
      %v3423 = vpop.f32.mrb[0].mxu0
      %v3424 = vadd.f32 0.0, %v3423
      %v3425 = vpop.f32.mrb[0].mxu0
      %3426 = vmatprep.mubr.bf16.mxu0 0
      %3427 = vmatmul.mubr.bf16.gmra.mrb[0].mxu0 %v3208
      %v3428 = vpop.f32.mrb[0].mxu0
      %v3429 = vadd.f32 0.0, %v3428
      %v3430 = vpop.f32.mrb[0].mxu0
      %v3431 = vpop.f32.mrb[0].mxu0
      %v3432 = vadd.f32 0.0, %v3431
      %v3433 = vpop.f32.mrb[0].mxu0
      %3434 = vdwg.mxu0
      %v3435 = vadd.f32 %v3129, %v3309
      %v3436 = vadd.f32 %v3130, %v3312
      %v3437 = vadd.f32 %v3131, %v3317
      %v3438 = vadd.f32 %v3132, %v3320
      %v3439 = vadd.f32 %v3133, %v3325
      %v3440 = vadd.f32 %v3134, %v3328
      %v3441 = vadd.f32 %v3135, %v3333
      %v3442 = vadd.f32 %v3136, %v3336
      %v3443 = vadd.f32 %v3137, %v3341
      %v3444 = vadd.f32 %v3138, %v3344
      %v3445 = vadd.f32 %v3139, %v3349
      %v3446 = vadd.f32 %v3140, %v3352
      %v3447 = vadd.f32 %v3141, %v3357
      %v3448 = vadd.f32 %v3142, %v3360
      %v3449 = vadd.f32 %v3143, %v3365
      %v3450 = vadd.f32 %v3144, %v3368
      %v3451 = vadd.f32 %v3145, %v3373
      %v3452 = vadd.f32 %v3146, %v3376
      %v3453 = vadd.f32 %v3147, %v3381
      %v3454 = vadd.f32 %v3148, %v3384
      %v3455 = vadd.f32 %v3149, %v3389
      %v3456 = vadd.f32 %v3150, %v3392
      %v3457 = vadd.f32 %v3151, %v3397
      %v3458 = vadd.f32 %v3152, %v3400
      %v3459 = vadd.f32 %v3153, %v3405
      %v3460 = vadd.f32 %v3154, %v3408
      %v3461 = vadd.f32 %v3155, %v3413
      %v3462 = vadd.f32 %v3156, %v3416
      %v3463 = vadd.f32 %v3157, %v3421
      %v3464 = vadd.f32 %v3158, %v3424
      %v3465 = vadd.f32 %v3159, %v3429
      %v3466 = vadd.f32 %v3160, %v3432
      %v3467 = vld [vmem:[%s4] sm:$0x1]
      %v3469 = vlaneseq
      %v3470 = vshrl.u32 %v3469, 7
      %v3471 = vsub.s32 0, %v3470
      %v3472 = vrot.slane %v3467, %v3471
      %v3474 = vadd.f32 %v3435, %v3472
      %v3475 = vadd.f32 %v3436, %v3472
      %v3476 = vadd.f32 %v3437, %v3472
      %v3477 = vadd.f32 %v3438, %v3472
      %v3478 = vadd.f32 %v3439, %v3472
      %v3479 = vadd.f32 %v3440, %v3472
      %v3480 = vadd.f32 %v3441, %v3472
      %v3481 = vadd.f32 %v3442, %v3472
      %v3482 = vadd.f32 %v3443, %v3472
      %v3483 = vadd.f32 %v3444, %v3472
      %v3484 = vadd.f32 %v3445, %v3472
      %v3485 = vadd.f32 %v3446, %v3472
      %v3486 = vadd.f32 %v3447, %v3472
      %v3487 = vadd.f32 %v3448, %v3472
      %v3488 = vadd.f32 %v3449, %v3472
      %v3489 = vadd.f32 %v3450, %v3472
      %v3490 = vadd.f32 %v3451, %v3472
      %v3491 = vadd.f32 %v3452, %v3472
      %v3492 = vadd.f32 %v3453, %v3472
      %v3493 = vadd.f32 %v3454, %v3472
      %v3494 = vadd.f32 %v3455, %v3472
      %v3495 = vadd.f32 %v3456, %v3472
      %v3496 = vadd.f32 %v3457, %v3472
      %v3497 = vadd.f32 %v3458, %v3472
      %v3498 = vadd.f32 %v3459, %v3472
      %v3499 = vadd.f32 %v3460, %v3472
      %v3500 = vadd.f32 %v3461, %v3472
      %v3501 = vadd.f32 %v3462, %v3472
      %v3502 = vadd.f32 %v3463, %v3472
      %v3503 = vadd.f32 %v3464, %v3472
      %v3504 = vadd.f32 %v3465, %v3472
      %v3505 = vadd.f32 %v3466, %v3472
      %v3506 = vmax.f32 %v3474, 0.0
      %v3507 = vmax.f32 %v3475, 0.0
      %v3508 = vmax.f32 %v3476, 0.0
      %v3509 = vmax.f32 %v3477, 0.0
      %v3510 = vmax.f32 %v3478, 0.0
      %v3511 = vmax.f32 %v3479, 0.0
      %v3512 = vmax.f32 %v3480, 0.0
      %v3513 = vmax.f32 %v3481, 0.0
      %v3514 = vmax.f32 %v3482, 0.0
      %v3515 = vmax.f32 %v3483, 0.0
      %v3516 = vmax.f32 %v3484, 0.0
      %v3517 = vmax.f32 %v3485, 0.0
      %v3518 = vmax.f32 %v3486, 0.0
      %v3519 = vmax.f32 %v3487, 0.0
      %v3520 = vmax.f32 %v3488, 0.0
      %v3521 = vmax.f32 %v3489, 0.0
      %v3522 = vmax.f32 %v3490, 0.0
      %v3523 = vmax.f32 %v3491, 0.0
      %v3524 = vmax.f32 %v3492, 0.0
      %v3525 = vmax.f32 %v3493, 0.0
      %v3526 = vmax.f32 %v3494, 0.0
      %v3527 = vmax.f32 %v3495, 0.0
      %v3528 = vmax.f32 %v3496, 0.0
      %v3529 = vmax.f32 %v3497, 0.0
      %v3530 = vmax.f32 %v3498, 0.0
      %v3531 = vmax.f32 %v3499, 0.0
      %v3532 = vmax.f32 %v3500, 0.0
      %v3533 = vmax.f32 %v3501, 0.0
      %v3534 = vmax.f32 %v3502, 0.0
      %v3535 = vmax.f32 %v3503, 0.0
      %v3536 = vmax.f32 %v3504, 0.0
      %v3537 = vmax.f32 %v3505, 0.0
      %v3538 = vpack.c.bf16 %v3507, %v3506
      %v3539 = vpack.c.bf16 %v3509, %v3508
      %v3540 = vpack.c.bf16 %v3511, %v3510
      %v3541 = vpack.c.bf16 %v3513, %v3512
      %v3542 = vpack.c.bf16 %v3515, %v3514
      %v3543 = vpack.c.bf16 %v3517, %v3516
      %v3544 = vpack.c.bf16 %v3519, %v3518
      %v3545 = vpack.c.bf16 %v3521, %v3520
      %v3546 = vpack.c.bf16 %v3523, %v3522
      %v3547 = vpack.c.bf16 %v3525, %v3524
      %v3548 = vpack.c.bf16 %v3527, %v3526
      %v3549 = vpack.c.bf16 %v3529, %v3528
      %v3550 = vpack.c.bf16 %v3531, %v3530
      %v3551 = vpack.c.bf16 %v3533, %v3532
      %v3552 = vpack.c.bf16 %v3535, %v3534
      %v3553 = vpack.c.bf16 %v3537, %v3536
      %v3554 = vld [vmem:[%s5] sm:$0xf]
      %v3555 = vld [vmem:[%s5 + $0x4] sm:$0xf]
      %v3556 = vld [vmem:[%s5 + $0x8] sm:$0xf]
      %v3557 = vld [vmem:[%s5 + $0xc] sm:$0xf]
      %v3558 = vld [vmem:[%s5 + $0x10] sm:$0xf]
      %v3559 = vld [vmem:[%s5 + $0x14] sm:$0xf]
      %v3560 = vld [vmem:[%s5 + $0x18] sm:$0xf]
      %v3561 = vld [vmem:[%s5 + $0x1c] sm:$0xf]
      %v3562 = vld [vmem:[%s5 + $0x20] sm:$0xf]
      %v3563 = vld [vmem:[%s5 + $0x24] sm:$0xf]
      %v3564 = vld [vmem:[%s5 + $0x28] sm:$0xf]
      %v3565 = vld [vmem:[%s5 + $0x2c] sm:$0xf]
      %v3566 = vld [vmem:[%s5 + $0x30] sm:$0xf]
      %v3567 = vld [vmem:[%s5 + $0x34] sm:$0xf]
      %v3568 = vld [vmem:[%s5 + $0x38] sm:$0xf]
      %v3569 = vld [vmem:[%s5 + $0x3c] sm:$0xf]
      %v3570 = vld [vmem:[%s6] sm:$0xf]
      %v3571 = vld [vmem:[%s6 + $0x4] sm:$0xf]
      %v3572 = vld [vmem:[%s6 + $0x8] sm:$0xf]
      %v3573 = vld [vmem:[%s6 + $0xc] sm:$0xf]
      %v3574 = vld [vmem:[%s6 + $0x10] sm:$0xf]
      %v3575 = vld [vmem:[%s6 + $0x14] sm:$0xf]
      %v3576 = vld [vmem:[%s6 + $0x18] sm:$0xf]
      %v3577 = vld [vmem:[%s6 + $0x1c] sm:$0xf]
      %v3578 = vld [vmem:[%s6 + $0x20] sm:$0xf]
      %v3579 = vld [vmem:[%s6 + $0x24] sm:$0xf]
      %v3580 = vld [vmem:[%s6 + $0x28] sm:$0xf]
      %v3581 = vld [vmem:[%s6 + $0x2c] sm:$0xf]
      %v3582 = vld [vmem:[%s6 + $0x30] sm:$0xf]
      %v3583 = vld [vmem:[%s6 + $0x34] sm:$0xf]
      %v3584 = vld [vmem:[%s6 + $0x38] sm:$0xf]
      %v3585 = vld [vmem:[%s6 + $0x3c] sm:$0xf]
      %v3602 = vunpack.c.l.b16 %v3570
      %v3603 = vunpack.c.l.b16 %v3571
      %v3604 = vunpack.c.l.b16 %v3572
      %v3605 = vunpack.c.l.b16 %v3573
      %v3606 = vunpack.c.l.b16 %v3574
      %v3607 = vunpack.c.l.b16 %v3575
      %v3608 = vunpack.c.l.b16 %v3576
      %v3609 = vunpack.c.l.b16 %v3577
      %v3610 = vunpack.c.l.b16 %v3578
      %v3611 = vunpack.c.l.b16 %v3579
      %v3612 = vunpack.c.l.b16 %v3580
      %v3613 = vunpack.c.l.b16 %v3581
      %v3614 = vunpack.c.l.b16 %v3582
      %v3615 = vunpack.c.l.b16 %v3583
      %v3616 = vunpack.c.l.b16 %v3584
      %v3617 = vunpack.c.l.b16 %v3585
      %v3618 = vpack.c.b16 %v3603, %v3602
      %v3619 = vpack.c.b16 %v3605, %v3604
      %v3620 = vpack.c.b16 %v3607, %v3606
      %v3621 = vpack.c.b16 %v3609, %v3608
      %v3622 = vpack.c.b16 %v3611, %v3610
      %v3623 = vpack.c.b16 %v3613, %v3612
      %v3624 = vpack.c.b16 %v3615, %v3614
      %v3625 = vpack.c.b16 %v3617, %v3616
      %3634 = vmatprep.subr.bf16.mxu0 0
      %3635 = vmatpush1.bf16.msra.mxu0 %v3618
      %3636 = vmatprep.subr.bf16.mxu0 0
      %3637 = vmatpush1.bf16.msra.mxu0 %v3619
      %3638 = vmatprep.subr.bf16.mxu0 0
      %3639 = vmatpush1.bf16.msra.mxu0 %v3620
      %3640 = vmatprep.subr.bf16.mxu0 0
      %3641 = vmatpush1.bf16.msra.mxu0 %v3621
      %3642 = vmatprep.subr.bf16.mxu0 0
      %3643 = vmatpush1.bf16.msra.mxu0 %v3622
      %3644 = vmatprep.subr.bf16.mxu0 0
      %3645 = vmatpush1.bf16.msra.mxu0 %v3623
      %3646 = vmatprep.subr.bf16.mxu0 0
      %3647 = vmatpush1.bf16.msra.mxu0 %v3624
      %3648 = vmatprep.subr.bf16.mxu0 0
      %3649 = vmatpush1.bf16.msra.mxu0 %v3625
      %3650 = vmatprep.subr.bf16.mxu0 0
      %3651 = vmatpush1.bf16.msra.mxu0 0
      %3652 = vmatprep.subr.bf16.mxu0 0
      %3653 = vmatpush1.bf16.msra.mxu0 0
      %3654 = vmatprep.subr.bf16.mxu0 0
      %3655 = vmatpush1.bf16.msra.mxu0 0
      %3656 = vmatprep.subr.bf16.mxu0 0
      %3657 = vmatpush1.bf16.msra.mxu0 0
      %3658 = vmatprep.subr.bf16.mxu0 0
      %3659 = vmatpush1.bf16.msra.mxu0 0
      %3660 = vmatprep.subr.bf16.mxu0 0
      %3661 = vmatpush1.bf16.msra.mxu0 0
      %3662 = vmatprep.subr.bf16.mxu0 0
      %3663 = vmatpush1.bf16.msra.mxu0 0
      %3664 = vmatprep.subr.bf16.mxu0 0
      %3665 = vmatpush1.bf16.msra.mxu0 0
      %3666 = vmatprep.mubr.bf16.mxu0 0
      %3667 = vmatmul.mubr.bf16.gmra.mrb[0].mxu0 %v426
      %v3668 = vpop.f32.mrb[0].mxu0
      %v3669 = vadd.f32 0.0, %v3668
      %v3670 = vpop.f32.mrb[0].mxu0
      %v3671 = vpop.f32.mrb[0].mxu0
      %v3672 = vadd.f32 0.0, %v3671
      %v3673 = vpop.f32.mrb[0].mxu0
      %3674 = vmatprep.mubr.bf16.mxu0 0
      %3675 = vmatmul.mubr.bf16.gmra.mrb[0].mxu0 %v427
      %v3676 = vpop.f32.mrb[0].mxu0
      %v3677 = vadd.f32 0.0, %v3676
      %v3678 = vpop.f32.mrb[0].mxu0
      %v3679 = vpop.f32.mrb[0].mxu0
      %v3680 = vadd.f32 0.0, %v3679
      %v3681 = vpop.f32.mrb[0].mxu0
      %3682 = vmatprep.mubr.bf16.mxu0 0
      %3683 = vmatmul.mubr.bf16.gmra.mrb[0].mxu0 %v428
      %v3684 = vpop.f32.mrb[0].mxu0
      %v3685 = vadd.f32 0.0, %v3684
      %v3686 = vpop.f32.mrb[0].mxu0
      %v3687 = vpop.f32.mrb[0].mxu0
      %v3688 = vadd.f32 0.0, %v3687
      %v3689 = vpop.f32.mrb[0].mxu0
      %3690 = vmatprep.mubr.bf16.mxu0 0
      %3691 = vmatmul.mubr.bf16.gmra.mrb[0].mxu0 %v429
      %v3692 = vpop.f32.mrb[0].mxu0
      %v3693 = vadd.f32 0.0, %v3692
      %v3694 = vpop.f32.mrb[0].mxu0
      %v3695 = vpop.f32.mrb[0].mxu0
      %v3696 = vadd.f32 0.0, %v3695
      %v3697 = vpop.f32.mrb[0].mxu0
      %3698 = vmatprep.mubr.bf16.mxu0 0
      %3699 = vmatmul.mubr.bf16.gmra.mrb[0].mxu0 %v430
      %v3700 = vpop.f32.mrb[0].mxu0
      %v3701 = vadd.f32 0.0, %v3700
      %v3702 = vpop.f32.mrb[0].mxu0
      %v3703 = vpop.f32.mrb[0].mxu0
      %v3704 = vadd.f32 0.0, %v3703
      %v3705 = vpop.f32.mrb[0].mxu0
      %3706 = vmatprep.mubr.bf16.mxu0 0
      %3707 = vmatmul.mubr.bf16.gmra.mrb[0].mxu0 %v431
      %v3708 = vpop.f32.mrb[0].mxu0
      %v3709 = vadd.f32 0.0, %v3708
      %v3710 = vpop.f32.mrb[0].mxu0
      %v3711 = vpop.f32.mrb[0].mxu0
      %v3712 = vadd.f32 0.0, %v3711
      %v3713 = vpop.f32.mrb[0].mxu0
      %3714 = vmatprep.mubr.bf16.mxu0 0
      %3715 = vmatmul.mubr.bf16.gmra.mrb[0].mxu0 %v432
      %v3716 = vpop.f32.mrb[0].mxu0
      %v3717 = vadd.f32 0.0, %v3716
      %v3718 = vpop.f32.mrb[0].mxu0
      %v3719 = vpop.f32.mrb[0].mxu0
      %v3720 = vadd.f32 0.0, %v3719
      %v3721 = vpop.f32.mrb[0].mxu0
      %3722 = vmatprep.mubr.bf16.mxu0 0
      %3723 = vmatmul.mubr.bf16.gmra.mrb[0].mxu0 %v433
      %v3724 = vpop.f32.mrb[0].mxu0
      %v3725 = vadd.f32 0.0, %v3724
      %v3726 = vpop.f32.mrb[0].mxu0
      %v3727 = vpop.f32.mrb[0].mxu0
      %v3728 = vadd.f32 0.0, %v3727
      %v3729 = vpop.f32.mrb[0].mxu0
      %3730 = vmatprep.mubr.bf16.mxu0 0
      %3731 = vmatmul.mubr.bf16.gmra.mrb[0].mxu0 %v434
      %v3732 = vpop.f32.mrb[0].mxu0
      %v3733 = vadd.f32 0.0, %v3732
      %v3734 = vpop.f32.mrb[0].mxu0
      %v3735 = vpop.f32.mrb[0].mxu0
      %v3736 = vadd.f32 0.0, %v3735
      %v3737 = vpop.f32.mrb[0].mxu0
      %3738 = vmatprep.mubr.bf16.mxu0 0
      %3739 = vmatmul.mubr.bf16.gmra.mrb[0].mxu0 %v435
      %v3740 = vpop.f32.mrb[0].mxu0
      %v3741 = vadd.f32 0.0, %v3740
      %v3742 = vpop.f32.mrb[0].mxu0
      %v3743 = vpop.f32.mrb[0].mxu0
      %v3744 = vadd.f32 0.0, %v3743
      %v3745 = vpop.f32.mrb[0].mxu0
      %3746 = vmatprep.mubr.bf16.mxu0 0
      %3747 = vmatmul.mubr.bf16.gmra.mrb[0].mxu0 %v436
      %v3748 = vpop.f32.mrb[0].mxu0
      %v3749 = vadd.f32 0.0, %v3748
      %v3750 = vpop.f32.mrb[0].mxu0
      %v3751 = vpop.f32.mrb[0].mxu0
      %v3752 = vadd.f32 0.0, %v3751
      %v3753 = vpop.f32.mrb[0].mxu0
      %3754 = vmatprep.mubr.bf16.mxu0 0
      %3755 = vmatmul.mubr.bf16.gmra.mrb[0].mxu0 %v437
      %v3756 = vpop.f32.mrb[0].mxu0
      %v3757 = vadd.f32 0.0, %v3756
      %v3758 = vpop.f32.mrb[0].mxu0
      %v3759 = vpop.f32.mrb[0].mxu0
      %v3760 = vadd.f32 0.0, %v3759
      %v3761 = vpop.f32.mrb[0].mxu0
      %3762 = vmatprep.mubr.bf16.mxu0 0
      %3763 = vmatmul.mubr.bf16.gmra.mrb[0].mxu0 %v438
      %v3764 = vpop.f32.mrb[0].mxu0
      %v3765 = vadd.f32 0.0, %v3764
      %v3766 = vpop.f32.mrb[0].mxu0
      %v3767 = vpop.f32.mrb[0].mxu0
      %v3768 = vadd.f32 0.0, %v3767
      %v3769 = vpop.f32.mrb[0].mxu0
      %3770 = vmatprep.mubr.bf16.mxu0 0
      %3771 = vmatmul.mubr.bf16.gmra.mrb[0].mxu0 %v439
      %v3772 = vpop.f32.mrb[0].mxu0
      %v3773 = vadd.f32 0.0, %v3772
      %v3774 = vpop.f32.mrb[0].mxu0
      %v3775 = vpop.f32.mrb[0].mxu0
      %v3776 = vadd.f32 0.0, %v3775
      %v3777 = vpop.f32.mrb[0].mxu0
      %3778 = vmatprep.mubr.bf16.mxu0 0
      %3779 = vmatmul.mubr.bf16.gmra.mrb[0].mxu0 %v440
      %v3780 = vpop.f32.mrb[0].mxu0
      %v3781 = vadd.f32 0.0, %v3780
      %v3782 = vpop.f32.mrb[0].mxu0
      %v3783 = vpop.f32.mrb[0].mxu0
      %v3784 = vadd.f32 0.0, %v3783
      %v3785 = vpop.f32.mrb[0].mxu0
      %3786 = vmatprep.mubr.bf16.mxu0 0
      %3787 = vmatmul.mubr.bf16.gmra.mrb[0].mxu0 %v441
      %v3788 = vpop.f32.mrb[0].mxu0
      %v3789 = vadd.f32 0.0, %v3788
      %v3790 = vpop.f32.mrb[0].mxu0
      %v3791 = vpop.f32.mrb[0].mxu0
      %v3792 = vadd.f32 0.0, %v3791
      %v3793 = vpop.f32.mrb[0].mxu0
      %3794 = vdwg.mxu0
      %v3811 = vunpack.c.l.b16 %v3554
      %v3812 = vunpack.c.l.b16 %v3555
      %v3813 = vunpack.c.l.b16 %v3556
      %v3814 = vunpack.c.l.b16 %v3557
      %v3815 = vunpack.c.l.b16 %v3558
      %v3816 = vunpack.c.l.b16 %v3559
      %v3817 = vunpack.c.l.b16 %v3560
      %v3818 = vunpack.c.l.b16 %v3561
      %v3819 = vunpack.c.l.b16 %v3562
      %v3820 = vunpack.c.l.b16 %v3563
      %v3821 = vunpack.c.l.b16 %v3564
      %v3822 = vunpack.c.l.b16 %v3565
      %v3823 = vunpack.c.l.b16 %v3566
      %v3824 = vunpack.c.l.b16 %v3567
      %v3825 = vunpack.c.l.b16 %v3568
      %v3826 = vunpack.c.l.b16 %v3569
      %v3827 = vpack.c.b16 %v3812, %v3811
      %v3828 = vpack.c.b16 %v3814, %v3813
      %v3829 = vpack.c.b16 %v3816, %v3815
      %v3830 = vpack.c.b16 %v3818, %v3817
      %v3831 = vpack.c.b16 %v3820, %v3819
      %v3832 = vpack.c.b16 %v3822, %v3821
      %v3833 = vpack.c.b16 %v3824, %v3823
      %v3834 = vpack.c.b16 %v3826, %v3825
      %3843 = vmatprep.subr.bf16.mxu0 0
      %3844 = vmatpush1.bf16.msra.mxu0 %v3827
      %3845 = vmatprep.subr.bf16.mxu0 0
      %3846 = vmatpush1.bf16.msra.mxu0 %v3828
      %3847 = vmatprep.subr.bf16.mxu0 0
      %3848 = vmatpush1.bf16.msra.mxu0 %v3829
      %3849 = vmatprep.subr.bf16.mxu0 0
      %3850 = vmatpush1.bf16.msra.mxu0 %v3830
      %3851 = vmatprep.subr.bf16.mxu0 0
      %3852 = vmatpush1.bf16.msra.mxu0 %v3831
      %3853 = vmatprep.subr.bf16.mxu0 0
      %3854 = vmatpush1.bf16.msra.mxu0 %v3832
      %3855 = vmatprep.subr.bf16.mxu0 0
      %3856 = vmatpush1.bf16.msra.mxu0 %v3833
      %3857 = vmatprep.subr.bf16.mxu0 0
      %3858 = vmatpush1.bf16.msra.mxu0 %v3834
      %3859 = vmatprep.subr.bf16.mxu0 0
      %3860 = vmatpush1.bf16.msra.mxu0 0
      %3861 = vmatprep.subr.bf16.mxu0 0
      %3862 = vmatpush1.bf16.msra.mxu0 0
      %3863 = vmatprep.subr.bf16.mxu0 0
      %3864 = vmatpush1.bf16.msra.mxu0 0
      %3865 = vmatprep.subr.bf16.mxu0 0
      %3866 = vmatpush1.bf16.msra.mxu0 0
      %3867 = vmatprep.subr.bf16.mxu0 0
      %3868 = vmatpush1.bf16.msra.mxu0 0
      %3869 = vmatprep.subr.bf16.mxu0 0
      %3870 = vmatpush1.bf16.msra.mxu0 0
      %3871 = vmatprep.subr.bf16.mxu0 0
      %3872 = vmatpush1.bf16.msra.mxu0 0
      %3873 = vmatprep.subr.bf16.mxu0 0
      %3874 = vmatpush1.bf16.msra.mxu0 0
      %3875 = vmatprep.mubr.bf16.mxu0 0
      %3876 = vmatmul.mubr.bf16.gmra.mrb[0].mxu0 %v3538
      %v3877 = vpop.f32.mrb[0].mxu0
      %v3878 = vadd.f32 %v3669, %v3877
      %v3879 = vpop.f32.mrb[0].mxu0
      %v3880 = vpop.f32.mrb[0].mxu0
      %v3881 = vadd.f32 %v3672, %v3880
      %v3882 = vpop.f32.mrb[0].mxu0
      %3883 = vmatprep.mubr.bf16.mxu0 0
      %3884 = vmatmul.mubr.bf16.gmra.mrb[0].mxu0 %v3539
      %v3885 = vpop.f32.mrb[0].mxu0
      %v3886 = vadd.f32 %v3677, %v3885
      %v3887 = vpop.f32.mrb[0].mxu0
      %v3888 = vpop.f32.mrb[0].mxu0
      %v3889 = vadd.f32 %v3680, %v3888
      %v3890 = vpop.f32.mrb[0].mxu0
      %3891 = vmatprep.mubr.bf16.mxu0 0
      %3892 = vmatmul.mubr.bf16.gmra.mrb[0].mxu0 %v3540
      %v3893 = vpop.f32.mrb[0].mxu0
      %v3894 = vadd.f32 %v3685, %v3893
      %v3895 = vpop.f32.mrb[0].mxu0
      %v3896 = vpop.f32.mrb[0].mxu0
      %v3897 = vadd.f32 %v3688, %v3896
      %v3898 = vpop.f32.mrb[0].mxu0
      %3899 = vmatprep.mubr.bf16.mxu0 0
      %3900 = vmatmul.mubr.bf16.gmra.mrb[0].mxu0 %v3541
      %v3901 = vpop.f32.mrb[0].mxu0
      %v3902 = vadd.f32 %v3693, %v3901
      %v3903 = vpop.f32.mrb[0].mxu0
      %v3904 = vpop.f32.mrb[0].mxu0
      %v3905 = vadd.f32 %v3696, %v3904
      %v3906 = vpop.f32.mrb[0].mxu0
      %3907 = vmatprep.mubr.bf16.mxu0 0
      %3908 = vmatmul.mubr.bf16.gmra.mrb[0].mxu0 %v3542
      %v3909 = vpop.f32.mrb[0].mxu0
      %v3910 = vadd.f32 %v3701, %v3909
      %v3911 = vpop.f32.mrb[0].mxu0
      %v3912 = vpop.f32.mrb[0].mxu0
      %v3913 = vadd.f32 %v3704, %v3912
      %v3914 = vpop.f32.mrb[0].mxu0
      %3915 = vmatprep.mubr.bf16.mxu0 0
      %3916 = vmatmul.mubr.bf16.gmra.mrb[0].mxu0 %v3543
      %v3917 = vpop.f32.mrb[0].mxu0
      %v3918 = vadd.f32 %v3709, %v3917
      %v3919 = vpop.f32.mrb[0].mxu0
      %v3920 = vpop.f32.mrb[0].mxu0
      %v3921 = vadd.f32 %v3712, %v3920
      %v3922 = vpop.f32.mrb[0].mxu0
      %3923 = vmatprep.mubr.bf16.mxu0 0
      %3924 = vmatmul.mubr.bf16.gmra.mrb[0].mxu0 %v3544
      %v3925 = vpop.f32.mrb[0].mxu0
      %v3926 = vadd.f32 %v3717, %v3925
      %v3927 = vpop.f32.mrb[0].mxu0
      %v3928 = vpop.f32.mrb[0].mxu0
      %v3929 = vadd.f32 %v3720, %v3928
      %v3930 = vpop.f32.mrb[0].mxu0
      %3931 = vmatprep.mubr.bf16.mxu0 0
      %3932 = vmatmul.mubr.bf16.gmra.mrb[0].mxu0 %v3545
      %v3933 = vpop.f32.mrb[0].mxu0
      %v3934 = vadd.f32 %v3725, %v3933
      %v3935 = vpop.f32.mrb[0].mxu0
      %v3936 = vpop.f32.mrb[0].mxu0
      %v3937 = vadd.f32 %v3728, %v3936
      %v3938 = vpop.f32.mrb[0].mxu0
      %3939 = vmatprep.mubr.bf16.mxu0 0
      %3940 = vmatmul.mubr.bf16.gmra.mrb[0].mxu0 %v3546
      %v3941 = vpop.f32.mrb[0].mxu0
      %v3942 = vadd.f32 %v3733, %v3941
      %v3943 = vpop.f32.mrb[0].mxu0
      %v3944 = vpop.f32.mrb[0].mxu0
      %v3945 = vadd.f32 %v3736, %v3944
      %v3946 = vpop.f32.mrb[0].mxu0
      %3947 = vmatprep.mubr.bf16.mxu0 0
      %3948 = vmatmul.mubr.bf16.gmra.mrb[0].mxu0 %v3547
      %v3949 = vpop.f32.mrb[0].mxu0
      %v3950 = vadd.f32 %v3741, %v3949
      %v3951 = vpop.f32.mrb[0].mxu0
      %v3952 = vpop.f32.mrb[0].mxu0
      %v3953 = vadd.f32 %v3744, %v3952
      %v3954 = vpop.f32.mrb[0].mxu0
      %3955 = vmatprep.mubr.bf16.mxu0 0
      %3956 = vmatmul.mubr.bf16.gmra.mrb[0].mxu0 %v3548
      %v3957 = vpop.f32.mrb[0].mxu0
      %v3958 = vadd.f32 %v3749, %v3957
      %v3959 = vpop.f32.mrb[0].mxu0
      %v3960 = vpop.f32.mrb[0].mxu0
      %v3961 = vadd.f32 %v3752, %v3960
      %v3962 = vpop.f32.mrb[0].mxu0
      %3963 = vmatprep.mubr.bf16.mxu0 0
      %3964 = vmatmul.mubr.bf16.gmra.mrb[0].mxu0 %v3549
      %v3965 = vpop.f32.mrb[0].mxu0
      %v3966 = vadd.f32 %v3757, %v3965
      %v3967 = vpop.f32.mrb[0].mxu0
      %v3968 = vpop.f32.mrb[0].mxu0
      %v3969 = vadd.f32 %v3760, %v3968
      %v3970 = vpop.f32.mrb[0].mxu0
      %3971 = vmatprep.mubr.bf16.mxu0 0
      %3972 = vmatmul.mubr.bf16.gmra.mrb[0].mxu0 %v3550
      %v3973 = vpop.f32.mrb[0].mxu0
      %v3974 = vadd.f32 %v3765, %v3973
      %v3975 = vpop.f32.mrb[0].mxu0
      %v3976 = vpop.f32.mrb[0].mxu0
      %v3977 = vadd.f32 %v3768, %v3976
      %v3978 = vpop.f32.mrb[0].mxu0
      %3979 = vmatprep.mubr.bf16.mxu0 0
      %3980 = vmatmul.mubr.bf16.gmra.mrb[0].mxu0 %v3551
      %v3981 = vpop.f32.mrb[0].mxu0
      %v3982 = vadd.f32 %v3773, %v3981
      %v3983 = vpop.f32.mrb[0].mxu0
      %v3984 = vpop.f32.mrb[0].mxu0
      %v3985 = vadd.f32 %v3776, %v3984
      %v3986 = vpop.f32.mrb[0].mxu0
      %3987 = vmatprep.mubr.bf16.mxu0 0
      %3988 = vmatmul.mubr.bf16.gmra.mrb[0].mxu0 %v3552
      %v3989 = vpop.f32.mrb[0].mxu0
      %v3990 = vadd.f32 %v3781, %v3989
      %v3991 = vpop.f32.mrb[0].mxu0
      %v3992 = vpop.f32.mrb[0].mxu0
      %v3993 = vadd.f32 %v3784, %v3992
      %v3994 = vpop.f32.mrb[0].mxu0
      %3995 = vmatprep.mubr.bf16.mxu0 0
      %3996 = vmatmul.mubr.bf16.gmra.mrb[0].mxu0 %v3553
      %v3997 = vpop.f32.mrb[0].mxu0
      %v3998 = vadd.f32 %v3789, %v3997
      %v3999 = vpop.f32.mrb[0].mxu0
      %v4000 = vpop.f32.mrb[0].mxu0
      %v4001 = vadd.f32 %v3792, %v4000
      %v4002 = vpop.f32.mrb[0].mxu0
      %4003 = vdwg.mxu0
      %v4004 = vld [vmem:[%s7] sm:$0x1]
      %v4006 = vlaneseq
      %v4007 = vshrl.u32 %v4006, 7
      %v4008 = vsub.s32 0, %v4007
      %v4009 = vrot.slane %v4004, %v4008
      %v4011 = vadd.f32 %v3878, %v4009
      %v4012 = vadd.f32 %v3881, %v4009
      %v4013 = vadd.f32 %v3886, %v4009
      %v4014 = vadd.f32 %v3889, %v4009
      %v4015 = vadd.f32 %v3894, %v4009
      %v4016 = vadd.f32 %v3897, %v4009
      %v4017 = vadd.f32 %v3902, %v4009
      %v4018 = vadd.f32 %v3905, %v4009
      %v4019 = vadd.f32 %v3910, %v4009
      %v4020 = vadd.f32 %v3913, %v4009
      %v4021 = vadd.f32 %v3918, %v4009
      %v4022 = vadd.f32 %v3921, %v4009
      %v4023 = vadd.f32 %v3926, %v4009
      %v4024 = vadd.f32 %v3929, %v4009
      %v4025 = vadd.f32 %v3934, %v4009
      %v4026 = vadd.f32 %v3937, %v4009
      %v4027 = vadd.f32 %v3942, %v4009
      %v4028 = vadd.f32 %v3945, %v4009
      %v4029 = vadd.f32 %v3950, %v4009
      %v4030 = vadd.f32 %v3953, %v4009
      %v4031 = vadd.f32 %v3958, %v4009
      %v4032 = vadd.f32 %v3961, %v4009
      %v4033 = vadd.f32 %v3966, %v4009
      %v4034 = vadd.f32 %v3969, %v4009
      %v4035 = vadd.f32 %v3974, %v4009
      %v4036 = vadd.f32 %v3977, %v4009
      %v4037 = vadd.f32 %v3982, %v4009
      %v4038 = vadd.f32 %v3985, %v4009
      %v4039 = vadd.f32 %v3990, %v4009
      %v4040 = vadd.f32 %v3993, %v4009
      %v4041 = vadd.f32 %v3998, %v4009
      %v4042 = vadd.f32 %v4001, %v4009
      %v4043 = vmax.f32 %v4011, 0.0
      %v4044 = vmax.f32 %v4012, 0.0
      %v4045 = vmax.f32 %v4013, 0.0
      %v4046 = vmax.f32 %v4014, 0.0
      %v4047 = vmax.f32 %v4015, 0.0
      %v4048 = vmax.f32 %v4016, 0.0
      %v4049 = vmax.f32 %v4017, 0.0
      %v4050 = vmax.f32 %v4018, 0.0
      %v4051 = vmax.f32 %v4019, 0.0
      %v4052 = vmax.f32 %v4020, 0.0
      %v4053 = vmax.f32 %v4021, 0.0
      %v4054 = vmax.f32 %v4022, 0.0
      %v4055 = vmax.f32 %v4023, 0.0
      %v4056 = vmax.f32 %v4024, 0.0
      %v4057 = vmax.f32 %v4025, 0.0
      %v4058 = vmax.f32 %v4026, 0.0
      %v4059 = vmax.f32 %v4027, 0.0
      %v4060 = vmax.f32 %v4028, 0.0
      %v4061 = vmax.f32 %v4029, 0.0
      %v4062 = vmax.f32 %v4030, 0.0
      %v4063 = vmax.f32 %v4031, 0.0
      %v4064 = vmax.f32 %v4032, 0.0
      %v4065 = vmax.f32 %v4033, 0.0
      %v4066 = vmax.f32 %v4034, 0.0
      %v4067 = vmax.f32 %v4035, 0.0
      %v4068 = vmax.f32 %v4036, 0.0
      %v4069 = vmax.f32 %v4037, 0.0
      %v4070 = vmax.f32 %v4038, 0.0
      %v4071 = vmax.f32 %v4039, 0.0
      %v4072 = vmax.f32 %v4040, 0.0
      %v4073 = vmax.f32 %v4041, 0.0
      %v4074 = vmax.f32 %v4042, 0.0
      %4075 = vst [vmem:[%s305] sm:$0xff] %v4043
      %4076 = vst [vmem:[%s305 + $0x8] sm:$0xff] %v4044
      %4077 = vst [vmem:[%s305 + $0x10] sm:$0xff] %v4045
      %4078 = vst [vmem:[%s305 + $0x18] sm:$0xff] %v4046
      %4079 = vst [vmem:[%s305 + $0x20] sm:$0xff] %v4047
      %4080 = vst [vmem:[%s305 + $0x28] sm:$0xff] %v4048
      %4081 = vst [vmem:[%s305 + $0x30] sm:$0xff] %v4049
      %4082 = vst [vmem:[%s305 + $0x38] sm:$0xff] %v4050
      %4083 = vst [vmem:[%s305 + $0x40] sm:$0xff] %v4051
      %4084 = vst [vmem:[%s305 + $0x48] sm:$0xff] %v4052
      %4085 = vst [vmem:[%s305 + $0x50] sm:$0xff] %v4053
      %4086 = vst [vmem:[%s305 + $0x58] sm:$0xff] %v4054
      %4087 = vst [vmem:[%s305 + $0x60] sm:$0xff] %v4055
      %4088 = vst [vmem:[%s305 + $0x68] sm:$0xff] %v4056
      %4089 = vst [vmem:[%s305 + $0x70] sm:$0xff] %v4057
      %4090 = vst [vmem:[%s305 + $0x78] sm:$0xff] %v4058
      %4091 = vst [vmem:[%s305 + $0x80] sm:$0xff] %v4059
      %4092 = vst [vmem:[%s305 + $0x88] sm:$0xff] %v4060
      %4093 = vst [vmem:[%s305 + $0x90] sm:$0xff] %v4061
      %4094 = vst [vmem:[%s305 + $0x98] sm:$0xff] %v4062
      %4095 = vst [vmem:[%s305 + $0xa0] sm:$0xff] %v4063
      %4096 = vst [vmem:[%s305 + $0xa8] sm:$0xff] %v4064
      %4097 = vst [vmem:[%s305 + $0xb0] sm:$0xff] %v4065
      %4098 = vst [vmem:[%s305 + $0xb8] sm:$0xff] %v4066
      %4099 = vst [vmem:[%s305 + $0xc0] sm:$0xff] %v4067
      %4100 = vst [vmem:[%s305 + $0xc8] sm:$0xff] %v4068
      %4101 = vst [vmem:[%s305 + $0xd0] sm:$0xff] %v4069
      %4102 = vst [vmem:[%s305 + $0xd8] sm:$0xff] %v4070
      %4103 = vst [vmem:[%s305 + $0xe0] sm:$0xff] %v4071
      %4104 = vst [vmem:[%s305 + $0xe8] sm:$0xff] %v4072
      %4105 = vst [vmem:[%s305 + $0xf0] sm:$0xff] %v4073
      %4106 = vst [vmem:[%s305 + $0xf8] sm:$0xff] %v4074
      %p4107 = scmp.lt.s32.totalorder %s19, 1
      %s4108 = scalar_select %p4107, %s19, 1
      %s4109 = smul.addr %s4108, 32
      %s4110 = smul.addr %s4109, 8
      %s4111 = scalar_lea.vmem %s8, %s4110
      // Predicated region
      $region53: #{af_bottleneck_forward.1} parent=51 // pred_check
        %p4112 = pneg %p210
      $region54: #{af_bottleneck_forward.1} parent=51 // pred_check_branch
        %4114 = sbr.rel (%p4112) target = $region56
      $region55: #{af_bottleneck_forward.1} parent=51 // pred_region
        _
      $region56: #{af_bottleneck_forward.1} parent=51 // pred_fallthru
        _
    $region52: #{af_bottleneck_forward.1} parent=5 // pred_fallthru
      _
    %p4115 = scmp.le.s32.totalorder 2, %s14
    // Predicated region
    $region57: #{af_bottleneck_forward.1} parent=5 // pred_check
      %p4116 = pneg %p4115
    $region58: #{af_bottleneck_forward.1} parent=5 // pred_check_branch
      %4118 = sbr.rel (%p4116) target = $region60
    $region59: #{af_bottleneck_forward.1} parent=5 // pred_region
      %s4119 = ssub.s32 %s14, 2
      // Predicated region
      $region61: #{af_bottleneck_forward.1} parent=59 // pred_check
        %p4120 = pneg %p216
      $region62: #{af_bottleneck_forward.1} parent=59 // pred_check_branch
        %4122 = sbr.rel (%p4120) target = $region64
      $region63: #{af_bottleneck_forward.1} parent=59 // pred_region
        %p4123 = scmp.lt.s32.totalorder %s20, 1
        %s4124 = scalar_select %p4123, %s20, 1
        %s4125 = smul.addr %s4124, 32
        %s4126 = smul.addr %s4125, 8
        %s4127 = scalar_lea.vmem %s8, %s4126
      $region64: #{af_bottleneck_forward.1} parent=59 // pred_fallthru
        _
    $region60: #{af_bottleneck_forward.1} parent=5 // pred_fallthru
      _
  $region6: #{af_bottleneck_forward.1} parent=0 // loop_footer
    %s18 = sadd.s32 1, %s14
  $region7: #{af_bottleneck_forward.1} parent=0 // loop_footer_branch
    %13 = sbr.rel target = $region3
  $region8: #{af_bottleneck_forward.1} parent=0 // loop_exit
    _

</llo_original>
